<compile_context>
chip_gen: v7x
topology: tpu7x:2x2x1
jax: 0.10.0
libtpu: 0.0.40
codegen_flags: <defaults>
</compile_context>

<pallas_src>
import math
import numpy as np
import jax
import jax.numpy as jnp
from jax.experimental import pallas as pl
from jax.experimental.pallas import tpu as pltpu

KERNELS = (3, 5)        # MixConv2d kernel sizes
KMAX = max(KERNELS)     # all branches embedded in a single 5x5 footprint
BN_EPS = 1e-5


def _fold_bn(gamma, beta, mean, var):
    scale = gamma / jnp.sqrt(var + BN_EPS)
    shift = beta - mean * scale
    return scale, shift


def init_params(key, in_channels, num_scales):
    """Deterministic synthetic parameters (inference BN folded into weights)."""
    C = in_channels
    mid = C // 16
    assert mid >= 1, "in_channels must be >= 16"
    n_k = len(KERNELS)
    # MixConv2d equal-channel split of `mid` output channels over the kernels.
    idx = np.floor(np.linspace(0, n_k - 1e-6, mid)).astype(int)
    c_split = [int((idx == g).sum()) for g in range(n_k)]
    assert all(math.gcd(C, c_) == 1 for c_ in c_split if c_ > 0), \
        "only groups == 1 MixConv2d branches are implemented"
    N = num_scales * mid

    keys = iter(jax.random.split(key, num_scales * (n_k + 4) + 5))

    # All branches share a 5x5 footprint: the 3x3 weights are embedded in the
    # centre (zero border), so one set of 25 shifted views of x covers both.
    w_all = np.zeros((N, C, KMAX, KMAX), np.float32)
    branch_w = []                                    # raw weights for the reference
    bn1_g, bn1_b, bn1_m, bn1_v = [], [], [], []
    for s in range(num_scales):
        row = s * mid
        ws = []
        for g, k in enumerate(KERNELS):
            c_ = c_split[g]
            fan_in = C * k * k
            w = jax.random.normal(next(keys), (c_, C, k, k), jnp.float32) / np.sqrt(fan_in)
            ws.append(w)
            if c_ > 0:
                off = (KMAX - k) // 2
                w_all[row:row + c_, :, off:off + k, off:off + k] = np.asarray(w)
            row += c_
        branch_w.append(ws)
        bn1_g.append(1.0 + 0.1 * jax.random.normal(next(keys), (mid,), jnp.float32))
        bn1_b.append(0.05 * jax.random.normal(next(keys), (mid,), jnp.float32))
        bn1_m.append(0.05 * jax.random.normal(next(keys), (mid,), jnp.float32))
        bn1_v.append(jax.random.uniform(next(keys), (mid,), jnp.float32, 0.8, 1.2))
    bn1_scale, bn1_shift = _fold_bn(jnp.concatenate(bn1_g), jnp.concatenate(bn1_b),
                                    jnp.concatenate(bn1_m), jnp.concatenate(bn1_v))

    # Fold the BN1 scale into the conv weights; keep only the shift in-kernel.
    w_folded = jnp.asarray(w_all) * bn1_scale[:, None, None, None]        # (N, C, 5, 5)
    # Lane-dense stacked-tap layout: column block t*C:(t+1)*C is tap t=(dy,dx).
    w_stack = jnp.transpose(w_folded, (0, 2, 3, 1)).reshape(N, KMAX * KMAX * C)

    # cv1: 1x1 conv (in: N = num_scales*mid, out: C), bias=False, + BN.
    wcv1 = jax.random.normal(next(keys), (C, N), jnp.float32) / np.sqrt(N)
    bn2_g = 1.0 + 0.1 * jax.random.normal(next(keys), (C,), jnp.float32)
    bn2_b = 0.05 * jax.random.normal(next(keys), (C,), jnp.float32)
    bn2_m = 0.05 * jax.random.normal(next(keys), (C,), jnp.float32)
    bn2_v = jax.random.uniform(next(keys), (C,), jnp.float32, 0.8, 1.2)
    bn2_scale, bn2_shift = _fold_bn(bn2_g, bn2_b, bn2_m, bn2_v)

    return dict(
        # kernel params (BN scales pre-folded)
        w_stack=w_stack,                              # (N, 25*C)
        bn1_shift=bn1_shift.reshape(N, 1),
        wcv1_folded=wcv1 * bn2_scale[:, None],        # (C, N)
        bn2_shift=bn2_shift.reshape(C, 1),
        # raw params for the pure-JAX reference
        branch_w=branch_w,
        bn1_scale=bn1_scale, bn1_shift_flat=bn1_shift,
        wcv1=wcv1, bn2_scale=bn2_scale, bn2_shift_flat=bn2_shift,
        mid=mid, num_scales=num_scales,
    )


def spatial_test1_forward(x, params):
    B, C, H, W = x.shape
    mid = params["mid"]
    num_scales = params["num_scales"]
    N = num_scales * mid
    KC = KMAX * KMAX * C
    P = KMAX // 2                                    # conv padding = 2
    L = H * W                                        # flattened spatial extent
    PAD = P * W + P                                  # flat halo needed by the 5x5 taps
    F = ((PAD + 127) // 128) * 128                   # lane-aligned interior offset
    L_src = F + L + PAD                              # padded flat source length

    x_flat = x.reshape(B, C, L)                      # free metadata reshape, no HBM pass

    def kernel(x_ref, w_ref, bn1b_ref, wcv_ref, bn2b_ref, o_ref,
               src_scr, stk_scr, y_scr):
        xv = x_ref[0]                                                    # (C, L)

        # Zero-haloed flat copy of x (replaces the old wrapper-side jnp.pad).
        src_scr[...] = jnp.zeros_like(src_scr)
        src_scr[:, F:F + L] = xv                                         # lane-aligned store

        # Stack the 25 shifted conv views into one (25*C, L) matmul operand.
        col = jax.lax.broadcasted_iota(jnp.int32, (1, L), 1) % W         # column index per lane
        for dy in range(KMAX):
            for dx in range(KMAX):
                t = dy * KMAX + dx
                d = dx - P
                start = F - PAD + dy * W + dx                            # static, in bounds
                view = src_scr[:, start:start + L]                       # (C, L)
                if d != 0:
                    valid = jnp.logical_and(col + d >= 0, col + d < W)   # mask column wrap
                    view = jnp.where(valid, view, 0.0)
                stk_scr[t * C:(t + 1) * C, :] = view

        # MixConv2d for all scales as ONE long-K matmul (BN1 scale pre-folded).
        y = jnp.dot(w_ref[...], stk_scr[...],
                    preferred_element_type=jnp.float32)                  # (N, L)
        y = y + bn1b_ref[...]                                            # BN1 shift
        y = y * jax.nn.sigmoid(y)                                        # SiLU (EUP)
        y_scr[...] = y

        # Per-scale softmax over the flattened (mid * H * W) attention map,
        # with a per-scale max shift (exact match to the reference softmax).
        for s in range(num_scales):
            ys = y_scr[s * mid:(s + 1) * mid, :]                         # (mid, L)
            m = jnp.max(jnp.max(ys, axis=1, keepdims=True),
                        axis=0, keepdims=True)                           # (1, 1)
            es = jnp.exp(ys - m)
            den = jnp.sum(jnp.sum(es, axis=1, keepdims=True),
                          axis=0, keepdims=True)                         # (1, 1)
            inv = pl.reciprocal(den, approx=True)
            inv = inv * (2.0 - den * inv)                                # one Newton step
            y_scr[s * mid:(s + 1) * mid, :] = es * inv

        # cv1: 1x1 conv (matmul) + folded BN2 + SiLU, then the final gating.
        z = jnp.dot(wcv_ref[...], y_scr[...],
                    preferred_element_type=jnp.float32)                  # (C, L)
        z = z + bn2b_ref[...]
        z = z * jax.nn.sigmoid(z)
        o_ref[0] = (xv * z).astype(o_ref.dtype)

    out = pl.pallas_call(
        kernel,
        out_shape=jax.ShapeDtypeStruct((B, C, L), x.dtype),
        grid_spec=pltpu.PrefetchScalarGridSpec(
            num_scalar_prefetch=0,
            grid=(B,),
            in_specs=[
                pl.BlockSpec((1, C, L), lambda b: (b, 0, 0)),    # x, flat & lane-dense
                pl.BlockSpec((N, KC), lambda b: (0, 0)),         # stacked conv taps
                pl.BlockSpec((N, 1), lambda b: (0, 0)),          # BN1 shift
                pl.BlockSpec((C, N), lambda b: (0, 0)),          # cv1 weight (BN2 folded)
                pl.BlockSpec((C, 1), lambda b: (0, 0)),          # BN2 shift
            ],
            out_specs=pl.BlockSpec((1, C, L), lambda b: (b, 0, 0)),
            scratch_shapes=[
                pltpu.VMEM((C, L_src), jnp.float32),             # zero-haloed flat x
                pltpu.VMEM((KMAX * KMAX * C, L), jnp.float32),   # stacked conv views
                pltpu.VMEM((N, L), jnp.float32),                 # conv out / attention
            ],
        ),
        compiler_params=pltpu.CompilerParams(dimension_semantics=("parallel",)),
    )(x_flat, params["w_stack"], params["bn1_shift"],
      params["wcv1_folded"], params["bn2_shift"])

    return out.reshape(B, C, H, W)                    # free metadata reshape


def reference_forward(x, params):
    """Pure-JAX reference: explicit per-scale convs, BN, SiLU, per-scale softmax."""
    B, C, H, W = x.shape
    S, mid = params["num_scales"], params["mid"]
    maps = []
    for s in range(S):
        outs = []
        for w in params["branch_w"][s]:
            if w.shape[0] == 0:
                continue
            k = w.shape[-1]
            outs.append(jax.lax.conv_general_dilated(
                x, w, window_strides=(1, 1), padding=[(k // 2, k // 2)] * 2,
                dimension_numbers=("NCHW", "OIHW", "NCHW")))
        y = jnp.concatenate(outs, axis=1)                          # (B, mid, H, W)
        sc = params["bn1_scale"][s * mid:(s + 1) * mid].reshape(1, mid, 1, 1)
        sh = params["bn1_shift_flat"][s * mid:(s + 1) * mid].reshape(1, mid, 1, 1)
        y = y * sc + sh
        y = y * jax.nn.sigmoid(y)
        att = jax.nn.softmax(y.reshape(B, -1), axis=1).reshape(B, mid, H, W)
        maps.append(att)
    a = jnp.concatenate(maps, axis=1)                              # (B, N, H, W)
    z = jnp.einsum("cn,bnhw->bchw", params["wcv1"], a)
    z = z * params["bn2_scale"].reshape(1, C, 1, 1) + params["bn2_shift_flat"].reshape(1, C, 1, 1)
    z = z * jax.nn.sigmoid(z)
    return x * z


if __name__ == "__main__":
    in_channels, num_scales = 32, 3
    B, H, W = 2, 16, 16

    key = jax.random.PRNGKey(0)
    k_x, k_p = jax.random.split(key)
    x = jax.random.normal(k_x, (B, in_channels, H, W), jnp.float32)
    params = init_params(k_p, in_channels, num_scales)

    out = jax.block_until_ready(spatial_test1_forward(x, params))

    ref = reference_forward(x, params)
    err = float(jnp.max(jnp.abs(out - ref)))
    assert out.shape == (B, in_channels, H, W)
    assert err < 1e-3, f"max abs err {err}"
    print("KERNEL_OK")
</pallas_src>

<mosaic_0001>
module attributes {stable_mosaic.version = 11 : i64} {
  func.func @kernel(%arg0: i32, %arg1: memref<1x32x256xf32, #tpu.memory_space<vmem>>, %arg2: memref<6x800xf32, #tpu.memory_space<vmem>>, %arg3: memref<6x1xf32, #tpu.memory_space<vmem>>, %arg4: memref<32x6xf32, #tpu.memory_space<vmem>>, %arg5: memref<32x1xf32, #tpu.memory_space<vmem>>, %arg6: memref<1x32x256xf32, #tpu.memory_space<vmem>>, %arg7: memref<32x418xf32, #tpu.memory_space<vmem>>, %arg8: memref<800x256xf32, #tpu.memory_space<vmem>>, %arg9: memref<6x256xf32, #tpu.memory_space<vmem>>) attributes {dimension_semantics = [#tpu.dimension_semantics<parallel>], iteration_bounds = array<i64: 2>, scalar_prefetch = 0 : i64, scratch_operands = 3 : i64, tpu.core_type = #tpu.core_type<tc>, window_params = [{transform_indices = @transform_0, window_bounds = array<i64: 1, 32, 256>}, {pipeline_mode = #tpu.pipeline_mode<synchronous>, transform_indices = @transform_1, window_bounds = array<i64: 6, 800>}, {pipeline_mode = #tpu.pipeline_mode<synchronous>, transform_indices = @transform_2, window_bounds = array<i64: 6, 1>}, {pipeline_mode = #tpu.pipeline_mode<synchronous>, transform_indices = @transform_3, window_bounds = array<i64: 32, 6>}, {pipeline_mode = #tpu.pipeline_mode<synchronous>, transform_indices = @transform_4, window_bounds = array<i64: 32, 1>}, {transform_indices = @transform_5, window_bounds = array<i64: 1, 32, 256>}]} {
    %c0 = arith.constant 0 : index
    %c0_0 = arith.constant 0 : index
    %c0_1 = arith.constant 0 : index
    %0 = vector.load %arg1[%c0, %c0_0, %c0_1] : memref<1x32x256xf32, #tpu.memory_space<vmem>>, vector<1x32x256xf32>
    %1 = vector.shape_cast %0 : vector<1x32x256xf32> to vector<32x256xf32>
    %cst = arith.constant 0.000000e+00 : f32
    %2 = vector.broadcast %cst : f32 to vector<32x418xf32>
    %c0_2 = arith.constant 0 : index
    %c0_3 = arith.constant 0 : index
    %3 = vector.load %arg7[%c0_2, %c0_3] : memref<32x418xf32, #tpu.memory_space<vmem>>, vector<32x418xf32>
    tpu.vector_store %arg7[%c0_2, %c0_3], %2 {strides = array<i32>} : memref<32x418xf32, #tpu.memory_space<vmem>>, vector<32x418xf32>,
    %c0_4 = arith.constant 0 : index
    %c128 = arith.constant 128 : index
    %4 = vector.load %arg7[%c0_4, %c128] : memref<32x418xf32, #tpu.memory_space<vmem>>, vector<32x256xf32>
    tpu.vector_store %arg7[%c0_4, %c128], %1 {strides = array<i32>} : memref<32x418xf32, #tpu.memory_space<vmem>>, vector<32x256xf32>,
    %5 = tpu.iota {dimensions = array<i32: 1>} : vector<1x256xi32>
    %c16_i32 = arith.constant 16 : i32
    %c0_i32 = arith.constant 0 : i32
    %6 = arith.cmpi eq, %c16_i32, %c0_i32 : i32
    %c1_i32 = arith.constant 1 : i32
    %7 = arith.select %6, %c1_i32, %c16_i32 : i32
    %8 = vector.broadcast %7 : i32 to vector<1x256xi32>
    %9 = arith.remsi %5, %8 : vector<1x256xi32>
    %c0_i32_5 = arith.constant 0 : i32
    %10 = vector.broadcast %c0_i32_5 : i32 to vector<1x256xi32>
    %11 = arith.cmpi ne, %9, %10 : vector<1x256xi32>
    %c0_i32_6 = arith.constant 0 : i32
    %12 = vector.broadcast %c0_i32_6 : i32 to vector<1x256xi32>
    %13 = arith.cmpi slt, %9, %12 : vector<1x256xi32>
    %c0_i32_7 = arith.constant 0 : i32
    %14 = arith.cmpi slt, %7, %c0_i32_7 : i32
    %15 = vector.broadcast %14 : i1 to vector<1x256xi1>
    %16 = vector.broadcast %15 : vector<1x256xi1> to vector<1x256xi1>
    %17 = arith.xori %13, %16 : vector<1x256xi1>
    %18 = arith.andi %17, %11 : vector<1x256xi1>
    %19 = vector.broadcast %7 : i32 to vector<1x256xi32>
    %20 = arith.addi %9, %19 : vector<1x256xi32>
    %21 = arith.select %18, %20, %9 : vector<1x256xi1>, vector<1x256xi32>
    %c0_8 = arith.constant 0 : index
    %c94 = arith.constant 94 : index
    %22 = vector.load %arg7[%c0_8, %c94] : memref<32x418xf32, #tpu.memory_space<vmem>>, vector<32x256xf32>
    %c-2_i32 = arith.constant -2 : i32
    %23 = vector.broadcast %c-2_i32 : i32 to vector<1x256xi32>
    %24 = arith.addi %21, %23 : vector<1x256xi32>
    %c0_i32_9 = arith.constant 0 : i32
    %25 = vector.broadcast %c0_i32_9 : i32 to vector<1x256xi32>
    %26 = arith.cmpi sge, %24, %25 : vector<1x256xi32>
    %c-2_i32_10 = arith.constant -2 : i32
    %27 = vector.broadcast %c-2_i32_10 : i32 to vector<1x256xi32>
    %28 = arith.addi %21, %27 : vector<1x256xi32>
    %c16_i32_11 = arith.constant 16 : i32
    %29 = vector.broadcast %c16_i32_11 : i32 to vector<1x256xi32>
    %30 = arith.cmpi slt, %28, %29 : vector<1x256xi32>
    %31 = arith.andi %26, %30 : vector<1x256xi1>
    %cst_12 = arith.constant 0.000000e+00 : f32
    %32 = vector.shape_cast %31 : vector<1x256xi1> to vector<1x256xi1>
    %33 = vector.broadcast %32 : vector<1x256xi1> to vector<32x256xi1>
    %34 = vector.broadcast %cst_12 : f32 to vector<32x256xf32>
    %35 = arith.select %33, %22, %34 : vector<32x256xi1>, vector<32x256xf32>
    %c0_13 = arith.constant 0 : index
    %c0_14 = arith.constant 0 : index
    %36 = vector.load %arg8[%c0_13, %c0_14] : memref<800x256xf32, #tpu.memory_space<vmem>>, vector<32x256xf32>
    tpu.vector_store %arg8[%c0_13, %c0_14], %35 {strides = array<i32>} : memref<800x256xf32, #tpu.memory_space<vmem>>, vector<32x256xf32>,
    %c0_15 = arith.constant 0 : index
    %c95 = arith.constant 95 : index
    %37 = vector.load %arg7[%c0_15, %c95] : memref<32x418xf32, #tpu.memory_space<vmem>>, vector<32x256xf32>
    %c-1_i32 = arith.constant -1 : i32
    %38 = vector.broadcast %c-1_i32 : i32 to vector<1x256xi32>
    %39 = arith.addi %21, %38 : vector<1x256xi32>
    %c0_i32_16 = arith.constant 0 : i32
    %40 = vector.broadcast %c0_i32_16 : i32 to vector<1x256xi32>
    %41 = arith.cmpi sge, %39, %40 : vector<1x256xi32>
    %c-1_i32_17 = arith.constant -1 : i32
    %42 = vector.broadcast %c-1_i32_17 : i32 to vector<1x256xi32>
    %43 = arith.addi %21, %42 : vector<1x256xi32>
    %c16_i32_18 = arith.constant 16 : i32
    %44 = vector.broadcast %c16_i32_18 : i32 to vector<1x256xi32>
    %45 = arith.cmpi slt, %43, %44 : vector<1x256xi32>
    %46 = arith.andi %41, %45 : vector<1x256xi1>
    %cst_19 = arith.constant 0.000000e+00 : f32
    %47 = vector.shape_cast %46 : vector<1x256xi1> to vector<1x256xi1>
    %48 = vector.broadcast %47 : vector<1x256xi1> to vector<32x256xi1>
    %49 = vector.broadcast %cst_19 : f32 to vector<32x256xf32>
    %50 = arith.select %48, %37, %49 : vector<32x256xi1>, vector<32x256xf32>
    %c32 = arith.constant 32 : index
    %c0_20 = arith.constant 0 : index
    %51 = vector.load %arg8[%c32, %c0_20] : memref<800x256xf32, #tpu.memory_space<vmem>>, vector<32x256xf32>
    tpu.vector_store %arg8[%c32, %c0_20], %50 {strides = array<i32>} : memref<800x256xf32, #tpu.memory_space<vmem>>, vector<32x256xf32>,
    %c0_21 = arith.constant 0 : index
    %c96 = arith.constant 96 : index
    %52 = vector.load %arg7[%c0_21, %c96] : memref<32x418xf32, #tpu.memory_space<vmem>>, vector<32x256xf32>
    %c64 = arith.constant 64 : index
    %c0_22 = arith.constant 0 : index
    %53 = vector.load %arg8[%c64, %c0_22] : memref<800x256xf32, #tpu.memory_space<vmem>>, vector<32x256xf32>
    tpu.vector_store %arg8[%c64, %c0_22], %52 {strides = array<i32>} : memref<800x256xf32, #tpu.memory_space<vmem>>, vector<32x256xf32>,
    %c0_23 = arith.constant 0 : index
    %c97 = arith.constant 97 : index
    %54 = vector.load %arg7[%c0_23, %c97] : memref<32x418xf32, #tpu.memory_space<vmem>>, vector<32x256xf32>
    %c1_i32_24 = arith.constant 1 : i32
    %55 = vector.broadcast %c1_i32_24 : i32 to vector<1x256xi32>
    %56 = arith.addi %21, %55 : vector<1x256xi32>
    %c0_i32_25 = arith.constant 0 : i32
    %57 = vector.broadcast %c0_i32_25 : i32 to vector<1x256xi32>
    %58 = arith.cmpi sge, %56, %57 : vector<1x256xi32>
    %c1_i32_26 = arith.constant 1 : i32
    %59 = vector.broadcast %c1_i32_26 : i32 to vector<1x256xi32>
    %60 = arith.addi %21, %59 : vector<1x256xi32>
    %c16_i32_27 = arith.constant 16 : i32
    %61 = vector.broadcast %c16_i32_27 : i32 to vector<1x256xi32>
    %62 = arith.cmpi slt, %60, %61 : vector<1x256xi32>
    %63 = arith.andi %58, %62 : vector<1x256xi1>
    %cst_28 = arith.constant 0.000000e+00 : f32
    %64 = vector.shape_cast %63 : vector<1x256xi1> to vector<1x256xi1>
    %65 = vector.broadcast %64 : vector<1x256xi1> to vector<32x256xi1>
    %66 = vector.broadcast %cst_28 : f32 to vector<32x256xf32>
    %67 = arith.select %65, %54, %66 : vector<32x256xi1>, vector<32x256xf32>
    %c96_29 = arith.constant 96 : index
    %c0_30 = arith.constant 0 : index
    %68 = vector.load %arg8[%c96_29, %c0_30] : memref<800x256xf32, #tpu.memory_space<vmem>>, vector<32x256xf32>
    tpu.vector_store %arg8[%c96_29, %c0_30], %67 {strides = array<i32>} : memref<800x256xf32, #tpu.memory_space<vmem>>, vector<32x256xf32>,
    %c0_31 = arith.constant 0 : index
    %c98 = arith.constant 98 : index
    %69 = vector.load %arg7[%c0_31, %c98] : memref<32x418xf32, #tpu.memory_space<vmem>>, vector<32x256xf32>
    %c2_i32 = arith.constant 2 : i32
    %70 = vector.broadcast %c2_i32 : i32 to vector<1x256xi32>
    %71 = arith.addi %21, %70 : vector<1x256xi32>
    %c0_i32_32 = arith.constant 0 : i32
    %72 = vector.broadcast %c0_i32_32 : i32 to vector<1x256xi32>
    %73 = arith.cmpi sge, %71, %72 : vector<1x256xi32>
    %c2_i32_33 = arith.constant 2 : i32
    %74 = vector.broadcast %c2_i32_33 : i32 to vector<1x256xi32>
    %75 = arith.addi %21, %74 : vector<1x256xi32>
    %c16_i32_34 = arith.constant 16 : i32
    %76 = vector.broadcast %c16_i32_34 : i32 to vector<1x256xi32>
    %77 = arith.cmpi slt, %75, %76 : vector<1x256xi32>
    %78 = arith.andi %73, %77 : vector<1x256xi1>
    %cst_35 = arith.constant 0.000000e+00 : f32
    %79 = vector.shape_cast %78 : vector<1x256xi1> to vector<1x256xi1>
    %80 = vector.broadcast %79 : vector<1x256xi1> to vector<32x256xi1>
    %81 = vector.broadcast %cst_35 : f32 to vector<32x256xf32>
    %82 = arith.select %80, %69, %81 : vector<32x256xi1>, vector<32x256xf32>
    %c128_36 = arith.constant 128 : index
    %c0_37 = arith.constant 0 : index
    %83 = vector.load %arg8[%c128_36, %c0_37] : memref<800x256xf32, #tpu.memory_space<vmem>>, vector<32x256xf32>
    tpu.vector_store %arg8[%c128_36, %c0_37], %82 {strides = array<i32>} : memref<800x256xf32, #tpu.memory_space<vmem>>, vector<32x256xf32>,
    %c0_38 = arith.constant 0 : index
    %c110 = arith.constant 110 : index
    %84 = vector.load %arg7[%c0_38, %c110] : memref<32x418xf32, #tpu.memory_space<vmem>>, vector<32x256xf32>
    %c-2_i32_39 = arith.constant -2 : i32
    %85 = vector.broadcast %c-2_i32_39 : i32 to vector<1x256xi32>
    %86 = arith.addi %21, %85 : vector<1x256xi32>
    %c0_i32_40 = arith.constant 0 : i32
    %87 = vector.broadcast %c0_i32_40 : i32 to vector<1x256xi32>
    %88 = arith.cmpi sge, %86, %87 : vector<1x256xi32>
    %c-2_i32_41 = arith.constant -2 : i32
    %89 = vector.broadcast %c-2_i32_41 : i32 to vector<1x256xi32>
    %90 = arith.addi %21, %89 : vector<1x256xi32>
    %c16_i32_42 = arith.constant 16 : i32
    %91 = vector.broadcast %c16_i32_42 : i32 to vector<1x256xi32>
    %92 = arith.cmpi slt, %90, %91 : vector<1x256xi32>
    %93 = arith.andi %88, %92 : vector<1x256xi1>
    %cst_43 = arith.constant 0.000000e+00 : f32
    %94 = vector.shape_cast %93 : vector<1x256xi1> to vector<1x256xi1>
    %95 = vector.broadcast %94 : vector<1x256xi1> to vector<32x256xi1>
    %96 = vector.broadcast %cst_43 : f32 to vector<32x256xf32>
    %97 = arith.select %95, %84, %96 : vector<32x256xi1>, vector<32x256xf32>
    %c160 = arith.constant 160 : index
    %c0_44 = arith.constant 0 : index
    %98 = vector.load %arg8[%c160, %c0_44] : memref<800x256xf32, #tpu.memory_space<vmem>>, vector<32x256xf32>
    tpu.vector_store %arg8[%c160, %c0_44], %97 {strides = array<i32>} : memref<800x256xf32, #tpu.memory_space<vmem>>, vector<32x256xf32>,
    %c0_45 = arith.constant 0 : index
    %c111 = arith.constant 111 : index
    %99 = vector.load %arg7[%c0_45, %c111] : memref<32x418xf32, #tpu.memory_space<vmem>>, vector<32x256xf32>
    %c-1_i32_46 = arith.constant -1 : i32
    %100 = vector.broadcast %c-1_i32_46 : i32 to vector<1x256xi32>
    %101 = arith.addi %21, %100 : vector<1x256xi32>
    %c0_i32_47 = arith.constant 0 : i32
    %102 = vector.broadcast %c0_i32_47 : i32 to vector<1x256xi32>
    %103 = arith.cmpi sge, %101, %102 : vector<1x256xi32>
    %c-1_i32_48 = arith.constant -1 : i32
    %104 = vector.broadcast %c-1_i32_48 : i32 to vector<1x256xi32>
    %105 = arith.addi %21, %104 : vector<1x256xi32>
    %c16_i32_49 = arith.constant 16 : i32
    %106 = vector.broadcast %c16_i32_49 : i32 to vector<1x256xi32>
    %107 = arith.cmpi slt, %105, %106 : vector<1x256xi32>
    %108 = arith.andi %103, %107 : vector<1x256xi1>
    %cst_50 = arith.constant 0.000000e+00 : f32
    %109 = vector.shape_cast %108 : vector<1x256xi1> to vector<1x256xi1>
    %110 = vector.broadcast %109 : vector<1x256xi1> to vector<32x256xi1>
    %111 = vector.broadcast %cst_50 : f32 to vector<32x256xf32>
    %112 = arith.select %110, %99, %111 : vector<32x256xi1>, vector<32x256xf32>
    %c192 = arith.constant 192 : index
    %c0_51 = arith.constant 0 : index
    %113 = vector.load %arg8[%c192, %c0_51] : memref<800x256xf32, #tpu.memory_space<vmem>>, vector<32x256xf32>
    tpu.vector_store %arg8[%c192, %c0_51], %112 {strides = array<i32>} : memref<800x256xf32, #tpu.memory_space<vmem>>, vector<32x256xf32>,
    %c0_52 = arith.constant 0 : index
    %c112 = arith.constant 112 : index
    %114 = vector.load %arg7[%c0_52, %c112] : memref<32x418xf32, #tpu.memory_space<vmem>>, vector<32x256xf32>
    %c224 = arith.constant 224 : index
    %c0_53 = arith.constant 0 : index
    %115 = vector.load %arg8[%c224, %c0_53] : memref<800x256xf32, #tpu.memory_space<vmem>>, vector<32x256xf32>
    tpu.vector_store %arg8[%c224, %c0_53], %114 {strides = array<i32>} : memref<800x256xf32, #tpu.memory_space<vmem>>, vector<32x256xf32>,
    %c0_54 = arith.constant 0 : index
    %c113 = arith.constant 113 : index
    %116 = vector.load %arg7[%c0_54, %c113] : memref<32x418xf32, #tpu.memory_space<vmem>>, vector<32x256xf32>
    %c1_i32_55 = arith.constant 1 : i32
    %117 = vector.broadcast %c1_i32_55 : i32 to vector<1x256xi32>
    %118 = arith.addi %21, %117 : vector<1x256xi32>
    %c0_i32_56 = arith.constant 0 : i32
    %119 = vector.broadcast %c0_i32_56 : i32 to vector<1x256xi32>
    %120 = arith.cmpi sge, %118, %119 : vector<1x256xi32>
    %c1_i32_57 = arith.constant 1 : i32
    %121 = vector.broadcast %c1_i32_57 : i32 to vector<1x256xi32>
    %122 = arith.addi %21, %121 : vector<1x256xi32>
    %c16_i32_58 = arith.constant 16 : i32
    %123 = vector.broadcast %c16_i32_58 : i32 to vector<1x256xi32>
    %124 = arith.cmpi slt, %122, %123 : vector<1x256xi32>
    %125 = arith.andi %120, %124 : vector<1x256xi1>
    %cst_59 = arith.constant 0.000000e+00 : f32
    %126 = vector.shape_cast %125 : vector<1x256xi1> to vector<1x256xi1>
    %127 = vector.broadcast %126 : vector<1x256xi1> to vector<32x256xi1>
    %128 = vector.broadcast %cst_59 : f32 to vector<32x256xf32>
    %129 = arith.select %127, %116, %128 : vector<32x256xi1>, vector<32x256xf32>
    %c256 = arith.constant 256 : index
    %c0_60 = arith.constant 0 : index
    %130 = vector.load %arg8[%c256, %c0_60] : memref<800x256xf32, #tpu.memory_space<vmem>>, vector<32x256xf32>
    tpu.vector_store %arg8[%c256, %c0_60], %129 {strides = array<i32>} : memref<800x256xf32, #tpu.memory_space<vmem>>, vector<32x256xf32>,
    %c0_61 = arith.constant 0 : index
    %c114 = arith.constant 114 : index
    %131 = vector.load %arg7[%c0_61, %c114] : memref<32x418xf32, #tpu.memory_space<vmem>>, vector<32x256xf32>
    %c2_i32_62 = arith.constant 2 : i32
    %132 = vector.broadcast %c2_i32_62 : i32 to vector<1x256xi32>
    %133 = arith.addi %21, %132 : vector<1x256xi32>
    %c0_i32_63 = arith.constant 0 : i32
    %134 = vector.broadcast %c0_i32_63 : i32 to vector<1x256xi32>
    %135 = arith.cmpi sge, %133, %134 : vector<1x256xi32>
    %c2_i32_64 = arith.constant 2 : i32
    %136 = vector.broadcast %c2_i32_64 : i32 to vector<1x256xi32>
    %137 = arith.addi %21, %136 : vector<1x256xi32>
    %c16_i32_65 = arith.constant 16 : i32
    %138 = vector.broadcast %c16_i32_65 : i32 to vector<1x256xi32>
    %139 = arith.cmpi slt, %137, %138 : vector<1x256xi32>
    %140 = arith.andi %135, %139 : vector<1x256xi1>
    %cst_66 = arith.constant 0.000000e+00 : f32
    %141 = vector.shape_cast %140 : vector<1x256xi1> to vector<1x256xi1>
    %142 = vector.broadcast %141 : vector<1x256xi1> to vector<32x256xi1>
    %143 = vector.broadcast %cst_66 : f32 to vector<32x256xf32>
    %144 = arith.select %142, %131, %143 : vector<32x256xi1>, vector<32x256xf32>
    %c288 = arith.constant 288 : index
    %c0_67 = arith.constant 0 : index
    %145 = vector.load %arg8[%c288, %c0_67] : memref<800x256xf32, #tpu.memory_space<vmem>>, vector<32x256xf32>
    tpu.vector_store %arg8[%c288, %c0_67], %144 {strides = array<i32>} : memref<800x256xf32, #tpu.memory_space<vmem>>, vector<32x256xf32>,
    %c0_68 = arith.constant 0 : index
    %c126 = arith.constant 126 : index
    %146 = vector.load %arg7[%c0_68, %c126] : memref<32x418xf32, #tpu.memory_space<vmem>>, vector<32x256xf32>
    %c-2_i32_69 = arith.constant -2 : i32
    %147 = vector.broadcast %c-2_i32_69 : i32 to vector<1x256xi32>
    %148 = arith.addi %21, %147 : vector<1x256xi32>
    %c0_i32_70 = arith.constant 0 : i32
    %149 = vector.broadcast %c0_i32_70 : i32 to vector<1x256xi32>
    %150 = arith.cmpi sge, %148, %149 : vector<1x256xi32>
    %c-2_i32_71 = arith.constant -2 : i32
    %151 = vector.broadcast %c-2_i32_71 : i32 to vector<1x256xi32>
    %152 = arith.addi %21, %151 : vector<1x256xi32>
    %c16_i32_72 = arith.constant 16 : i32
    %153 = vector.broadcast %c16_i32_72 : i32 to vector<1x256xi32>
    %154 = arith.cmpi slt, %152, %153 : vector<1x256xi32>
    %155 = arith.andi %150, %154 : vector<1x256xi1>
    %cst_73 = arith.constant 0.000000e+00 : f32
    %156 = vector.shape_cast %155 : vector<1x256xi1> to vector<1x256xi1>
    %157 = vector.broadcast %156 : vector<1x256xi1> to vector<32x256xi1>
    %158 = vector.broadcast %cst_73 : f32 to vector<32x256xf32>
    %159 = arith.select %157, %146, %158 : vector<32x256xi1>, vector<32x256xf32>
    %c320 = arith.constant 320 : index
    %c0_74 = arith.constant 0 : index
    %160 = vector.load %arg8[%c320, %c0_74] : memref<800x256xf32, #tpu.memory_space<vmem>>, vector<32x256xf32>
    tpu.vector_store %arg8[%c320, %c0_74], %159 {strides = array<i32>} : memref<800x256xf32, #tpu.memory_space<vmem>>, vector<32x256xf32>,
    %c0_75 = arith.constant 0 : index
    %c127 = arith.constant 127 : index
    %161 = vector.load %arg7[%c0_75, %c127] : memref<32x418xf32, #tpu.memory_space<vmem>>, vector<32x256xf32>
    %c-1_i32_76 = arith.constant -1 : i32
    %162 = vector.broadcast %c-1_i32_76 : i32 to vector<1x256xi32>
    %163 = arith.addi %21, %162 : vector<1x256xi32>
    %c0_i32_77 = arith.constant 0 : i32
    %164 = vector.broadcast %c0_i32_77 : i32 to vector<1x256xi32>
    %165 = arith.cmpi sge, %163, %164 : vector<1x256xi32>
    %c-1_i32_78 = arith.constant -1 : i32
    %166 = vector.broadcast %c-1_i32_78 : i32 to vector<1x256xi32>
    %167 = arith.addi %21, %166 : vector<1x256xi32>
    %c16_i32_79 = arith.constant 16 : i32
    %168 = vector.broadcast %c16_i32_79 : i32 to vector<1x256xi32>
    %169 = arith.cmpi slt, %167, %168 : vector<1x256xi32>
    %170 = arith.andi %165, %169 : vector<1x256xi1>
    %cst_80 = arith.constant 0.000000e+00 : f32
    %171 = vector.shape_cast %170 : vector<1x256xi1> to vector<1x256xi1>
    %172 = vector.broadcast %171 : vector<1x256xi1> to vector<32x256xi1>
    %173 = vector.broadcast %cst_80 : f32 to vector<32x256xf32>
    %174 = arith.select %172, %161, %173 : vector<32x256xi1>, vector<32x256xf32>
    %c352 = arith.constant 352 : index
    %c0_81 = arith.constant 0 : index
    %175 = vector.load %arg8[%c352, %c0_81] : memref<800x256xf32, #tpu.memory_space<vmem>>, vector<32x256xf32>
    tpu.vector_store %arg8[%c352, %c0_81], %174 {strides = array<i32>} : memref<800x256xf32, #tpu.memory_space<vmem>>, vector<32x256xf32>,
    %c0_82 = arith.constant 0 : index
    %c128_83 = arith.constant 128 : index
    %176 = vector.load %arg7[%c0_82, %c128_83] : memref<32x418xf32, #tpu.memory_space<vmem>>, vector<32x256xf32>
    %c384 = arith.constant 384 : index
    %c0_84 = arith.constant 0 : index
    %177 = vector.load %arg8[%c384, %c0_84] : memref<800x256xf32, #tpu.memory_space<vmem>>, vector<32x256xf32>
    tpu.vector_store %arg8[%c384, %c0_84], %176 {strides = array<i32>} : memref<800x256xf32, #tpu.memory_space<vmem>>, vector<32x256xf32>,
    %c0_85 = arith.constant 0 : index
    %c129 = arith.constant 129 : index
    %178 = vector.load %arg7[%c0_85, %c129] : memref<32x418xf32, #tpu.memory_space<vmem>>, vector<32x256xf32>
    %c1_i32_86 = arith.constant 1 : i32
    %179 = vector.broadcast %c1_i32_86 : i32 to vector<1x256xi32>
    %180 = arith.addi %21, %179 : vector<1x256xi32>
    %c0_i32_87 = arith.constant 0 : i32
    %181 = vector.broadcast %c0_i32_87 : i32 to vector<1x256xi32>
    %182 = arith.cmpi sge, %180, %181 : vector<1x256xi32>
    %c1_i32_88 = arith.constant 1 : i32
    %183 = vector.broadcast %c1_i32_88 : i32 to vector<1x256xi32>
    %184 = arith.addi %21, %183 : vector<1x256xi32>
    %c16_i32_89 = arith.constant 16 : i32
    %185 = vector.broadcast %c16_i32_89 : i32 to vector<1x256xi32>
    %186 = arith.cmpi slt, %184, %185 : vector<1x256xi32>
    %187 = arith.andi %182, %186 : vector<1x256xi1>
    %cst_90 = arith.constant 0.000000e+00 : f32
    %188 = vector.shape_cast %187 : vector<1x256xi1> to vector<1x256xi1>
    %189 = vector.broadcast %188 : vector<1x256xi1> to vector<32x256xi1>
    %190 = vector.broadcast %cst_90 : f32 to vector<32x256xf32>
    %191 = arith.select %189, %178, %190 : vector<32x256xi1>, vector<32x256xf32>
    %c416 = arith.constant 416 : index
    %c0_91 = arith.constant 0 : index
    %192 = vector.load %arg8[%c416, %c0_91] : memref<800x256xf32, #tpu.memory_space<vmem>>, vector<32x256xf32>
    tpu.vector_store %arg8[%c416, %c0_91], %191 {strides = array<i32>} : memref<800x256xf32, #tpu.memory_space<vmem>>, vector<32x256xf32>,
    %c0_92 = arith.constant 0 : index
    %c130 = arith.constant 130 : index
    %193 = vector.load %arg7[%c0_92, %c130] : memref<32x418xf32, #tpu.memory_space<vmem>>, vector<32x256xf32>
    %c2_i32_93 = arith.constant 2 : i32
    %194 = vector.broadcast %c2_i32_93 : i32 to vector<1x256xi32>
    %195 = arith.addi %21, %194 : vector<1x256xi32>
    %c0_i32_94 = arith.constant 0 : i32
    %196 = vector.broadcast %c0_i32_94 : i32 to vector<1x256xi32>
    %197 = arith.cmpi sge, %195, %196 : vector<1x256xi32>
    %c2_i32_95 = arith.constant 2 : i32
    %198 = vector.broadcast %c2_i32_95 : i32 to vector<1x256xi32>
    %199 = arith.addi %21, %198 : vector<1x256xi32>
    %c16_i32_96 = arith.constant 16 : i32
    %200 = vector.broadcast %c16_i32_96 : i32 to vector<1x256xi32>
    %201 = arith.cmpi slt, %199, %200 : vector<1x256xi32>
    %202 = arith.andi %197, %201 : vector<1x256xi1>
    %cst_97 = arith.constant 0.000000e+00 : f32
    %203 = vector.shape_cast %202 : vector<1x256xi1> to vector<1x256xi1>
    %204 = vector.broadcast %203 : vector<1x256xi1> to vector<32x256xi1>
    %205 = vector.broadcast %cst_97 : f32 to vector<32x256xf32>
    %206 = arith.select %204, %193, %205 : vector<32x256xi1>, vector<32x256xf32>
    %c448 = arith.constant 448 : index
    %c0_98 = arith.constant 0 : index
    %207 = vector.load %arg8[%c448, %c0_98] : memref<800x256xf32, #tpu.memory_space<vmem>>, vector<32x256xf32>
    tpu.vector_store %arg8[%c448, %c0_98], %206 {strides = array<i32>} : memref<800x256xf32, #tpu.memory_space<vmem>>, vector<32x256xf32>,
    %c0_99 = arith.constant 0 : index
    %c142 = arith.constant 142 : index
    %208 = vector.load %arg7[%c0_99, %c142] : memref<32x418xf32, #tpu.memory_space<vmem>>, vector<32x256xf32>
    %c-2_i32_100 = arith.constant -2 : i32
    %209 = vector.broadcast %c-2_i32_100 : i32 to vector<1x256xi32>
    %210 = arith.addi %21, %209 : vector<1x256xi32>
    %c0_i32_101 = arith.constant 0 : i32
    %211 = vector.broadcast %c0_i32_101 : i32 to vector<1x256xi32>
    %212 = arith.cmpi sge, %210, %211 : vector<1x256xi32>
    %c-2_i32_102 = arith.constant -2 : i32
    %213 = vector.broadcast %c-2_i32_102 : i32 to vector<1x256xi32>
    %214 = arith.addi %21, %213 : vector<1x256xi32>
    %c16_i32_103 = arith.constant 16 : i32
    %215 = vector.broadcast %c16_i32_103 : i32 to vector<1x256xi32>
    %216 = arith.cmpi slt, %214, %215 : vector<1x256xi32>
    %217 = arith.andi %212, %216 : vector<1x256xi1>
    %cst_104 = arith.constant 0.000000e+00 : f32
    %218 = vector.shape_cast %217 : vector<1x256xi1> to vector<1x256xi1>
    %219 = vector.broadcast %218 : vector<1x256xi1> to vector<32x256xi1>
    %220 = vector.broadcast %cst_104 : f32 to vector<32x256xf32>
    %221 = arith.select %219, %208, %220 : vector<32x256xi1>, vector<32x256xf32>
    %c480 = arith.constant 480 : index
    %c0_105 = arith.constant 0 : index
    %222 = vector.load %arg8[%c480, %c0_105] : memref<800x256xf32, #tpu.memory_space<vmem>>, vector<32x256xf32>
    tpu.vector_store %arg8[%c480, %c0_105], %221 {strides = array<i32>} : memref<800x256xf32, #tpu.memory_space<vmem>>, vector<32x256xf32>,
    %c0_106 = arith.constant 0 : index
    %c143 = arith.constant 143 : index
    %223 = vector.load %arg7[%c0_106, %c143] : memref<32x418xf32, #tpu.memory_space<vmem>>, vector<32x256xf32>
    %c-1_i32_107 = arith.constant -1 : i32
    %224 = vector.broadcast %c-1_i32_107 : i32 to vector<1x256xi32>
    %225 = arith.addi %21, %224 : vector<1x256xi32>
    %c0_i32_108 = arith.constant 0 : i32
    %226 = vector.broadcast %c0_i32_108 : i32 to vector<1x256xi32>
    %227 = arith.cmpi sge, %225, %226 : vector<1x256xi32>
    %c-1_i32_109 = arith.constant -1 : i32
    %228 = vector.broadcast %c-1_i32_109 : i32 to vector<1x256xi32>
    %229 = arith.addi %21, %228 : vector<1x256xi32>
    %c16_i32_110 = arith.constant 16 : i32
    %230 = vector.broadcast %c16_i32_110 : i32 to vector<1x256xi32>
    %231 = arith.cmpi slt, %229, %230 : vector<1x256xi32>
    %232 = arith.andi %227, %231 : vector<1x256xi1>
    %cst_111 = arith.constant 0.000000e+00 : f32
    %233 = vector.shape_cast %232 : vector<1x256xi1> to vector<1x256xi1>
    %234 = vector.broadcast %233 : vector<1x256xi1> to vector<32x256xi1>
    %235 = vector.broadcast %cst_111 : f32 to vector<32x256xf32>
    %236 = arith.select %234, %223, %235 : vector<32x256xi1>, vector<32x256xf32>
    %c512 = arith.constant 512 : index
    %c0_112 = arith.constant 0 : index
    %237 = vector.load %arg8[%c512, %c0_112] : memref<800x256xf32, #tpu.memory_space<vmem>>, vector<32x256xf32>
    tpu.vector_store %arg8[%c512, %c0_112], %236 {strides = array<i32>} : memref<800x256xf32, #tpu.memory_space<vmem>>, vector<32x256xf32>,
    %c0_113 = arith.constant 0 : index
    %c144 = arith.constant 144 : index
    %238 = vector.load %arg7[%c0_113, %c144] : memref<32x418xf32, #tpu.memory_space<vmem>>, vector<32x256xf32>
    %c544 = arith.constant 544 : index
    %c0_114 = arith.constant 0 : index
    %239 = vector.load %arg8[%c544, %c0_114] : memref<800x256xf32, #tpu.memory_space<vmem>>, vector<32x256xf32>
    tpu.vector_store %arg8[%c544, %c0_114], %238 {strides = array<i32>} : memref<800x256xf32, #tpu.memory_space<vmem>>, vector<32x256xf32>,
    %c0_115 = arith.constant 0 : index
    %c145 = arith.constant 145 : index
    %240 = vector.load %arg7[%c0_115, %c145] : memref<32x418xf32, #tpu.memory_space<vmem>>, vector<32x256xf32>
    %c1_i32_116 = arith.constant 1 : i32
    %241 = vector.broadcast %c1_i32_116 : i32 to vector<1x256xi32>
    %242 = arith.addi %21, %241 : vector<1x256xi32>
    %c0_i32_117 = arith.constant 0 : i32
    %243 = vector.broadcast %c0_i32_117 : i32 to vector<1x256xi32>
    %244 = arith.cmpi sge, %242, %243 : vector<1x256xi32>
    %c1_i32_118 = arith.constant 1 : i32
    %245 = vector.broadcast %c1_i32_118 : i32 to vector<1x256xi32>
    %246 = arith.addi %21, %245 : vector<1x256xi32>
    %c16_i32_119 = arith.constant 16 : i32
    %247 = vector.broadcast %c16_i32_119 : i32 to vector<1x256xi32>
    %248 = arith.cmpi slt, %246, %247 : vector<1x256xi32>
    %249 = arith.andi %244, %248 : vector<1x256xi1>
    %cst_120 = arith.constant 0.000000e+00 : f32
    %250 = vector.shape_cast %249 : vector<1x256xi1> to vector<1x256xi1>
    %251 = vector.broadcast %250 : vector<1x256xi1> to vector<32x256xi1>
    %252 = vector.broadcast %cst_120 : f32 to vector<32x256xf32>
    %253 = arith.select %251, %240, %252 : vector<32x256xi1>, vector<32x256xf32>
    %c576 = arith.constant 576 : index
    %c0_121 = arith.constant 0 : index
    %254 = vector.load %arg8[%c576, %c0_121] : memref<800x256xf32, #tpu.memory_space<vmem>>, vector<32x256xf32>
    tpu.vector_store %arg8[%c576, %c0_121], %253 {strides = array<i32>} : memref<800x256xf32, #tpu.memory_space<vmem>>, vector<32x256xf32>,
    %c0_122 = arith.constant 0 : index
    %c146 = arith.constant 146 : index
    %255 = vector.load %arg7[%c0_122, %c146] : memref<32x418xf32, #tpu.memory_space<vmem>>, vector<32x256xf32>
    %c2_i32_123 = arith.constant 2 : i32
    %256 = vector.broadcast %c2_i32_123 : i32 to vector<1x256xi32>
    %257 = arith.addi %21, %256 : vector<1x256xi32>
    %c0_i32_124 = arith.constant 0 : i32
    %258 = vector.broadcast %c0_i32_124 : i32 to vector<1x256xi32>
    %259 = arith.cmpi sge, %257, %258 : vector<1x256xi32>
    %c2_i32_125 = arith.constant 2 : i32
    %260 = vector.broadcast %c2_i32_125 : i32 to vector<1x256xi32>
    %261 = arith.addi %21, %260 : vector<1x256xi32>
    %c16_i32_126 = arith.constant 16 : i32
    %262 = vector.broadcast %c16_i32_126 : i32 to vector<1x256xi32>
    %263 = arith.cmpi slt, %261, %262 : vector<1x256xi32>
    %264 = arith.andi %259, %263 : vector<1x256xi1>
    %cst_127 = arith.constant 0.000000e+00 : f32
    %265 = vector.shape_cast %264 : vector<1x256xi1> to vector<1x256xi1>
    %266 = vector.broadcast %265 : vector<1x256xi1> to vector<32x256xi1>
    %267 = vector.broadcast %cst_127 : f32 to vector<32x256xf32>
    %268 = arith.select %266, %255, %267 : vector<32x256xi1>, vector<32x256xf32>
    %c608 = arith.constant 608 : index
    %c0_128 = arith.constant 0 : index
    %269 = vector.load %arg8[%c608, %c0_128] : memref<800x256xf32, #tpu.memory_space<vmem>>, vector<32x256xf32>
    tpu.vector_store %arg8[%c608, %c0_128], %268 {strides = array<i32>} : memref<800x256xf32, #tpu.memory_space<vmem>>, vector<32x256xf32>,
    %c0_129 = arith.constant 0 : index
    %c158 = arith.constant 158 : index
    %270 = vector.load %arg7[%c0_129, %c158] : memref<32x418xf32, #tpu.memory_space<vmem>>, vector<32x256xf32>
    %c-2_i32_130 = arith.constant -2 : i32
    %271 = vector.broadcast %c-2_i32_130 : i32 to vector<1x256xi32>
    %272 = arith.addi %21, %271 : vector<1x256xi32>
    %c0_i32_131 = arith.constant 0 : i32
    %273 = vector.broadcast %c0_i32_131 : i32 to vector<1x256xi32>
    %274 = arith.cmpi sge, %272, %273 : vector<1x256xi32>
    %c-2_i32_132 = arith.constant -2 : i32
    %275 = vector.broadcast %c-2_i32_132 : i32 to vector<1x256xi32>
    %276 = arith.addi %21, %275 : vector<1x256xi32>
    %c16_i32_133 = arith.constant 16 : i32
    %277 = vector.broadcast %c16_i32_133 : i32 to vector<1x256xi32>
    %278 = arith.cmpi slt, %276, %277 : vector<1x256xi32>
    %279 = arith.andi %274, %278 : vector<1x256xi1>
    %cst_134 = arith.constant 0.000000e+00 : f32
    %280 = vector.shape_cast %279 : vector<1x256xi1> to vector<1x256xi1>
    %281 = vector.broadcast %280 : vector<1x256xi1> to vector<32x256xi1>
    %282 = vector.broadcast %cst_134 : f32 to vector<32x256xf32>
    %283 = arith.select %281, %270, %282 : vector<32x256xi1>, vector<32x256xf32>
    %c640 = arith.constant 640 : index
    %c0_135 = arith.constant 0 : index
    %284 = vector.load %arg8[%c640, %c0_135] : memref<800x256xf32, #tpu.memory_space<vmem>>, vector<32x256xf32>
    tpu.vector_store %arg8[%c640, %c0_135], %283 {strides = array<i32>} : memref<800x256xf32, #tpu.memory_space<vmem>>, vector<32x256xf32>,
    %c0_136 = arith.constant 0 : index
    %c159 = arith.constant 159 : index
    %285 = vector.load %arg7[%c0_136, %c159] : memref<32x418xf32, #tpu.memory_space<vmem>>, vector<32x256xf32>
    %c-1_i32_137 = arith.constant -1 : i32
    %286 = vector.broadcast %c-1_i32_137 : i32 to vector<1x256xi32>
    %287 = arith.addi %21, %286 : vector<1x256xi32>
    %c0_i32_138 = arith.constant 0 : i32
    %288 = vector.broadcast %c0_i32_138 : i32 to vector<1x256xi32>
    %289 = arith.cmpi sge, %287, %288 : vector<1x256xi32>
    %c-1_i32_139 = arith.constant -1 : i32
    %290 = vector.broadcast %c-1_i32_139 : i32 to vector<1x256xi32>
    %291 = arith.addi %21, %290 : vector<1x256xi32>
    %c16_i32_140 = arith.constant 16 : i32
    %292 = vector.broadcast %c16_i32_140 : i32 to vector<1x256xi32>
    %293 = arith.cmpi slt, %291, %292 : vector<1x256xi32>
    %294 = arith.andi %289, %293 : vector<1x256xi1>
    %cst_141 = arith.constant 0.000000e+00 : f32
    %295 = vector.shape_cast %294 : vector<1x256xi1> to vector<1x256xi1>
    %296 = vector.broadcast %295 : vector<1x256xi1> to vector<32x256xi1>
    %297 = vector.broadcast %cst_141 : f32 to vector<32x256xf32>
    %298 = arith.select %296, %285, %297 : vector<32x256xi1>, vector<32x256xf32>
    %c672 = arith.constant 672 : index
    %c0_142 = arith.constant 0 : index
    %299 = vector.load %arg8[%c672, %c0_142] : memref<800x256xf32, #tpu.memory_space<vmem>>, vector<32x256xf32>
    tpu.vector_store %arg8[%c672, %c0_142], %298 {strides = array<i32>} : memref<800x256xf32, #tpu.memory_space<vmem>>, vector<32x256xf32>,
    %c0_143 = arith.constant 0 : index
    %c160_144 = arith.constant 160 : index
    %300 = vector.load %arg7[%c0_143, %c160_144] : memref<32x418xf32, #tpu.memory_space<vmem>>, vector<32x256xf32>
    %c704 = arith.constant 704 : index
    %c0_145 = arith.constant 0 : index
    %301 = vector.load %arg8[%c704, %c0_145] : memref<800x256xf32, #tpu.memory_space<vmem>>, vector<32x256xf32>
    tpu.vector_store %arg8[%c704, %c0_145], %300 {strides = array<i32>} : memref<800x256xf32, #tpu.memory_space<vmem>>, vector<32x256xf32>,
    %c0_146 = arith.constant 0 : index
    %c161 = arith.constant 161 : index
    %302 = vector.load %arg7[%c0_146, %c161] : memref<32x418xf32, #tpu.memory_space<vmem>>, vector<32x256xf32>
    %c1_i32_147 = arith.constant 1 : i32
    %303 = vector.broadcast %c1_i32_147 : i32 to vector<1x256xi32>
    %304 = arith.addi %21, %303 : vector<1x256xi32>
    %c0_i32_148 = arith.constant 0 : i32
    %305 = vector.broadcast %c0_i32_148 : i32 to vector<1x256xi32>
    %306 = arith.cmpi sge, %304, %305 : vector<1x256xi32>
    %c1_i32_149 = arith.constant 1 : i32
    %307 = vector.broadcast %c1_i32_149 : i32 to vector<1x256xi32>
    %308 = arith.addi %21, %307 : vector<1x256xi32>
    %c16_i32_150 = arith.constant 16 : i32
    %309 = vector.broadcast %c16_i32_150 : i32 to vector<1x256xi32>
    %310 = arith.cmpi slt, %308, %309 : vector<1x256xi32>
    %311 = arith.andi %306, %310 : vector<1x256xi1>
    %cst_151 = arith.constant 0.000000e+00 : f32
    %312 = vector.shape_cast %311 : vector<1x256xi1> to vector<1x256xi1>
    %313 = vector.broadcast %312 : vector<1x256xi1> to vector<32x256xi1>
    %314 = vector.broadcast %cst_151 : f32 to vector<32x256xf32>
    %315 = arith.select %313, %302, %314 : vector<32x256xi1>, vector<32x256xf32>
    %c736 = arith.constant 736 : index
    %c0_152 = arith.constant 0 : index
    %316 = vector.load %arg8[%c736, %c0_152] : memref<800x256xf32, #tpu.memory_space<vmem>>, vector<32x256xf32>
    tpu.vector_store %arg8[%c736, %c0_152], %315 {strides = array<i32>} : memref<800x256xf32, #tpu.memory_space<vmem>>, vector<32x256xf32>,
    %c0_153 = arith.constant 0 : index
    %c162 = arith.constant 162 : index
    %317 = vector.load %arg7[%c0_153, %c162] : memref<32x418xf32, #tpu.memory_space<vmem>>, vector<32x256xf32>
    %c2_i32_154 = arith.constant 2 : i32
    %318 = vector.broadcast %c2_i32_154 : i32 to vector<1x256xi32>
    %319 = arith.addi %21, %318 : vector<1x256xi32>
    %c0_i32_155 = arith.constant 0 : i32
    %320 = vector.broadcast %c0_i32_155 : i32 to vector<1x256xi32>
    %321 = arith.cmpi sge, %319, %320 : vector<1x256xi32>
    %c2_i32_156 = arith.constant 2 : i32
    %322 = vector.broadcast %c2_i32_156 : i32 to vector<1x256xi32>
    %323 = arith.addi %21, %322 : vector<1x256xi32>
    %c16_i32_157 = arith.constant 16 : i32
    %324 = vector.broadcast %c16_i32_157 : i32 to vector<1x256xi32>
    %325 = arith.cmpi slt, %323, %324 : vector<1x256xi32>
    %326 = arith.andi %321, %325 : vector<1x256xi1>
    %cst_158 = arith.constant 0.000000e+00 : f32
    %327 = vector.shape_cast %326 : vector<1x256xi1> to vector<1x256xi1>
    %328 = vector.broadcast %327 : vector<1x256xi1> to vector<32x256xi1>
    %329 = vector.broadcast %cst_158 : f32 to vector<32x256xf32>
    %330 = arith.select %328, %317, %329 : vector<32x256xi1>, vector<32x256xf32>
    %c768 = arith.constant 768 : index
    %c0_159 = arith.constant 0 : index
    %331 = vector.load %arg8[%c768, %c0_159] : memref<800x256xf32, #tpu.memory_space<vmem>>, vector<32x256xf32>
    tpu.vector_store %arg8[%c768, %c0_159], %330 {strides = array<i32>} : memref<800x256xf32, #tpu.memory_space<vmem>>, vector<32x256xf32>,
    %c0_160 = arith.constant 0 : index
    %c0_161 = arith.constant 0 : index
    %332 = vector.load %arg2[%c0_160, %c0_161] : memref<6x800xf32, #tpu.memory_space<vmem>>, vector<6x800xf32>
    %c0_162 = arith.constant 0 : index
    %c0_163 = arith.constant 0 : index
    %333 = vector.load %arg8[%c0_162, %c0_163] : memref<800x256xf32, #tpu.memory_space<vmem>>, vector<800x256xf32>
    %cst_164 = arith.constant dense<0.000000e+00> : vector<6x256xf32>
    %334 = tpu.matmul %332, %333, %cst_164 {dimension_numbers = #tpu.dot_dimension_numbers<[1], [0], [0], [1], [0, 0, 1, 1], [], []>} : vector<6x800xf32>, vector<800x256xf32>, vector<6x256xf32> -> vector<6x256xf32>
    %c0_165 = arith.constant 0 : index
    %c0_166 = arith.constant 0 : index
    %335 = vector.load %arg3[%c0_165, %c0_166] : memref<6x1xf32, #tpu.memory_space<vmem>>, vector<6x1xf32>
    %336 = vector.broadcast %335 : vector<6x1xf32> to vector<6x256xf32>
    %337 = arith.addf %334, %336 : vector<6x256xf32>
    %338 = arith.negf %337 : vector<6x256xf32>
    %339 = math.exp %338 : vector<6x256xf32>
    %cst_167 = arith.constant 1.000000e+00 : f32
    %340 = vector.broadcast %cst_167 : f32 to vector<6x256xf32>
    %341 = arith.addf %340, %339 : vector<6x256xf32>
    %342 = arith.divf %340, %341 : vector<6x256xf32>
    %343 = arith.mulf %337, %342 : vector<6x256xf32>
    %c0_168 = arith.constant 0 : index
    %c0_169 = arith.constant 0 : index
    %344 = vector.load %arg9[%c0_168, %c0_169] : memref<6x256xf32, #tpu.memory_space<vmem>>, vector<6x256xf32>
    tpu.vector_store %arg9[%c0_168, %c0_169], %343 {strides = array<i32>} : memref<6x256xf32, #tpu.memory_space<vmem>>, vector<6x256xf32>,
    %c0_170 = arith.constant 0 : index
    %c0_171 = arith.constant 0 : index
    %345 = vector.load %arg9[%c0_170, %c0_171] : memref<6x256xf32, #tpu.memory_space<vmem>>, vector<2x256xf32>
    %cst_172 = arith.constant dense<0xFF800000> : vector<2xf32>
    %346 = vector.multi_reduction <maximumf>, %345, %cst_172 [1] : vector<2x256xf32> to vector<2xf32>
    %347 = vector.shape_cast %346 : vector<2xf32> to vector<2x1xf32>
    %cst_173 = arith.constant dense<0xFF800000> : vector<1xf32>
    %348 = vector.multi_reduction <maximumf>, %347, %cst_173 [0] : vector<2x1xf32> to vector<1xf32>
    %349 = vector.shape_cast %348 : vector<1xf32> to vector<1x1xf32>
    %350 = vector.broadcast %349 : vector<1x1xf32> to vector<2x256xf32>
    %351 = arith.subf %345, %350 : vector<2x256xf32>
    %352 = math.exp %351 : vector<2x256xf32>
    %cst_174 = arith.constant dense<0.000000e+00> : vector<2xf32>
    %353 = vector.multi_reduction <add>, %352, %cst_174 [1] : vector<2x256xf32> to vector<2xf32>
    %354 = vector.shape_cast %353 : vector<2xf32> to vector<2x1xf32>
    %cst_175 = arith.constant dense<0.000000e+00> : vector<1xf32>
    %355 = vector.multi_reduction <add>, %354, %cst_175 [0] : vector<2x1xf32> to vector<1xf32>
    %356 = vector.shape_cast %355 : vector<1xf32> to vector<1x1xf32>
    %357 = tpu.reciprocal %356 {approx = true} : vector<1x1xf32> -> vector<1x1xf32>
    %358 = arith.mulf %356, %357 : vector<1x1xf32>
    %cst_176 = arith.constant 2.000000e+00 : f32
    %359 = vector.broadcast %cst_176 : f32 to vector<1x1xf32>
    %360 = arith.subf %359, %358 : vector<1x1xf32>
    %361 = arith.mulf %357, %360 : vector<1x1xf32>
    %362 = vector.broadcast %361 : vector<1x1xf32> to vector<2x256xf32>
    %363 = arith.mulf %352, %362 : vector<2x256xf32>
    %c0_177 = arith.constant 0 : index
    %c0_178 = arith.constant 0 : index
    %364 = vector.load %arg9[%c0_177, %c0_178] : memref<6x256xf32, #tpu.memory_space<vmem>>, vector<2x256xf32>
    tpu.vector_store %arg9[%c0_177, %c0_178], %363 {strides = array<i32>} : memref<6x256xf32, #tpu.memory_space<vmem>>, vector<2x256xf32>,
    %c2 = arith.constant 2 : index
    %c0_179 = arith.constant 0 : index
    %365 = vector.load %arg9[%c2, %c0_179] : memref<6x256xf32, #tpu.memory_space<vmem>>, vector<2x256xf32>
    %cst_180 = arith.constant dense<0xFF800000> : vector<2xf32>
    %366 = vector.multi_reduction <maximumf>, %365, %cst_180 [1] : vector<2x256xf32> to vector<2xf32>
    %367 = vector.shape_cast %366 : vector<2xf32> to vector<2x1xf32>
    %cst_181 = arith.constant dense<0xFF800000> : vector<1xf32>
    %368 = vector.multi_reduction <maximumf>, %367, %cst_181 [0] : vector<2x1xf32> to vector<1xf32>
    %369 = vector.shape_cast %368 : vector<1xf32> to vector<1x1xf32>
    %370 = vector.broadcast %369 : vector<1x1xf32> to vector<2x256xf32>
    %371 = arith.subf %365, %370 : vector<2x256xf32>
    %372 = math.exp %371 : vector<2x256xf32>
    %cst_182 = arith.constant dense<0.000000e+00> : vector<2xf32>
    %373 = vector.multi_reduction <add>, %372, %cst_182 [1] : vector<2x256xf32> to vector<2xf32>
    %374 = vector.shape_cast %373 : vector<2xf32> to vector<2x1xf32>
    %cst_183 = arith.constant dense<0.000000e+00> : vector<1xf32>
    %375 = vector.multi_reduction <add>, %374, %cst_183 [0] : vector<2x1xf32> to vector<1xf32>
    %376 = vector.shape_cast %375 : vector<1xf32> to vector<1x1xf32>
    %377 = tpu.reciprocal %376 {approx = true} : vector<1x1xf32> -> vector<1x1xf32>
    %378 = arith.mulf %376, %377 : vector<1x1xf32>
    %cst_184 = arith.constant 2.000000e+00 : f32
    %379 = vector.broadcast %cst_184 : f32 to vector<1x1xf32>
    %380 = arith.subf %379, %378 : vector<1x1xf32>
    %381 = arith.mulf %377, %380 : vector<1x1xf32>
    %382 = vector.broadcast %381 : vector<1x1xf32> to vector<2x256xf32>
    %383 = arith.mulf %372, %382 : vector<2x256xf32>
    %c2_185 = arith.constant 2 : index
    %c0_186 = arith.constant 0 : index
    %384 = vector.load %arg9[%c2_185, %c0_186] : memref<6x256xf32, #tpu.memory_space<vmem>>, vector<2x256xf32>
    tpu.vector_store %arg9[%c2_185, %c0_186], %383 {strides = array<i32>} : memref<6x256xf32, #tpu.memory_space<vmem>>, vector<2x256xf32>,
    %c4 = arith.constant 4 : index
    %c0_187 = arith.constant 0 : index
    %385 = vector.load %arg9[%c4, %c0_187] : memref<6x256xf32, #tpu.memory_space<vmem>>, vector<2x256xf32>
    %cst_188 = arith.constant dense<0xFF800000> : vector<2xf32>
    %386 = vector.multi_reduction <maximumf>, %385, %cst_188 [1] : vector<2x256xf32> to vector<2xf32>
    %387 = vector.shape_cast %386 : vector<2xf32> to vector<2x1xf32>
    %cst_189 = arith.constant dense<0xFF800000> : vector<1xf32>
    %388 = vector.multi_reduction <maximumf>, %387, %cst_189 [0] : vector<2x1xf32> to vector<1xf32>
    %389 = vector.shape_cast %388 : vector<1xf32> to vector<1x1xf32>
    %390 = vector.broadcast %389 : vector<1x1xf32> to vector<2x256xf32>
    %391 = arith.subf %385, %390 : vector<2x256xf32>
    %392 = math.exp %391 : vector<2x256xf32>
    %cst_190 = arith.constant dense<0.000000e+00> : vector<2xf32>
    %393 = vector.multi_reduction <add>, %392, %cst_190 [1] : vector<2x256xf32> to vector<2xf32>
    %394 = vector.shape_cast %393 : vector<2xf32> to vector<2x1xf32>
    %cst_191 = arith.constant dense<0.000000e+00> : vector<1xf32>
    %395 = vector.multi_reduction <add>, %394, %cst_191 [0] : vector<2x1xf32> to vector<1xf32>
    %396 = vector.shape_cast %395 : vector<1xf32> to vector<1x1xf32>
    %397 = tpu.reciprocal %396 {approx = true} : vector<1x1xf32> -> vector<1x1xf32>
    %398 = arith.mulf %396, %397 : vector<1x1xf32>
    %cst_192 = arith.constant 2.000000e+00 : f32
    %399 = vector.broadcast %cst_192 : f32 to vector<1x1xf32>
    %400 = arith.subf %399, %398 : vector<1x1xf32>
    %401 = arith.mulf %397, %400 : vector<1x1xf32>
    %402 = vector.broadcast %401 : vector<1x1xf32> to vector<2x256xf32>
    %403 = arith.mulf %392, %402 : vector<2x256xf32>
    %c4_193 = arith.constant 4 : index
    %c0_194 = arith.constant 0 : index
    %404 = vector.load %arg9[%c4_193, %c0_194] : memref<6x256xf32, #tpu.memory_space<vmem>>, vector<2x256xf32>
    tpu.vector_store %arg9[%c4_193, %c0_194], %403 {strides = array<i32>} : memref<6x256xf32, #tpu.memory_space<vmem>>, vector<2x256xf32>,
    %c0_195 = arith.constant 0 : index
    %c0_196 = arith.constant 0 : index
    %405 = vector.load %arg4[%c0_195, %c0_196] : memref<32x6xf32, #tpu.memory_space<vmem>>, vector<32x6xf32>
    %c0_197 = arith.constant 0 : index
    %c0_198 = arith.constant 0 : index
    %406 = vector.load %arg9[%c0_197, %c0_198] : memref<6x256xf32, #tpu.memory_space<vmem>>, vector<6x256xf32>
    %cst_199 = arith.constant dense<0.000000e+00> : vector<32x256xf32>
    %407 = tpu.matmul %405, %406, %cst_199 {dimension_numbers = #tpu.dot_dimension_numbers<[1], [0], [0], [1], [0, 0, 1, 1], [], []>} : vector<32x6xf32>, vector<6x256xf32>, vector<32x256xf32> -> vector<32x256xf32>
    %c0_200 = arith.constant 0 : index
    %c0_201 = arith.constant 0 : index
    %408 = vector.load %arg5[%c0_200, %c0_201] : memref<32x1xf32, #tpu.memory_space<vmem>>, vector<32x1xf32>
    %409 = vector.broadcast %408 : vector<32x1xf32> to vector<32x256xf32>
    %410 = arith.addf %407, %409 : vector<32x256xf32>
    %411 = arith.negf %410 : vector<32x256xf32>
    %412 = math.exp %411 : vector<32x256xf32>
    %cst_202 = arith.constant 1.000000e+00 : f32
    %413 = vector.broadcast %cst_202 : f32 to vector<32x256xf32>
    %414 = arith.addf %413, %412 : vector<32x256xf32>
    %415 = arith.divf %413, %414 : vector<32x256xf32>
    %416 = arith.mulf %410, %415 : vector<32x256xf32>
    %417 = arith.mulf %1, %416 : vector<32x256xf32>
    %c0_203 = arith.constant 0 : index
    %c0_204 = arith.constant 0 : index
    %c0_205 = arith.constant 0 : index
    %418 = vector.load %arg6[%c0_203, %c0_204, %c0_205] : memref<1x32x256xf32, #tpu.memory_space<vmem>>, vector<1x32x256xf32>
    %419 = vector.shape_cast %418 : vector<1x32x256xf32> to vector<32x256xf32>
    %420 = vector.shape_cast %417 : vector<32x256xf32> to vector<1x32x256xf32>
    tpu.vector_store %arg6[%c0_203, %c0_204, %c0_205], %420 {strides = array<i32>} : memref<1x32x256xf32, #tpu.memory_space<vmem>>, vector<1x32x256xf32>,
    return
  }
  func.func @transform_0(%arg0: i32) -> (i32, i32, i32) {
    %c0_i32 = arith.constant 0 : i32
    %c0_i32_0 = arith.constant 0 : i32
    %c0_i32_1 = arith.constant 0 : i32
    return %arg0, %c0_i32, %c0_i32_0 : i32, i32, i32
  }
  func.func @transform_1(%arg0: i32) -> (i32, i32) {
    %c0_i32 = arith.constant 0 : i32
    %c0_i32_0 = arith.constant 0 : i32
    %c0_i32_1 = arith.constant 0 : i32
    return %c0_i32, %c0_i32_0 : i32, i32
  }
  func.func @transform_2(%arg0: i32) -> (i32, i32) {
    %c0_i32 = arith.constant 0 : i32
    %c0_i32_0 = arith.constant 0 : i32
    %c0_i32_1 = arith.constant 0 : i32
    return %c0_i32, %c0_i32_0 : i32, i32
  }
  func.func @transform_3(%arg0: i32) -> (i32, i32) {
    %c0_i32 = arith.constant 0 : i32
    %c0_i32_0 = arith.constant 0 : i32
    %c0_i32_1 = arith.constant 0 : i32
    return %c0_i32, %c0_i32_0 : i32, i32
  }
  func.func @transform_4(%arg0: i32) -> (i32, i32) {
    %c0_i32 = arith.constant 0 : i32
    %c0_i32_0 = arith.constant 0 : i32
    %c0_i32_1 = arith.constant 0 : i32
    return %c0_i32, %c0_i32_0 : i32, i32
  }
  func.func @transform_5(%arg0: i32) -> (i32, i32, i32) {
    %c0_i32 = arith.constant 0 : i32
    %c0_i32_0 = arith.constant 0 : i32
    %c0_i32_1 = arith.constant 0 : i32
    return %arg0, %c0_i32, %c0_i32_0 : i32, i32, i32
  }
}

</mosaic_0001>

<llo_original>
// kernel: tpu_custom_call.1
$region0: #{tpu_custom_call.1}
  #allocation0 [shape = 'u32[]', space=smem, size = 0x4, offset = 0x4, fixed_abs, tag = 'smem constant byte address 0x4 - core index']
  #allocation1 [shape = 'u32[144,128]{1,0:T(1,128)}', space=vmem, size = 0x12000, scoped, tag = 'internal scratch']
  #allocation2 [shape = 'f32[32,418]{1,0:T(8,128)}', space=vmem, size = 0x10000, scoped, tag = 'scratch operand']
  #allocation3 [shape = 'f32[800,256]{1,0:T(8,128)}', space=vmem, size = 0xc8000, scoped, tag = 'scratch operand']
  #allocation4 [shape = 'f32[6,256]{1,0:T(8,128)}', space=vmem, size = 0x2000, scoped, tag = 'scratch operand']
  %s0 = inlined_call_operand.hbm [shape: f32[2,32,256], index: 0, kind: input, shape index: {}]
  %s1 = inlined_call_operand.vmem [shape: f32[6,800], index: 1, kind: input, shape index: {}]
  %s2 = inlined_call_operand.vmem [shape: f32[6,1], index: 2, kind: input, shape index: {}]
  %s3 = inlined_call_operand.vmem [shape: f32[32,6], index: 3, kind: input, shape index: {}]
  %s4 = inlined_call_operand.vmem [shape: f32[32,1], index: 4, kind: input, shape index: {}]
  %s5 = inlined_call_operand.hbm [shape: f32[2,32,256], index: 5, kind: output, shape index: {}]
  %s6 = sld [smem:[#allocation0]]
  $region57: #{tpu_custom_call.1} parent=0
    _
  %s8 = ssub.s32 1, %s6
  %s9 = scalar_select 0, %s8, %s6
  $region1: #{tpu_custom_call.1} parent=0
    #allocation5 [shape = 'u8[65536]{0}', space=vmem, size = 0x10000, scoped, tag = 'input window, operand 0']
    #allocation6 [shape = 's32[2]{0}', space=sflag, size = 0x8, scoped, tag = 'scoped memory for tpu_custom_call.1']
    #allocation7 [shape = 's32[2]{0}', space=sflag, size = 0x8, scoped, tag = 'scoped memory for tpu_custom_call.1']
    #allocation8 [shape = 'u8[65536]{0}', space=vmem, size = 0x10000, scoped, tag = 'output window, operand 0']
    %10 = vsyncpa [#allocation6], 0
    %s11 = scalar_lea.sflag [#allocation6], 1
    %12 = vsyncpa %s11, 0
    %13 = vsyncpa [#allocation7], 0
    %s14 = scalar_lea.sflag [#allocation7], 1
    %15 = vsyncpa %s14, 0
    loop: start=0, step=1, limit=4
    $region2: #{tpu_custom_call.1} parent=1 // loop_pre_header
      _
    $region3: #{tpu_custom_call.1} parent=1 // loop_header
      %s17 = sphi 0, %s21
      %p18 = scmp.ge.s32.totalorder %s17, 4
      %s27 = sphi 0, %s29
      %s30 = sphi 0, %s27
      %s31 = sphi 0, %s30
      %s47 = sphi 0, %s31
      %s51 = sphi 0, %s51
      %s53 = sphi 0, %s51
      %s54 = sphi 0, %s53
      %s68 = sphi 0, %s54
      %s72 = sphi 0, %s72
      %s74 = sphi 0, %s72
      %s75 = sphi 0, %s74
      %s89 = sphi 0, %s75
      %s93 = sphi 0, %s93
      %s95 = sphi 0, %s93
      %s96 = sphi 0, %s95
      %s110 = sphi 0, %s96
      %s114 = sphi 0, %s114
      %s116 = sphi 0, %s114
      %s117 = sphi 0, %s116
      %s131 = sphi 0, %s117
      %s137 = sphi 0, %s139
      %s140 = sphi 0, %s137
      %s141 = sphi 0, %s140
      %s157 = sphi 0, %s141
    $region4: #{tpu_custom_call.1} parent=1 // loop_header_branch
      %20 = sbr.rel (%p18) target = $region8
    $region5: #{tpu_custom_call.1} parent=1 // loop_body
      %s22 = ssub.s32 %s17, 1
      %s23 = ssub.s32 %s17, 2
      %s24 = sadd.s32 %s17, 1
      %s25 = ssub.s32 %s17, %s24
      %p26 = scmp.eq.s32.totalorder %s25, 0
      %s28 = sadd.s32 %s27, 1
      %s29 = scalar_select %p26, %s27, %s28
      %p32 = pneg %p26
      %p33 = scmp.eq.s32.totalorder %s17, 1
      %p34 = por %p32, %p33
      %p35 = scmp.ne.s32.totalorder %s27, %s30
      %p36 = scmp.eq.s32.totalorder %s17, 0
      %p37 = por %p35, %p36
      %p38 = scmp.ne.s32.totalorder %s27, %s30
      %p39 = scmp.eq.s32.totalorder %s22, 1
      %p40 = por %p38, %p39
      %p41 = scmp.ne.s32.totalorder %s30, %s31
      %p42 = scmp.eq.s32.totalorder %s22, 0
      %p43 = por %p41, %p42
      %p44 = scmp.ne.s32.totalorder %s30, %s31
      %p45 = scmp.eq.s32.totalorder %s23, 1
      %p46 = por %p44, %p45
      %p48 = scmp.ne.s32.totalorder %s31, %s47
      %p49 = scmp.eq.s32.totalorder %s23, 0
      %p50 = por %p48, %p49
      %s52 = sadd.s32 %s51, 1
      %p55 = scmp.eq.s32.totalorder %s17, 1
      %p56 = scmp.ne.s32.totalorder %s51, %s53
      %p57 = scmp.eq.s32.totalorder %s17, 0
      %p58 = por %p56, %p57
      %p59 = scmp.ne.s32.totalorder %s51, %s53
      %p60 = scmp.eq.s32.totalorder %s22, 1
      %p61 = por %p59, %p60
      %p62 = scmp.ne.s32.totalorder %s53, %s54
      %p63 = scmp.eq.s32.totalorder %s22, 0
      %p64 = por %p62, %p63
      %p65 = scmp.ne.s32.totalorder %s53, %s54
      %p66 = scmp.eq.s32.totalorder %s23, 1
      %p67 = por %p65, %p66
      %p69 = scmp.ne.s32.totalorder %s54, %s68
      %p70 = scmp.eq.s32.totalorder %s23, 0
      %p71 = por %p69, %p70
      %s73 = sadd.s32 %s72, 1
      %p76 = scmp.eq.s32.totalorder %s17, 1
      %p77 = scmp.ne.s32.totalorder %s72, %s74
      %p78 = scmp.eq.s32.totalorder %s17, 0
      %p79 = por %p77, %p78
      %p80 = scmp.ne.s32.totalorder %s72, %s74
      %p81 = scmp.eq.s32.totalorder %s22, 1
      %p82 = por %p80, %p81
      %p83 = scmp.ne.s32.totalorder %s74, %s75
      %p84 = scmp.eq.s32.totalorder %s22, 0
      %p85 = por %p83, %p84
      %p86 = scmp.ne.s32.totalorder %s74, %s75
      %p87 = scmp.eq.s32.totalorder %s23, 1
      %p88 = por %p86, %p87
      %p90 = scmp.ne.s32.totalorder %s75, %s89
      %p91 = scmp.eq.s32.totalorder %s23, 0
      %p92 = por %p90, %p91
      %s94 = sadd.s32 %s93, 1
      %p97 = scmp.eq.s32.totalorder %s17, 1
      %p98 = scmp.ne.s32.totalorder %s93, %s95
      %p99 = scmp.eq.s32.totalorder %s17, 0
      %p100 = por %p98, %p99
      %p101 = scmp.ne.s32.totalorder %s93, %s95
      %p102 = scmp.eq.s32.totalorder %s22, 1
      %p103 = por %p101, %p102
      %p104 = scmp.ne.s32.totalorder %s95, %s96
      %p105 = scmp.eq.s32.totalorder %s22, 0
      %p106 = por %p104, %p105
      %p107 = scmp.ne.s32.totalorder %s95, %s96
      %p108 = scmp.eq.s32.totalorder %s23, 1
      %p109 = por %p107, %p108
      %p111 = scmp.ne.s32.totalorder %s96, %s110
      %p112 = scmp.eq.s32.totalorder %s23, 0
      %p113 = por %p111, %p112
      %s115 = sadd.s32 %s114, 1
      %p118 = scmp.eq.s32.totalorder %s17, 1
      %p119 = scmp.ne.s32.totalorder %s114, %s116
      %p120 = scmp.eq.s32.totalorder %s17, 0
      %p121 = por %p119, %p120
      %p122 = scmp.ne.s32.totalorder %s114, %s116
      %p123 = scmp.eq.s32.totalorder %s22, 1
      %p124 = por %p122, %p123
      %p125 = scmp.ne.s32.totalorder %s116, %s117
      %p126 = scmp.eq.s32.totalorder %s22, 0
      %p127 = por %p125, %p126
      %p128 = scmp.ne.s32.totalorder %s116, %s117
      %p129 = scmp.eq.s32.totalorder %s23, 1
      %p130 = por %p128, %p129
      %p132 = scmp.ne.s32.totalorder %s117, %s131
      %p133 = scmp.eq.s32.totalorder %s23, 0
      %p134 = por %p132, %p133
      %s135 = ssub.s32 %s17, %s24
      %p136 = scmp.eq.s32.totalorder %s135, 0
      %s138 = sadd.s32 %s137, 1
      %s139 = scalar_select %p136, %s137, %s138
      %p142 = pneg %p136
      %p143 = scmp.eq.s32.totalorder %s17, 1
      %p144 = por %p142, %p143
      %p145 = scmp.ne.s32.totalorder %s137, %s140
      %p146 = scmp.eq.s32.totalorder %s17, 0
      %p147 = por %p145, %p146
      %p148 = scmp.ne.s32.totalorder %s137, %s140
      %p149 = scmp.eq.s32.totalorder %s22, 1
      %p150 = por %p148, %p149
      %p151 = scmp.ne.s32.totalorder %s140, %s141
      %p152 = scmp.eq.s32.totalorder %s22, 0
      %p153 = por %p151, %p152
      %p154 = scmp.ne.s32.totalorder %s140, %s141
      %p155 = scmp.eq.s32.totalorder %s23, 1
      %p156 = por %p154, %p155
      %p158 = scmp.ne.s32.totalorder %s141, %s157
      %p159 = scmp.eq.s32.totalorder %s23, 0
      %p160 = por %p158, %p159
      %p161 = scmp.le.s32.totalorder 1, %s17
      %p162 = scmp.lt.s32.totalorder %s17, 3
      %p163 = pnand %p161, %p162
      %p164 = pneg %p163
      // Predicated region
      $region9: #{tpu_custom_call.1} parent=5 // pred_check
        _
      $region10: #{tpu_custom_call.1} parent=5 // pred_check_branch
        %166 = sbr.rel (%p163) target = $region12
      $region11: #{tpu_custom_call.1} parent=5 // pred_region
        %s167 = ssub.s32 %s17, 1
        // Predicated region
        $region13: #{tpu_custom_call.1} parent=11 // pred_check
          %p168 = pneg %p64
        $region14: #{tpu_custom_call.1} parent=11 // pred_check_branch
          %170 = sbr.rel (%p168) target = $region16
        $region15: #{tpu_custom_call.1} parent=11 // pred_region
          _
        $region16: #{tpu_custom_call.1} parent=11 // pred_fallthru
          _
        // Predicated region
        $region17: #{tpu_custom_call.1} parent=11 // pred_check
          %p171 = pneg %p85
        $region18: #{tpu_custom_call.1} parent=11 // pred_check_branch
          %173 = sbr.rel (%p171) target = $region20
        $region19: #{tpu_custom_call.1} parent=11 // pred_region
          _
        $region20: #{tpu_custom_call.1} parent=11 // pred_fallthru
          _
        // Predicated region
        $region21: #{tpu_custom_call.1} parent=11 // pred_check
          %p174 = pneg %p106
        $region22: #{tpu_custom_call.1} parent=11 // pred_check_branch
          %176 = sbr.rel (%p174) target = $region24
        $region23: #{tpu_custom_call.1} parent=11 // pred_region
          _
        $region24: #{tpu_custom_call.1} parent=11 // pred_fallthru
          _
        // Predicated region
        $region25: #{tpu_custom_call.1} parent=11 // pred_check
          %p177 = pneg %p127
        $region26: #{tpu_custom_call.1} parent=11 // pred_check_branch
          %179 = sbr.rel (%p177) target = $region28
        $region27: #{tpu_custom_call.1} parent=11 // pred_region
          _
        $region28: #{tpu_custom_call.1} parent=11 // pred_fallthru
          _
      $region12: #{tpu_custom_call.1} parent=5 // pred_fallthru
        _
      %p180 = scmp.lt.s32.totalorder %s17, 2
      // Predicated region
      $region29: #{tpu_custom_call.1} parent=5 // pred_check
        %p181 = pneg %p180
      $region30: #{tpu_custom_call.1} parent=5 // pred_check_branch
        %183 = sbr.rel (%p181) target = $region32
      $region31: #{tpu_custom_call.1} parent=5 // pred_region
        // Predicated region
        $region33: #{tpu_custom_call.1} parent=31 // pred_check
          %p184 = pneg %p37
        $region34: #{tpu_custom_call.1} parent=31 // pred_check_branch
          %186 = sbr.rel (%p184) target = $region36
        $region35: #{tpu_custom_call.1} parent=31 // pred_region
          %s187 = sand.u32 %s27, 1
          %s188 = scalar_lea.sflag [#allocation6], %s187
          %s189 = sand.u32 %s27, 1
          %s190 = smul.addr %s189, 64
          %s191 = scalar_lea.vmem [#allocation5], %s190
          %s193 = ssub.s32 1024, 1024
          %194 = vsyncadd %s188, %s193
          %s195 = smul.addr %s17, 8
          %s196 = smul.addr %s195, 128
          %s197 = scalar_lea.hbm %s0, %s196
          %s198 = sshll.u32 %s191, 4
          %s199 = int_to_ptr.vmem [resolvable:$true] %s198
          %204 = dma.hbm_to_vmem [thread:$0]  %s197, 1024, %s199, %s188, 256, 256, 16
        $region36: #{tpu_custom_call.1} parent=31 // pred_fallthru
          _
      $region32: #{tpu_custom_call.1} parent=5 // pred_fallthru
        _
      %p205 = scmp.le.s32.totalorder 1, %s17
      %p206 = scmp.lt.s32.totalorder %s17, 3
      %p207 = pnand %p205, %p206
      %p208 = pneg %p207
      // Predicated region
      $region37: #{tpu_custom_call.1} parent=5 // pred_check
        _
      $region38: #{tpu_custom_call.1} parent=5 // pred_check_branch
        %210 = sbr.rel (%p207) target = $region40
      $region39: #{tpu_custom_call.1} parent=5 // pred_region
        %s211 = ssub.s32 %s17, 1
        %s212 = sand.u32 %s30, 1
        %s213 = scalar_lea.sflag [#allocation6], %s212
        %s214 = sand.u32 %s30, 1
        %s215 = smul.addr %s214, 64
        %s216 = scalar_lea.vmem [#allocation5], %s215
        // Predicated region
        $region41: #{tpu_custom_call.1} parent=39 // pred_check
          %p217 = pneg %p43
        $region42: #{tpu_custom_call.1} parent=39 // pred_check_branch
          %219 = sbr.rel (%p217) target = $region44
        $region43: #{tpu_custom_call.1} parent=39 // pred_region
          %220 = dma.done %s213, 1024
        $region44: #{tpu_custom_call.1} parent=39 // pred_fallthru
          _
        %s221 = sand.u32 %s30, 1
        %s222 = scalar_lea.sflag [#allocation6], %s221
        %s223 = sand.u32 %s30, 1
        %s224 = smul.addr %s223, 64
        %s225 = scalar_lea.vmem [#allocation5], %s224
        %p226 = pneg %p43
        %p227 = pneg %p40
        %p228 = pneg %p64
        %p229 = pneg %p61
        %p230 = pneg %p85
        %p231 = pneg %p82
        %p232 = pneg %p106
        %p233 = pneg %p103
        %p234 = pneg %p127
        %p235 = pneg %p124
        %p236 = pneg %p153
        %p237 = pneg %p150
        %s238 = sand.u32 %s140, 1
        %s239 = scalar_lea.sflag [#allocation7], %s238
        %s240 = sand.u32 %s140, 1
        %s241 = smul.addr %s240, 64
        %s242 = scalar_lea.vmem [#allocation8], %s241
        %v243 = vld [vmem:[%s216] sm:$0xff]
        %v244 = vld [vmem:[%s216 + $0x8] sm:$0xff]
        %v245 = vld [vmem:[%s216 + $0x10] sm:$0xff]
        %v246 = vld [vmem:[%s216 + $0x18] sm:$0xff]
        %v247 = vld [vmem:[%s216 + $0x20] sm:$0xff]
        %v248 = vld [vmem:[%s216 + $0x28] sm:$0xff]
        %v249 = vld [vmem:[%s216 + $0x30] sm:$0xff]
        %v250 = vld [vmem:[%s216 + $0x38] sm:$0xff]
        %251 = vst [vmem:[#allocation2] sm:$0xff] 0.0
        %252 = vst [vmem:[#allocation2 + $0x8] sm:$0xff] 0.0
        %253 = vst [vmem:[#allocation2 + $0x10] sm:$0xff] 0.0
        %vm254 = vcmask 277504
        %255 = vst.msk [vmem:[#allocation2 + $0x18] sm:$0xff] %vm254, 0.0
        %256 = vst [vmem:[#allocation2 + $0x20] sm:$0xff] 0.0
        %257 = vst [vmem:[#allocation2 + $0x28] sm:$0xff] 0.0
        %258 = vst [vmem:[#allocation2 + $0x30] sm:$0xff] 0.0
        %259 = vst.msk [vmem:[#allocation2 + $0x38] sm:$0xff] %vm254, 0.0
        %260 = vst [vmem:[#allocation2 + $0x40] sm:$0xff] 0.0
        %261 = vst [vmem:[#allocation2 + $0x48] sm:$0xff] 0.0
        %262 = vst [vmem:[#allocation2 + $0x50] sm:$0xff] 0.0
        %263 = vst.msk [vmem:[#allocation2 + $0x58] sm:$0xff] %vm254, 0.0
        %264 = vst [vmem:[#allocation2 + $0x60] sm:$0xff] 0.0
        %265 = vst [vmem:[#allocation2 + $0x68] sm:$0xff] 0.0
        %266 = vst [vmem:[#allocation2 + $0x70] sm:$0xff] 0.0
        %267 = vst.msk [vmem:[#allocation2 + $0x78] sm:$0xff] %vm254, 0.0
        %268 = vst [vmem:[#allocation2 + $0x8] sm:$0xff] %v243
        %269 = vst [vmem:[#allocation2 + $0x10] sm:$0xff] %v244
        %270 = vst [vmem:[#allocation2 + $0x28] sm:$0xff] %v245
        %271 = vst [vmem:[#allocation2 + $0x30] sm:$0xff] %v246
        %272 = vst [vmem:[#allocation2 + $0x48] sm:$0xff] %v247
        %273 = vst [vmem:[#allocation2 + $0x50] sm:$0xff] %v248
        %274 = vst [vmem:[#allocation2 + $0x68] sm:$0xff] %v249
        %275 = vst [vmem:[#allocation2 + $0x70] sm:$0xff] %v250
        %v276 = vlaneseq
        %v277 = vand.u32 %v276, 127
        %v278 = vadd.s32 %v277, 128
        %vm279 = vcmp.lt.s32.totalorder %v277, 0
        %v280 = vsub.s32 0, %v277
        %v281 = vsel %vm279, %v280, %v277
        %v282 = vshrl.u32 %v281, 4
        %v283 = vand.u32 %v281, 15
        %v284 = vsub.s32 0, %v283
        %v285 = vsel %vm279, %v284, %v283
        %vm286 = vcmp.lt.s32.totalorder %v278, 0
        %v287 = vsub.s32 0, %v278
        %v288 = vsel %vm286, %v287, %v278
        %v289 = vshrl.u32 %v288, 4
        %v290 = vand.u32 %v288, 15
        %v291 = vsub.s32 0, %v290
        %v292 = vsel %vm286, %v291, %v290
        %vm293 = vcmp.ne.s32.totalorder %v285, 0
        %vm294 = vcmp.ne.s32.totalorder %v292, 0
        %vm295 = vcmp.lt.s32.totalorder %v285, 0
        %vm296 = vcmp.lt.s32.totalorder %v292, 0
        %vm297 = vmand %vm295, %vm293
        %vm298 = vmand %vm296, %vm294
        %v299 = vadd.s32 %v285, 16
        %v300 = vadd.s32 %v292, 16
        %v301 = vsel %vm297, %v299, %v285
        %v302 = vsel %vm298, %v300, %v292
        %v303 = vld [vmem:[#allocation2] sm:$0xff]
        %v304 = vld [vmem:[#allocation2 + $0x8] sm:$0xff]
        %v305 = vld [vmem:[#allocation2 + $0x10] sm:$0xff]
        %v306 = vld [vmem:[#allocation2 + $0x20] sm:$0xff]
        %v307 = vld [vmem:[#allocation2 + $0x28] sm:$0xff]
        %v308 = vld [vmem:[#allocation2 + $0x30] sm:$0xff]
        %v309 = vld [vmem:[#allocation2 + $0x40] sm:$0xff]
        %v310 = vld [vmem:[#allocation2 + $0x48] sm:$0xff]
        %v311 = vld [vmem:[#allocation2 + $0x50] sm:$0xff]
        %v312 = vld [vmem:[#allocation2 + $0x60] sm:$0xff]
        %v313 = vld [vmem:[#allocation2 + $0x68] sm:$0xff]
        %v314 = vld [vmem:[#allocation2 + $0x70] sm:$0xff]
        %v315 = vadd.s32 %v301, 4294967294
        %v316 = vadd.s32 %v302, 4294967294
        %vm317 = vcmp.ge.s32.totalorder %v315, 0
        %vm318 = vcmp.ge.s32.totalorder %v316, 0
        %vm319 = vcmp.lt.s32.totalorder %v315, 16
        %vm320 = vcmp.lt.s32.totalorder %v316, 16
        %vm321 = vmand %vm317, %vm319
        %vm322 = vmand %vm318, %vm320
        %v323 = vsel %vm321, 1, 0
        %v324 = vsel %vm322, 1, 0
        %vm325 = vcmp.eq.s32.totalorder %v323, 1
        %vm326 = vcmp.eq.s32.totalorder %v324, 1
        %339 = vrot.lane.b32.xlu0 %v303, 34
        %v340 = vpop.permute.xlu0 %339
        %341 = vrot.lane.b32.xlu0 %v304, 34
        %v342 = vpop.permute.xlu0 %341
        %343 = vrot.lane.b32.xlu0 %v305, 34
        %v344 = vpop.permute.xlu0 %343
        %345 = vrot.lane.b32.xlu0 %v306, 34
        %v346 = vpop.permute.xlu0 %345
        %347 = vrot.lane.b32.xlu0 %v307, 34
        %v348 = vpop.permute.xlu0 %347
        %349 = vrot.lane.b32.xlu0 %v308, 34
        %v350 = vpop.permute.xlu0 %349
        %351 = vrot.lane.b32.xlu0 %v309, 34
        %v352 = vpop.permute.xlu0 %351
        %353 = vrot.lane.b32.xlu0 %v310, 34
        %v354 = vpop.permute.xlu0 %353
        %355 = vrot.lane.b32.xlu0 %v311, 34
        %v356 = vpop.permute.xlu0 %355
        %357 = vrot.lane.b32.xlu0 %v312, 34
        %v358 = vpop.permute.xlu0 %357
        %359 = vrot.lane.b32.xlu0 %v313, 34
        %v360 = vpop.permute.xlu0 %359
        %361 = vrot.lane.b32.xlu0 %v314, 34
        %v362 = vpop.permute.xlu0 %361
        %v363 = vsel %vm254, %v340, %v342
        %v364 = vsel %vm254, %v342, %v344
        %v365 = vsel %vm254, %v346, %v348
        %v366 = vsel %vm254, %v348, %v350
        %v367 = vsel %vm254, %v352, %v354
        %v368 = vsel %vm254, %v354, %v356
        %v369 = vsel %vm254, %v358, %v360
        %v370 = vsel %vm254, %v360, %v362
        %v379 = vsel %vm325, %v363, 0.0
        %v380 = vsel %vm326, %v364, 0.0
        %v381 = vsel %vm325, %v365, 0.0
        %v382 = vsel %vm326, %v366, 0.0
        %v383 = vsel %vm325, %v367, 0.0
        %v384 = vsel %vm326, %v368, 0.0
        %v385 = vsel %vm325, %v369, 0.0
        %v386 = vsel %vm326, %v370, 0.0
        %387 = vst [vmem:[#allocation3] sm:$0xff] %v379
        %388 = vst [vmem:[#allocation3 + $0x8] sm:$0xff] %v380
        %389 = vst [vmem:[#allocation3 + $0x10] sm:$0xff] %v381
        %390 = vst [vmem:[#allocation3 + $0x18] sm:$0xff] %v382
        %391 = vst [vmem:[#allocation3 + $0x20] sm:$0xff] %v383
        %392 = vst [vmem:[#allocation3 + $0x28] sm:$0xff] %v384
        %393 = vst [vmem:[#allocation3 + $0x30] sm:$0xff] %v385
        %394 = vst [vmem:[#allocation3 + $0x38] sm:$0xff] %v386
        %v395 = vld [vmem:[#allocation2] sm:$0xff]
        %v396 = vld [vmem:[#allocation2 + $0x8] sm:$0xff]
        %v397 = vld [vmem:[#allocation2 + $0x10] sm:$0xff]
        %v398 = vld [vmem:[#allocation2 + $0x20] sm:$0xff]
        %v399 = vld [vmem:[#allocation2 + $0x28] sm:$0xff]
        %v400 = vld [vmem:[#allocation2 + $0x30] sm:$0xff]
        %v401 = vld [vmem:[#allocation2 + $0x40] sm:$0xff]
        %v402 = vld [vmem:[#allocation2 + $0x48] sm:$0xff]
        %v403 = vld [vmem:[#allocation2 + $0x50] sm:$0xff]
        %v404 = vld [vmem:[#allocation2 + $0x60] sm:$0xff]
        %v405 = vld [vmem:[#allocation2 + $0x68] sm:$0xff]
        %v406 = vld [vmem:[#allocation2 + $0x70] sm:$0xff]
        %v407 = vadd.s32 %v301, 4294967295
        %v408 = vadd.s32 %v302, 4294967295
        %vm409 = vcmp.ge.s32.totalorder %v407, 0
        %vm410 = vcmp.ge.s32.totalorder %v408, 0
        %vm411 = vcmp.lt.s32.totalorder %v407, 16
        %vm412 = vcmp.lt.s32.totalorder %v408, 16
        %vm413 = vmand %vm409, %vm411
        %vm414 = vmand %vm410, %vm412
        %v415 = vsel %vm413, 1, 0
        %v416 = vsel %vm414, 1, 0
        %vm417 = vcmp.eq.s32.totalorder %v415, 1
        %vm418 = vcmp.eq.s32.totalorder %v416, 1
        %431 = vrot.lane.b32.xlu0 %v395, 33
        %v432 = vpop.permute.xlu0 %431
        %433 = vrot.lane.b32.xlu0 %v396, 33
        %v434 = vpop.permute.xlu0 %433
        %435 = vrot.lane.b32.xlu0 %v397, 33
        %v436 = vpop.permute.xlu0 %435
        %437 = vrot.lane.b32.xlu0 %v398, 33
        %v438 = vpop.permute.xlu0 %437
        %439 = vrot.lane.b32.xlu0 %v399, 33
        %v440 = vpop.permute.xlu0 %439
        %441 = vrot.lane.b32.xlu0 %v400, 33
        %v442 = vpop.permute.xlu0 %441
        %443 = vrot.lane.b32.xlu0 %v401, 33
        %v444 = vpop.permute.xlu0 %443
        %445 = vrot.lane.b32.xlu0 %v402, 33
        %v446 = vpop.permute.xlu0 %445
        %447 = vrot.lane.b32.xlu0 %v403, 33
        %v448 = vpop.permute.xlu0 %447
        %449 = vrot.lane.b32.xlu0 %v404, 33
        %v450 = vpop.permute.xlu0 %449
        %451 = vrot.lane.b32.xlu0 %v405, 33
        %v452 = vpop.permute.xlu0 %451
        %453 = vrot.lane.b32.xlu0 %v406, 33
        %v454 = vpop.permute.xlu0 %453
        %vm455 = vcmask 269312
        %v456 = vsel %vm455, %v432, %v434
        %v457 = vsel %vm455, %v434, %v436
        %v458 = vsel %vm455, %v438, %v440
        %v459 = vsel %vm455, %v440, %v442
        %v460 = vsel %vm455, %v444, %v446
        %v461 = vsel %vm455, %v446, %v448
        %v462 = vsel %vm455, %v450, %v452
        %v463 = vsel %vm455, %v452, %v454
        %v472 = vsel %vm417, %v456, 0.0
        %v473 = vsel %vm418, %v457, 0.0
        %v474 = vsel %vm417, %v458, 0.0
        %v475 = vsel %vm418, %v459, 0.0
        %v476 = vsel %vm417, %v460, 0.0
        %v477 = vsel %vm418, %v461, 0.0
        %v478 = vsel %vm417, %v462, 0.0
        %v479 = vsel %vm418, %v463, 0.0
        %480 = vst [vmem:[#allocation3 + $0x40] sm:$0xff] %v472
        %481 = vst [vmem:[#allocation3 + $0x48] sm:$0xff] %v473
        %482 = vst [vmem:[#allocation3 + $0x50] sm:$0xff] %v474
        %483 = vst [vmem:[#allocation3 + $0x58] sm:$0xff] %v475
        %484 = vst [vmem:[#allocation3 + $0x60] sm:$0xff] %v476
        %485 = vst [vmem:[#allocation3 + $0x68] sm:$0xff] %v477
        %486 = vst [vmem:[#allocation3 + $0x70] sm:$0xff] %v478
        %487 = vst [vmem:[#allocation3 + $0x78] sm:$0xff] %v479
        %v488 = vld [vmem:[#allocation2] sm:$0xff]
        %v489 = vld [vmem:[#allocation2 + $0x8] sm:$0xff]
        %v490 = vld [vmem:[#allocation2 + $0x10] sm:$0xff]
        %v491 = vld [vmem:[#allocation2 + $0x20] sm:$0xff]
        %v492 = vld [vmem:[#allocation2 + $0x28] sm:$0xff]
        %v493 = vld [vmem:[#allocation2 + $0x30] sm:$0xff]
        %v494 = vld [vmem:[#allocation2 + $0x40] sm:$0xff]
        %v495 = vld [vmem:[#allocation2 + $0x48] sm:$0xff]
        %v496 = vld [vmem:[#allocation2 + $0x50] sm:$0xff]
        %v497 = vld [vmem:[#allocation2 + $0x60] sm:$0xff]
        %v498 = vld [vmem:[#allocation2 + $0x68] sm:$0xff]
        %v499 = vld [vmem:[#allocation2 + $0x70] sm:$0xff]
        %512 = vrot.lane.b32.xlu0 %v488, 32
        %v513 = vpop.permute.xlu0 %512
        %514 = vrot.lane.b32.xlu0 %v489, 32
        %v515 = vpop.permute.xlu0 %514
        %516 = vrot.lane.b32.xlu0 %v490, 32
        %v517 = vpop.permute.xlu0 %516
        %518 = vrot.lane.b32.xlu0 %v491, 32
        %v519 = vpop.permute.xlu0 %518
        %520 = vrot.lane.b32.xlu0 %v492, 32
        %v521 = vpop.permute.xlu0 %520
        %522 = vrot.lane.b32.xlu0 %v493, 32
        %v523 = vpop.permute.xlu0 %522
        %524 = vrot.lane.b32.xlu0 %v494, 32
        %v525 = vpop.permute.xlu0 %524
        %526 = vrot.lane.b32.xlu0 %v495, 32
        %v527 = vpop.permute.xlu0 %526
        %528 = vrot.lane.b32.xlu0 %v496, 32
        %v529 = vpop.permute.xlu0 %528
        %530 = vrot.lane.b32.xlu0 %v497, 32
        %v531 = vpop.permute.xlu0 %530
        %532 = vrot.lane.b32.xlu0 %v498, 32
        %v533 = vpop.permute.xlu0 %532
        %534 = vrot.lane.b32.xlu0 %v499, 32
        %v535 = vpop.permute.xlu0 %534
        %vm536 = vcmask 261120
        %v537 = vsel %vm536, %v513, %v515
        %v538 = vsel %vm536, %v515, %v517
        %v539 = vsel %vm536, %v519, %v521
        %v540 = vsel %vm536, %v521, %v523
        %v541 = vsel %vm536, %v525, %v527
        %v542 = vsel %vm536, %v527, %v529
        %v543 = vsel %vm536, %v531, %v533
        %v544 = vsel %vm536, %v533, %v535
        %553 = vst [vmem:[#allocation3 + $0x80] sm:$0xff] %v537
        %554 = vst [vmem:[#allocation3 + $0x88] sm:$0xff] %v538
        %555 = vst [vmem:[#allocation3 + $0x90] sm:$0xff] %v539
        %556 = vst [vmem:[#allocation3 + $0x98] sm:$0xff] %v540
        %557 = vst [vmem:[#allocation3 + $0xa0] sm:$0xff] %v541
        %558 = vst [vmem:[#allocation3 + $0xa8] sm:$0xff] %v542
        %559 = vst [vmem:[#allocation3 + $0xb0] sm:$0xff] %v543
        %560 = vst [vmem:[#allocation3 + $0xb8] sm:$0xff] %v544
        %v561 = vld [vmem:[#allocation2] sm:$0xff]
        %v562 = vld [vmem:[#allocation2 + $0x8] sm:$0xff]
        %v563 = vld [vmem:[#allocation2 + $0x10] sm:$0xff]
        %v564 = vld [vmem:[#allocation2 + $0x20] sm:$0xff]
        %v565 = vld [vmem:[#allocation2 + $0x28] sm:$0xff]
        %v566 = vld [vmem:[#allocation2 + $0x30] sm:$0xff]
        %v567 = vld [vmem:[#allocation2 + $0x40] sm:$0xff]
        %v568 = vld [vmem:[#allocation2 + $0x48] sm:$0xff]
        %v569 = vld [vmem:[#allocation2 + $0x50] sm:$0xff]
        %v570 = vld [vmem:[#allocation2 + $0x60] sm:$0xff]
        %v571 = vld [vmem:[#allocation2 + $0x68] sm:$0xff]
        %v572 = vld [vmem:[#allocation2 + $0x70] sm:$0xff]
        %v573 = vadd.s32 %v301, 1
        %v574 = vadd.s32 %v302, 1
        %vm575 = vcmp.ge.s32.totalorder %v573, 0
        %vm576 = vcmp.ge.s32.totalorder %v574, 0
        %vm577 = vcmp.lt.s32.totalorder %v573, 16
        %vm578 = vcmp.lt.s32.totalorder %v574, 16
        %vm579 = vmand %vm575, %vm577
        %vm580 = vmand %vm576, %vm578
        %v581 = vsel %vm579, 1, 0
        %v582 = vsel %vm580, 1, 0
        %vm583 = vcmp.eq.s32.totalorder %v581, 1
        %vm584 = vcmp.eq.s32.totalorder %v582, 1
        %597 = vrot.lane.b32.xlu0 %v561, 31
        %v598 = vpop.permute.xlu0 %597
        %599 = vrot.lane.b32.xlu0 %v562, 31
        %v600 = vpop.permute.xlu0 %599
        %601 = vrot.lane.b32.xlu0 %v563, 31
        %v602 = vpop.permute.xlu0 %601
        %603 = vrot.lane.b32.xlu0 %v564, 31
        %v604 = vpop.permute.xlu0 %603
        %605 = vrot.lane.b32.xlu0 %v565, 31
        %v606 = vpop.permute.xlu0 %605
        %607 = vrot.lane.b32.xlu0 %v566, 31
        %v608 = vpop.permute.xlu0 %607
        %609 = vrot.lane.b32.xlu0 %v567, 31
        %v610 = vpop.permute.xlu0 %609
        %611 = vrot.lane.b32.xlu0 %v568, 31
        %v612 = vpop.permute.xlu0 %611
        %613 = vrot.lane.b32.xlu0 %v569, 31
        %v614 = vpop.permute.xlu0 %613
        %615 = vrot.lane.b32.xlu0 %v570, 31
        %v616 = vpop.permute.xlu0 %615
        %617 = vrot.lane.b32.xlu0 %v571, 31
        %v618 = vpop.permute.xlu0 %617
        %619 = vrot.lane.b32.xlu0 %v572, 31
        %v620 = vpop.permute.xlu0 %619
        %vm621 = vcmask 252928
        %v622 = vsel %vm621, %v598, %v600
        %v623 = vsel %vm621, %v600, %v602
        %v624 = vsel %vm621, %v604, %v606
        %v625 = vsel %vm621, %v606, %v608
        %v626 = vsel %vm621, %v610, %v612
        %v627 = vsel %vm621, %v612, %v614
        %v628 = vsel %vm621, %v616, %v618
        %v629 = vsel %vm621, %v618, %v620
        %v638 = vsel %vm583, %v622, 0.0
        %v639 = vsel %vm584, %v623, 0.0
        %v640 = vsel %vm583, %v624, 0.0
        %v641 = vsel %vm584, %v625, 0.0
        %v642 = vsel %vm583, %v626, 0.0
        %v643 = vsel %vm584, %v627, 0.0
        %v644 = vsel %vm583, %v628, 0.0
        %v645 = vsel %vm584, %v629, 0.0
        %646 = vst [vmem:[#allocation3 + $0xc0] sm:$0xff] %v638
        %647 = vst [vmem:[#allocation3 + $0xc8] sm:$0xff] %v639
        %648 = vst [vmem:[#allocation3 + $0xd0] sm:$0xff] %v640
        %649 = vst [vmem:[#allocation3 + $0xd8] sm:$0xff] %v641
        %650 = vst [vmem:[#allocation3 + $0xe0] sm:$0xff] %v642
        %651 = vst [vmem:[#allocation3 + $0xe8] sm:$0xff] %v643
        %652 = vst [vmem:[#allocation3 + $0xf0] sm:$0xff] %v644
        %653 = vst [vmem:[#allocation3 + $0xf8] sm:$0xff] %v645
        %v654 = vld [vmem:[#allocation2] sm:$0xff]
        %v655 = vld [vmem:[#allocation2 + $0x8] sm:$0xff]
        %v656 = vld [vmem:[#allocation2 + $0x10] sm:$0xff]
        %v657 = vld [vmem:[#allocation2 + $0x20] sm:$0xff]
        %v658 = vld [vmem:[#allocation2 + $0x28] sm:$0xff]
        %v659 = vld [vmem:[#allocation2 + $0x30] sm:$0xff]
        %v660 = vld [vmem:[#allocation2 + $0x40] sm:$0xff]
        %v661 = vld [vmem:[#allocation2 + $0x48] sm:$0xff]
        %v662 = vld [vmem:[#allocation2 + $0x50] sm:$0xff]
        %v663 = vld [vmem:[#allocation2 + $0x60] sm:$0xff]
        %v664 = vld [vmem:[#allocation2 + $0x68] sm:$0xff]
        %v665 = vld [vmem:[#allocation2 + $0x70] sm:$0xff]
        %v666 = vadd.s32 %v301, 2
        %v667 = vadd.s32 %v302, 2
        %vm668 = vcmp.ge.s32.totalorder %v666, 0
        %vm669 = vcmp.ge.s32.totalorder %v667, 0
        %vm670 = vcmp.lt.s32.totalorder %v666, 16
        %vm671 = vcmp.lt.s32.totalorder %v667, 16
        %vm672 = vmand %vm668, %vm670
        %vm673 = vmand %vm669, %vm671
        %v674 = vsel %vm672, 1, 0
        %v675 = vsel %vm673, 1, 0
        %vm676 = vcmp.eq.s32.totalorder %v674, 1
        %vm677 = vcmp.eq.s32.totalorder %v675, 1
        %690 = vrot.lane.b32.xlu0 %v654, 30
        %v691 = vpop.permute.xlu0 %690
        %692 = vrot.lane.b32.xlu0 %v655, 30
        %v693 = vpop.permute.xlu0 %692
        %694 = vrot.lane.b32.xlu0 %v656, 30
        %v695 = vpop.permute.xlu0 %694
        %696 = vrot.lane.b32.xlu0 %v657, 30
        %v697 = vpop.permute.xlu0 %696
        %698 = vrot.lane.b32.xlu0 %v658, 30
        %v699 = vpop.permute.xlu0 %698
        %700 = vrot.lane.b32.xlu0 %v659, 30
        %v701 = vpop.permute.xlu0 %700
        %702 = vrot.lane.b32.xlu0 %v660, 30
        %v703 = vpop.permute.xlu0 %702
        %704 = vrot.lane.b32.xlu0 %v661, 30
        %v705 = vpop.permute.xlu0 %704
        %706 = vrot.lane.b32.xlu0 %v662, 30
        %v707 = vpop.permute.xlu0 %706
        %708 = vrot.lane.b32.xlu0 %v663, 30
        %v709 = vpop.permute.xlu0 %708
        %710 = vrot.lane.b32.xlu0 %v664, 30
        %v711 = vpop.permute.xlu0 %710
        %712 = vrot.lane.b32.xlu0 %v665, 30
        %v713 = vpop.permute.xlu0 %712
        %vm714 = vcmask 244736
        %v715 = vsel %vm714, %v691, %v693
        %v716 = vsel %vm714, %v693, %v695
        %v717 = vsel %vm714, %v697, %v699
        %v718 = vsel %vm714, %v699, %v701
        %v719 = vsel %vm714, %v703, %v705
        %v720 = vsel %vm714, %v705, %v707
        %v721 = vsel %vm714, %v709, %v711
        %v722 = vsel %vm714, %v711, %v713
        %v731 = vsel %vm676, %v715, 0.0
        %v732 = vsel %vm677, %v716, 0.0
        %v733 = vsel %vm676, %v717, 0.0
        %v734 = vsel %vm677, %v718, 0.0
        %v735 = vsel %vm676, %v719, 0.0
        %v736 = vsel %vm677, %v720, 0.0
        %v737 = vsel %vm676, %v721, 0.0
        %v738 = vsel %vm677, %v722, 0.0
        %739 = vst [vmem:[#allocation3 + $0x100] sm:$0xff] %v731
        %740 = vst [vmem:[#allocation3 + $0x108] sm:$0xff] %v732
        %741 = vst [vmem:[#allocation3 + $0x110] sm:$0xff] %v733
        %742 = vst [vmem:[#allocation3 + $0x118] sm:$0xff] %v734
        %743 = vst [vmem:[#allocation3 + $0x120] sm:$0xff] %v735
        %744 = vst [vmem:[#allocation3 + $0x128] sm:$0xff] %v736
        %745 = vst [vmem:[#allocation3 + $0x130] sm:$0xff] %v737
        %746 = vst [vmem:[#allocation3 + $0x138] sm:$0xff] %v738
        %v747 = vld [vmem:[#allocation2] sm:$0xff]
        %v748 = vld [vmem:[#allocation2 + $0x8] sm:$0xff]
        %v749 = vld [vmem:[#allocation2 + $0x10] sm:$0xff]
        %v750 = vld [vmem:[#allocation2 + $0x20] sm:$0xff]
        %v751 = vld [vmem:[#allocation2 + $0x28] sm:$0xff]
        %v752 = vld [vmem:[#allocation2 + $0x30] sm:$0xff]
        %v753 = vld [vmem:[#allocation2 + $0x40] sm:$0xff]
        %v754 = vld [vmem:[#allocation2 + $0x48] sm:$0xff]
        %v755 = vld [vmem:[#allocation2 + $0x50] sm:$0xff]
        %v756 = vld [vmem:[#allocation2 + $0x60] sm:$0xff]
        %v757 = vld [vmem:[#allocation2 + $0x68] sm:$0xff]
        %v758 = vld [vmem:[#allocation2 + $0x70] sm:$0xff]
        %771 = vrot.lane.b32.xlu0 %v747, 18
        %v772 = vpop.permute.xlu0 %771
        %773 = vrot.lane.b32.xlu0 %v748, 18
        %v774 = vpop.permute.xlu0 %773
        %775 = vrot.lane.b32.xlu0 %v749, 18
        %v776 = vpop.permute.xlu0 %775
        %777 = vrot.lane.b32.xlu0 %v750, 18
        %v778 = vpop.permute.xlu0 %777
        %779 = vrot.lane.b32.xlu0 %v751, 18
        %v780 = vpop.permute.xlu0 %779
        %781 = vrot.lane.b32.xlu0 %v752, 18
        %v782 = vpop.permute.xlu0 %781
        %783 = vrot.lane.b32.xlu0 %v753, 18
        %v784 = vpop.permute.xlu0 %783
        %785 = vrot.lane.b32.xlu0 %v754, 18
        %v786 = vpop.permute.xlu0 %785
        %787 = vrot.lane.b32.xlu0 %v755, 18
        %v788 = vpop.permute.xlu0 %787
        %789 = vrot.lane.b32.xlu0 %v756, 18
        %v790 = vpop.permute.xlu0 %789
        %791 = vrot.lane.b32.xlu0 %v757, 18
        %v792 = vpop.permute.xlu0 %791
        %793 = vrot.lane.b32.xlu0 %v758, 18
        %v794 = vpop.permute.xlu0 %793
        %vm795 = vcmask 146432
        %v796 = vsel %vm795, %v772, %v774
        %v797 = vsel %vm795, %v774, %v776
        %v798 = vsel %vm795, %v778, %v780
        %v799 = vsel %vm795, %v780, %v782
        %v800 = vsel %vm795, %v784, %v786
        %v801 = vsel %vm795, %v786, %v788
        %v802 = vsel %vm795, %v790, %v792
        %v803 = vsel %vm795, %v792, %v794
        %v812 = vsel %vm325, %v796, 0.0
        %v813 = vsel %vm326, %v797, 0.0
        %v814 = vsel %vm325, %v798, 0.0
        %v815 = vsel %vm326, %v799, 0.0
        %v816 = vsel %vm325, %v800, 0.0
        %v817 = vsel %vm326, %v801, 0.0
        %v818 = vsel %vm325, %v802, 0.0
        %v819 = vsel %vm326, %v803, 0.0
        %820 = vst [vmem:[#allocation3 + $0x140] sm:$0xff] %v812
        %821 = vst [vmem:[#allocation3 + $0x148] sm:$0xff] %v813
        %822 = vst [vmem:[#allocation3 + $0x150] sm:$0xff] %v814
        %823 = vst [vmem:[#allocation3 + $0x158] sm:$0xff] %v815
        %824 = vst [vmem:[#allocation3 + $0x160] sm:$0xff] %v816
        %825 = vst [vmem:[#allocation3 + $0x168] sm:$0xff] %v817
        %826 = vst [vmem:[#allocation3 + $0x170] sm:$0xff] %v818
        %827 = vst [vmem:[#allocation3 + $0x178] sm:$0xff] %v819
        %v828 = vld [vmem:[#allocation2] sm:$0xff]
        %v829 = vld [vmem:[#allocation2 + $0x8] sm:$0xff]
        %v830 = vld [vmem:[#allocation2 + $0x10] sm:$0xff]
        %v831 = vld [vmem:[#allocation2 + $0x20] sm:$0xff]
        %v832 = vld [vmem:[#allocation2 + $0x28] sm:$0xff]
        %v833 = vld [vmem:[#allocation2 + $0x30] sm:$0xff]
        %v834 = vld [vmem:[#allocation2 + $0x40] sm:$0xff]
        %v835 = vld [vmem:[#allocation2 + $0x48] sm:$0xff]
        %v836 = vld [vmem:[#allocation2 + $0x50] sm:$0xff]
        %v837 = vld [vmem:[#allocation2 + $0x60] sm:$0xff]
        %v838 = vld [vmem:[#allocation2 + $0x68] sm:$0xff]
        %v839 = vld [vmem:[#allocation2 + $0x70] sm:$0xff]
        %852 = vrot.lane.b32.xlu0 %v828, 17
        %v853 = vpop.permute.xlu0 %852
        %854 = vrot.lane.b32.xlu0 %v829, 17
        %v855 = vpop.permute.xlu0 %854
        %856 = vrot.lane.b32.xlu0 %v830, 17
        %v857 = vpop.permute.xlu0 %856
        %858 = vrot.lane.b32.xlu0 %v831, 17
        %v859 = vpop.permute.xlu0 %858
        %860 = vrot.lane.b32.xlu0 %v832, 17
        %v861 = vpop.permute.xlu0 %860
        %862 = vrot.lane.b32.xlu0 %v833, 17
        %v863 = vpop.permute.xlu0 %862
        %864 = vrot.lane.b32.xlu0 %v834, 17
        %v865 = vpop.permute.xlu0 %864
        %866 = vrot.lane.b32.xlu0 %v835, 17
        %v867 = vpop.permute.xlu0 %866
        %868 = vrot.lane.b32.xlu0 %v836, 17
        %v869 = vpop.permute.xlu0 %868
        %870 = vrot.lane.b32.xlu0 %v837, 17
        %v871 = vpop.permute.xlu0 %870
        %872 = vrot.lane.b32.xlu0 %v838, 17
        %v873 = vpop.permute.xlu0 %872
        %874 = vrot.lane.b32.xlu0 %v839, 17
        %v875 = vpop.permute.xlu0 %874
        %vm876 = vcmask 138240
        %v877 = vsel %vm876, %v853, %v855
        %v878 = vsel %vm876, %v855, %v857
        %v879 = vsel %vm876, %v859, %v861
        %v880 = vsel %vm876, %v861, %v863
        %v881 = vsel %vm876, %v865, %v867
        %v882 = vsel %vm876, %v867, %v869
        %v883 = vsel %vm876, %v871, %v873
        %v884 = vsel %vm876, %v873, %v875
        %v893 = vsel %vm417, %v877, 0.0
        %v894 = vsel %vm418, %v878, 0.0
        %v895 = vsel %vm417, %v879, 0.0
        %v896 = vsel %vm418, %v880, 0.0
        %v897 = vsel %vm417, %v881, 0.0
        %v898 = vsel %vm418, %v882, 0.0
        %v899 = vsel %vm417, %v883, 0.0
        %v900 = vsel %vm418, %v884, 0.0
        %901 = vst [vmem:[#allocation3 + $0x180] sm:$0xff] %v893
        %902 = vst [vmem:[#allocation3 + $0x188] sm:$0xff] %v894
        %903 = vst [vmem:[#allocation3 + $0x190] sm:$0xff] %v895
        %904 = vst [vmem:[#allocation3 + $0x198] sm:$0xff] %v896
        %905 = vst [vmem:[#allocation3 + $0x1a0] sm:$0xff] %v897
        %906 = vst [vmem:[#allocation3 + $0x1a8] sm:$0xff] %v898
        %907 = vst [vmem:[#allocation3 + $0x1b0] sm:$0xff] %v899
        %908 = vst [vmem:[#allocation3 + $0x1b8] sm:$0xff] %v900
        %v909 = vld [vmem:[#allocation2] sm:$0xff]
        %v910 = vld [vmem:[#allocation2 + $0x8] sm:$0xff]
        %v911 = vld [vmem:[#allocation2 + $0x10] sm:$0xff]
        %v912 = vld [vmem:[#allocation2 + $0x20] sm:$0xff]
        %v913 = vld [vmem:[#allocation2 + $0x28] sm:$0xff]
        %v914 = vld [vmem:[#allocation2 + $0x30] sm:$0xff]
        %v915 = vld [vmem:[#allocation2 + $0x40] sm:$0xff]
        %v916 = vld [vmem:[#allocation2 + $0x48] sm:$0xff]
        %v917 = vld [vmem:[#allocation2 + $0x50] sm:$0xff]
        %v918 = vld [vmem:[#allocation2 + $0x60] sm:$0xff]
        %v919 = vld [vmem:[#allocation2 + $0x68] sm:$0xff]
        %v920 = vld [vmem:[#allocation2 + $0x70] sm:$0xff]
        %933 = vrot.lane.b32.xlu0 %v909, 16
        %v934 = vpop.permute.xlu0 %933
        %935 = vrot.lane.b32.xlu0 %v910, 16
        %v936 = vpop.permute.xlu0 %935
        %937 = vrot.lane.b32.xlu0 %v911, 16
        %v938 = vpop.permute.xlu0 %937
        %939 = vrot.lane.b32.xlu0 %v912, 16
        %v940 = vpop.permute.xlu0 %939
        %941 = vrot.lane.b32.xlu0 %v913, 16
        %v942 = vpop.permute.xlu0 %941
        %943 = vrot.lane.b32.xlu0 %v914, 16
        %v944 = vpop.permute.xlu0 %943
        %945 = vrot.lane.b32.xlu0 %v915, 16
        %v946 = vpop.permute.xlu0 %945
        %947 = vrot.lane.b32.xlu0 %v916, 16
        %v948 = vpop.permute.xlu0 %947
        %949 = vrot.lane.b32.xlu0 %v917, 16
        %v950 = vpop.permute.xlu0 %949
        %951 = vrot.lane.b32.xlu0 %v918, 16
        %v952 = vpop.permute.xlu0 %951
        %953 = vrot.lane.b32.xlu0 %v919, 16
        %v954 = vpop.permute.xlu0 %953
        %955 = vrot.lane.b32.xlu0 %v920, 16
        %v956 = vpop.permute.xlu0 %955
        %vm957 = vcmask 130048
        %v958 = vsel %vm957, %v934, %v936
        %v959 = vsel %vm957, %v936, %v938
        %v960 = vsel %vm957, %v940, %v942
        %v961 = vsel %vm957, %v942, %v944
        %v962 = vsel %vm957, %v946, %v948
        %v963 = vsel %vm957, %v948, %v950
        %v964 = vsel %vm957, %v952, %v954
        %v965 = vsel %vm957, %v954, %v956
        %974 = vst [vmem:[#allocation3 + $0x1c0] sm:$0xff] %v958
        %975 = vst [vmem:[#allocation3 + $0x1c8] sm:$0xff] %v959
        %976 = vst [vmem:[#allocation3 + $0x1d0] sm:$0xff] %v960
        %977 = vst [vmem:[#allocation3 + $0x1d8] sm:$0xff] %v961
        %978 = vst [vmem:[#allocation3 + $0x1e0] sm:$0xff] %v962
        %979 = vst [vmem:[#allocation3 + $0x1e8] sm:$0xff] %v963
        %980 = vst [vmem:[#allocation3 + $0x1f0] sm:$0xff] %v964
        %981 = vst [vmem:[#allocation3 + $0x1f8] sm:$0xff] %v965
        %v982 = vld [vmem:[#allocation2] sm:$0xff]
        %v983 = vld [vmem:[#allocation2 + $0x8] sm:$0xff]
        %v984 = vld [vmem:[#allocation2 + $0x10] sm:$0xff]
        %v985 = vld [vmem:[#allocation2 + $0x20] sm:$0xff]
        %v986 = vld [vmem:[#allocation2 + $0x28] sm:$0xff]
        %v987 = vld [vmem:[#allocation2 + $0x30] sm:$0xff]
        %v988 = vld [vmem:[#allocation2 + $0x40] sm:$0xff]
        %v989 = vld [vmem:[#allocation2 + $0x48] sm:$0xff]
        %v990 = vld [vmem:[#allocation2 + $0x50] sm:$0xff]
        %v991 = vld [vmem:[#allocation2 + $0x60] sm:$0xff]
        %v992 = vld [vmem:[#allocation2 + $0x68] sm:$0xff]
        %v993 = vld [vmem:[#allocation2 + $0x70] sm:$0xff]
        %1006 = vrot.lane.b32.xlu0 %v982, 15
        %v1007 = vpop.permute.xlu0 %1006
        %1008 = vrot.lane.b32.xlu0 %v983, 15
        %v1009 = vpop.permute.xlu0 %1008
        %1010 = vrot.lane.b32.xlu0 %v984, 15
        %v1011 = vpop.permute.xlu0 %1010
        %1012 = vrot.lane.b32.xlu0 %v985, 15
        %v1013 = vpop.permute.xlu0 %1012
        %1014 = vrot.lane.b32.xlu0 %v986, 15
        %v1015 = vpop.permute.xlu0 %1014
        %1016 = vrot.lane.b32.xlu0 %v987, 15
        %v1017 = vpop.permute.xlu0 %1016
        %1018 = vrot.lane.b32.xlu0 %v988, 15
        %v1019 = vpop.permute.xlu0 %1018
        %1020 = vrot.lane.b32.xlu0 %v989, 15
        %v1021 = vpop.permute.xlu0 %1020
        %1022 = vrot.lane.b32.xlu0 %v990, 15
        %v1023 = vpop.permute.xlu0 %1022
        %1024 = vrot.lane.b32.xlu0 %v991, 15
        %v1025 = vpop.permute.xlu0 %1024
        %1026 = vrot.lane.b32.xlu0 %v992, 15
        %v1027 = vpop.permute.xlu0 %1026
        %1028 = vrot.lane.b32.xlu0 %v993, 15
        %v1029 = vpop.permute.xlu0 %1028
        %vm1030 = vcmask 121856
        %v1031 = vsel %vm1030, %v1007, %v1009
        %v1032 = vsel %vm1030, %v1009, %v1011
        %v1033 = vsel %vm1030, %v1013, %v1015
        %v1034 = vsel %vm1030, %v1015, %v1017
        %v1035 = vsel %vm1030, %v1019, %v1021
        %v1036 = vsel %vm1030, %v1021, %v1023
        %v1037 = vsel %vm1030, %v1025, %v1027
        %v1038 = vsel %vm1030, %v1027, %v1029
        %v1047 = vsel %vm583, %v1031, 0.0
        %v1048 = vsel %vm584, %v1032, 0.0
        %v1049 = vsel %vm583, %v1033, 0.0
        %v1050 = vsel %vm584, %v1034, 0.0
        %v1051 = vsel %vm583, %v1035, 0.0
        %v1052 = vsel %vm584, %v1036, 0.0
        %v1053 = vsel %vm583, %v1037, 0.0
        %v1054 = vsel %vm584, %v1038, 0.0
        %1055 = vst [vmem:[#allocation3 + $0x200] sm:$0xff] %v1047
        %1056 = vst [vmem:[#allocation3 + $0x208] sm:$0xff] %v1048
        %1057 = vst [vmem:[#allocation3 + $0x210] sm:$0xff] %v1049
        %1058 = vst [vmem:[#allocation3 + $0x218] sm:$0xff] %v1050
        %1059 = vst [vmem:[#allocation3 + $0x220] sm:$0xff] %v1051
        %1060 = vst [vmem:[#allocation3 + $0x228] sm:$0xff] %v1052
        %1061 = vst [vmem:[#allocation3 + $0x230] sm:$0xff] %v1053
        %1062 = vst [vmem:[#allocation3 + $0x238] sm:$0xff] %v1054
        %v1063 = vld [vmem:[#allocation2] sm:$0xff]
        %v1064 = vld [vmem:[#allocation2 + $0x8] sm:$0xff]
        %v1065 = vld [vmem:[#allocation2 + $0x10] sm:$0xff]
        %v1066 = vld [vmem:[#allocation2 + $0x20] sm:$0xff]
        %v1067 = vld [vmem:[#allocation2 + $0x28] sm:$0xff]
        %v1068 = vld [vmem:[#allocation2 + $0x30] sm:$0xff]
        %v1069 = vld [vmem:[#allocation2 + $0x40] sm:$0xff]
        %v1070 = vld [vmem:[#allocation2 + $0x48] sm:$0xff]
        %v1071 = vld [vmem:[#allocation2 + $0x50] sm:$0xff]
        %v1072 = vld [vmem:[#allocation2 + $0x60] sm:$0xff]
        %v1073 = vld [vmem:[#allocation2 + $0x68] sm:$0xff]
        %v1074 = vld [vmem:[#allocation2 + $0x70] sm:$0xff]
        %1087 = vrot.lane.b32.xlu0 %v1063, 14
        %v1088 = vpop.permute.xlu0 %1087
        %1089 = vrot.lane.b32.xlu0 %v1064, 14
        %v1090 = vpop.permute.xlu0 %1089
        %1091 = vrot.lane.b32.xlu0 %v1065, 14
        %v1092 = vpop.permute.xlu0 %1091
        %1093 = vrot.lane.b32.xlu0 %v1066, 14
        %v1094 = vpop.permute.xlu0 %1093
        %1095 = vrot.lane.b32.xlu0 %v1067, 14
        %v1096 = vpop.permute.xlu0 %1095
        %1097 = vrot.lane.b32.xlu0 %v1068, 14
        %v1098 = vpop.permute.xlu0 %1097
        %1099 = vrot.lane.b32.xlu0 %v1069, 14
        %v1100 = vpop.permute.xlu0 %1099
        %1101 = vrot.lane.b32.xlu0 %v1070, 14
        %v1102 = vpop.permute.xlu0 %1101
        %1103 = vrot.lane.b32.xlu0 %v1071, 14
        %v1104 = vpop.permute.xlu0 %1103
        %1105 = vrot.lane.b32.xlu0 %v1072, 14
        %v1106 = vpop.permute.xlu0 %1105
        %1107 = vrot.lane.b32.xlu0 %v1073, 14
        %v1108 = vpop.permute.xlu0 %1107
        %1109 = vrot.lane.b32.xlu0 %v1074, 14
        %v1110 = vpop.permute.xlu0 %1109
        %vm1111 = vcmask 113664
        %v1112 = vsel %vm1111, %v1088, %v1090
        %v1113 = vsel %vm1111, %v1090, %v1092
        %v1114 = vsel %vm1111, %v1094, %v1096
        %v1115 = vsel %vm1111, %v1096, %v1098
        %v1116 = vsel %vm1111, %v1100, %v1102
        %v1117 = vsel %vm1111, %v1102, %v1104
        %v1118 = vsel %vm1111, %v1106, %v1108
        %v1119 = vsel %vm1111, %v1108, %v1110
        %v1128 = vsel %vm676, %v1112, 0.0
        %v1129 = vsel %vm677, %v1113, 0.0
        %v1130 = vsel %vm676, %v1114, 0.0
        %v1131 = vsel %vm677, %v1115, 0.0
        %v1132 = vsel %vm676, %v1116, 0.0
        %v1133 = vsel %vm677, %v1117, 0.0
        %v1134 = vsel %vm676, %v1118, 0.0
        %v1135 = vsel %vm677, %v1119, 0.0
        %1136 = vst [vmem:[#allocation3 + $0x240] sm:$0xff] %v1128
        %1137 = vst [vmem:[#allocation3 + $0x248] sm:$0xff] %v1129
        %1138 = vst [vmem:[#allocation3 + $0x250] sm:$0xff] %v1130
        %1139 = vst [vmem:[#allocation3 + $0x258] sm:$0xff] %v1131
        %1140 = vst [vmem:[#allocation3 + $0x260] sm:$0xff] %v1132
        %1141 = vst [vmem:[#allocation3 + $0x268] sm:$0xff] %v1133
        %1142 = vst [vmem:[#allocation3 + $0x270] sm:$0xff] %v1134
        %1143 = vst [vmem:[#allocation3 + $0x278] sm:$0xff] %v1135
        %v1144 = vld [vmem:[#allocation2] sm:$0xff]
        %v1145 = vld [vmem:[#allocation2 + $0x8] sm:$0xff]
        %v1146 = vld [vmem:[#allocation2 + $0x10] sm:$0xff]
        %v1147 = vld [vmem:[#allocation2 + $0x20] sm:$0xff]
        %v1148 = vld [vmem:[#allocation2 + $0x28] sm:$0xff]
        %v1149 = vld [vmem:[#allocation2 + $0x30] sm:$0xff]
        %v1150 = vld [vmem:[#allocation2 + $0x40] sm:$0xff]
        %v1151 = vld [vmem:[#allocation2 + $0x48] sm:$0xff]
        %v1152 = vld [vmem:[#allocation2 + $0x50] sm:$0xff]
        %v1153 = vld [vmem:[#allocation2 + $0x60] sm:$0xff]
        %v1154 = vld [vmem:[#allocation2 + $0x68] sm:$0xff]
        %v1155 = vld [vmem:[#allocation2 + $0x70] sm:$0xff]
        %1168 = vrot.lane.b32.xlu0 %v1144, 2
        %v1169 = vpop.permute.xlu0 %1168
        %1170 = vrot.lane.b32.xlu0 %v1145, 2
        %v1171 = vpop.permute.xlu0 %1170
        %1172 = vrot.lane.b32.xlu0 %v1146, 2
        %v1173 = vpop.permute.xlu0 %1172
        %1174 = vrot.lane.b32.xlu0 %v1147, 2
        %v1175 = vpop.permute.xlu0 %1174
        %1176 = vrot.lane.b32.xlu0 %v1148, 2
        %v1177 = vpop.permute.xlu0 %1176
        %1178 = vrot.lane.b32.xlu0 %v1149, 2
        %v1179 = vpop.permute.xlu0 %1178
        %1180 = vrot.lane.b32.xlu0 %v1150, 2
        %v1181 = vpop.permute.xlu0 %1180
        %1182 = vrot.lane.b32.xlu0 %v1151, 2
        %v1183 = vpop.permute.xlu0 %1182
        %1184 = vrot.lane.b32.xlu0 %v1152, 2
        %v1185 = vpop.permute.xlu0 %1184
        %1186 = vrot.lane.b32.xlu0 %v1153, 2
        %v1187 = vpop.permute.xlu0 %1186
        %1188 = vrot.lane.b32.xlu0 %v1154, 2
        %v1189 = vpop.permute.xlu0 %1188
        %1190 = vrot.lane.b32.xlu0 %v1155, 2
        %v1191 = vpop.permute.xlu0 %1190
        %vm1192 = vcmask 15360
        %v1193 = vsel %vm1192, %v1169, %v1171
        %v1194 = vsel %vm1192, %v1171, %v1173
        %v1195 = vsel %vm1192, %v1175, %v1177
        %v1196 = vsel %vm1192, %v1177, %v1179
        %v1197 = vsel %vm1192, %v1181, %v1183
        %v1198 = vsel %vm1192, %v1183, %v1185
        %v1199 = vsel %vm1192, %v1187, %v1189
        %v1200 = vsel %vm1192, %v1189, %v1191
        %v1209 = vsel %vm325, %v1193, 0.0
        %v1210 = vsel %vm326, %v1194, 0.0
        %v1211 = vsel %vm325, %v1195, 0.0
        %v1212 = vsel %vm326, %v1196, 0.0
        %v1213 = vsel %vm325, %v1197, 0.0
        %v1214 = vsel %vm326, %v1198, 0.0
        %v1215 = vsel %vm325, %v1199, 0.0
        %v1216 = vsel %vm326, %v1200, 0.0
        %1217 = vst [vmem:[#allocation3 + $0x280] sm:$0xff] %v1209
        %1218 = vst [vmem:[#allocation3 + $0x288] sm:$0xff] %v1210
        %1219 = vst [vmem:[#allocation3 + $0x290] sm:$0xff] %v1211
        %1220 = vst [vmem:[#allocation3 + $0x298] sm:$0xff] %v1212
        %1221 = vst [vmem:[#allocation3 + $0x2a0] sm:$0xff] %v1213
        %1222 = vst [vmem:[#allocation3 + $0x2a8] sm:$0xff] %v1214
        %1223 = vst [vmem:[#allocation3 + $0x2b0] sm:$0xff] %v1215
        %1224 = vst [vmem:[#allocation3 + $0x2b8] sm:$0xff] %v1216
        %v1225 = vld [vmem:[#allocation2] sm:$0xff]
        %v1226 = vld [vmem:[#allocation2 + $0x8] sm:$0xff]
        %v1227 = vld [vmem:[#allocation2 + $0x10] sm:$0xff]
        %v1228 = vld [vmem:[#allocation2 + $0x20] sm:$0xff]
        %v1229 = vld [vmem:[#allocation2 + $0x28] sm:$0xff]
        %v1230 = vld [vmem:[#allocation2 + $0x30] sm:$0xff]
        %v1231 = vld [vmem:[#allocation2 + $0x40] sm:$0xff]
        %v1232 = vld [vmem:[#allocation2 + $0x48] sm:$0xff]
        %v1233 = vld [vmem:[#allocation2 + $0x50] sm:$0xff]
        %v1234 = vld [vmem:[#allocation2 + $0x60] sm:$0xff]
        %v1235 = vld [vmem:[#allocation2 + $0x68] sm:$0xff]
        %v1236 = vld [vmem:[#allocation2 + $0x70] sm:$0xff]
        %1249 = vrot.lane.b32.xlu0 %v1225, 1
        %v1250 = vpop.permute.xlu0 %1249
        %1251 = vrot.lane.b32.xlu0 %v1226, 1
        %v1252 = vpop.permute.xlu0 %1251
        %1253 = vrot.lane.b32.xlu0 %v1227, 1
        %v1254 = vpop.permute.xlu0 %1253
        %1255 = vrot.lane.b32.xlu0 %v1228, 1
        %v1256 = vpop.permute.xlu0 %1255
        %1257 = vrot.lane.b32.xlu0 %v1229, 1
        %v1258 = vpop.permute.xlu0 %1257
        %1259 = vrot.lane.b32.xlu0 %v1230, 1
        %v1260 = vpop.permute.xlu0 %1259
        %1261 = vrot.lane.b32.xlu0 %v1231, 1
        %v1262 = vpop.permute.xlu0 %1261
        %1263 = vrot.lane.b32.xlu0 %v1232, 1
        %v1264 = vpop.permute.xlu0 %1263
        %1265 = vrot.lane.b32.xlu0 %v1233, 1
        %v1266 = vpop.permute.xlu0 %1265
        %1267 = vrot.lane.b32.xlu0 %v1234, 1
        %v1268 = vpop.permute.xlu0 %1267
        %1269 = vrot.lane.b32.xlu0 %v1235, 1
        %v1270 = vpop.permute.xlu0 %1269
        %1271 = vrot.lane.b32.xlu0 %v1236, 1
        %v1272 = vpop.permute.xlu0 %1271
        %vm1273 = vcmask 7168
        %v1274 = vsel %vm1273, %v1250, %v1252
        %v1275 = vsel %vm1273, %v1252, %v1254
        %v1276 = vsel %vm1273, %v1256, %v1258
        %v1277 = vsel %vm1273, %v1258, %v1260
        %v1278 = vsel %vm1273, %v1262, %v1264
        %v1279 = vsel %vm1273, %v1264, %v1266
        %v1280 = vsel %vm1273, %v1268, %v1270
        %v1281 = vsel %vm1273, %v1270, %v1272
        %v1290 = vsel %vm417, %v1274, 0.0
        %v1291 = vsel %vm418, %v1275, 0.0
        %v1292 = vsel %vm417, %v1276, 0.0
        %v1293 = vsel %vm418, %v1277, 0.0
        %v1294 = vsel %vm417, %v1278, 0.0
        %v1295 = vsel %vm418, %v1279, 0.0
        %v1296 = vsel %vm417, %v1280, 0.0
        %v1297 = vsel %vm418, %v1281, 0.0
        %1298 = vst [vmem:[#allocation3 + $0x2c0] sm:$0xff] %v1290
        %1299 = vst [vmem:[#allocation3 + $0x2c8] sm:$0xff] %v1291
        %1300 = vst [vmem:[#allocation3 + $0x2d0] sm:$0xff] %v1292
        %1301 = vst [vmem:[#allocation3 + $0x2d8] sm:$0xff] %v1293
        %1302 = vst [vmem:[#allocation3 + $0x2e0] sm:$0xff] %v1294
        %1303 = vst [vmem:[#allocation3 + $0x2e8] sm:$0xff] %v1295
        %1304 = vst [vmem:[#allocation3 + $0x2f0] sm:$0xff] %v1296
        %1305 = vst [vmem:[#allocation3 + $0x2f8] sm:$0xff] %v1297
        %v1306 = vld [vmem:[#allocation2 + $0x8] sm:$0xff]
        %v1307 = vld [vmem:[#allocation2 + $0x10] sm:$0xff]
        %v1308 = vld [vmem:[#allocation2 + $0x28] sm:$0xff]
        %v1309 = vld [vmem:[#allocation2 + $0x30] sm:$0xff]
        %v1310 = vld [vmem:[#allocation2 + $0x48] sm:$0xff]
        %v1311 = vld [vmem:[#allocation2 + $0x50] sm:$0xff]
        %v1312 = vld [vmem:[#allocation2 + $0x68] sm:$0xff]
        %v1313 = vld [vmem:[#allocation2 + $0x70] sm:$0xff]
        %1314 = vst [vmem:[#allocation3 + $0x300] sm:$0xff] %v1306
        %1315 = vst [vmem:[#allocation3 + $0x308] sm:$0xff] %v1307
        %1316 = vst [vmem:[#allocation3 + $0x310] sm:$0xff] %v1308
        %1317 = vst [vmem:[#allocation3 + $0x318] sm:$0xff] %v1309
        %1318 = vst [vmem:[#allocation3 + $0x320] sm:$0xff] %v1310
        %1319 = vst [vmem:[#allocation3 + $0x328] sm:$0xff] %v1311
        %1320 = vst [vmem:[#allocation3 + $0x330] sm:$0xff] %v1312
        %1321 = vst [vmem:[#allocation3 + $0x338] sm:$0xff] %v1313
        %v1322 = vld [vmem:[#allocation2 + $0x8] sm:$0xff]
        %v1323 = vld [vmem:[#allocation2 + $0x10] sm:$0xff]
        %v1324 = vld [vmem:[#allocation2 + $0x18] sm:$0xff]
        %v1325 = vld [vmem:[#allocation2 + $0x28] sm:$0xff]
        %v1326 = vld [vmem:[#allocation2 + $0x30] sm:$0xff]
        %v1327 = vld [vmem:[#allocation2 + $0x38] sm:$0xff]
        %v1328 = vld [vmem:[#allocation2 + $0x48] sm:$0xff]
        %v1329 = vld [vmem:[#allocation2 + $0x50] sm:$0xff]
        %v1330 = vld [vmem:[#allocation2 + $0x58] sm:$0xff]
        %v1331 = vld [vmem:[#allocation2 + $0x68] sm:$0xff]
        %v1332 = vld [vmem:[#allocation2 + $0x70] sm:$0xff]
        %v1333 = vld [vmem:[#allocation2 + $0x78] sm:$0xff]
        %1346 = vrot.lane.b32.xlu0 %v1322, 127
        %v1347 = vpop.permute.xlu0 %1346
        %1348 = vrot.lane.b32.xlu0 %v1323, 127
        %v1349 = vpop.permute.xlu0 %1348
        %1350 = vrot.lane.b32.xlu0 %v1324, 127
        %v1351 = vpop.permute.xlu0 %1350
        %1352 = vrot.lane.b32.xlu0 %v1325, 127
        %v1353 = vpop.permute.xlu0 %1352
        %1354 = vrot.lane.b32.xlu0 %v1326, 127
        %v1355 = vpop.permute.xlu0 %1354
        %1356 = vrot.lane.b32.xlu0 %v1327, 127
        %v1357 = vpop.permute.xlu0 %1356
        %1358 = vrot.lane.b32.xlu0 %v1328, 127
        %v1359 = vpop.permute.xlu0 %1358
        %1360 = vrot.lane.b32.xlu0 %v1329, 127
        %v1361 = vpop.permute.xlu0 %1360
        %1362 = vrot.lane.b32.xlu0 %v1330, 127
        %v1363 = vpop.permute.xlu0 %1362
        %1364 = vrot.lane.b32.xlu0 %v1331, 127
        %v1365 = vpop.permute.xlu0 %1364
        %1366 = vrot.lane.b32.xlu0 %v1332, 127
        %v1367 = vpop.permute.xlu0 %1366
        %1368 = vrot.lane.b32.xlu0 %v1333, 127
        %v1369 = vpop.permute.xlu0 %1368
        %vm1370 = vcmask 1039360
        %v1371 = vsel %vm1370, %v1347, %v1349
        %v1372 = vsel %vm1370, %v1349, %v1351
        %v1373 = vsel %vm1370, %v1353, %v1355
        %v1374 = vsel %vm1370, %v1355, %v1357
        %v1375 = vsel %vm1370, %v1359, %v1361
        %v1376 = vsel %vm1370, %v1361, %v1363
        %v1377 = vsel %vm1370, %v1365, %v1367
        %v1378 = vsel %vm1370, %v1367, %v1369
        %v1387 = vsel %vm583, %v1371, 0.0
        %v1388 = vsel %vm584, %v1372, 0.0
        %v1389 = vsel %vm583, %v1373, 0.0
        %v1390 = vsel %vm584, %v1374, 0.0
        %v1391 = vsel %vm583, %v1375, 0.0
        %v1392 = vsel %vm584, %v1376, 0.0
        %v1393 = vsel %vm583, %v1377, 0.0
        %v1394 = vsel %vm584, %v1378, 0.0
        %1395 = vst [vmem:[#allocation3 + $0x340] sm:$0xff] %v1387
        %1396 = vst [vmem:[#allocation3 + $0x348] sm:$0xff] %v1388
        %1397 = vst [vmem:[#allocation3 + $0x350] sm:$0xff] %v1389
        %1398 = vst [vmem:[#allocation3 + $0x358] sm:$0xff] %v1390
        %1399 = vst [vmem:[#allocation3 + $0x360] sm:$0xff] %v1391
        %1400 = vst [vmem:[#allocation3 + $0x368] sm:$0xff] %v1392
        %1401 = vst [vmem:[#allocation3 + $0x370] sm:$0xff] %v1393
        %1402 = vst [vmem:[#allocation3 + $0x378] sm:$0xff] %v1394
        %v1403 = vld [vmem:[#allocation2 + $0x8] sm:$0xff]
        %v1404 = vld [vmem:[#allocation2 + $0x10] sm:$0xff]
        %v1405 = vld [vmem:[#allocation2 + $0x18] sm:$0xff]
        %v1406 = vld [vmem:[#allocation2 + $0x28] sm:$0xff]
        %v1407 = vld [vmem:[#allocation2 + $0x30] sm:$0xff]
        %v1408 = vld [vmem:[#allocation2 + $0x38] sm:$0xff]
        %v1409 = vld [vmem:[#allocation2 + $0x48] sm:$0xff]
        %v1410 = vld [vmem:[#allocation2 + $0x50] sm:$0xff]
        %v1411 = vld [vmem:[#allocation2 + $0x58] sm:$0xff]
        %v1412 = vld [vmem:[#allocation2 + $0x68] sm:$0xff]
        %v1413 = vld [vmem:[#allocation2 + $0x70] sm:$0xff]
        %v1414 = vld [vmem:[#allocation2 + $0x78] sm:$0xff]
        %1427 = vrot.lane.b32.xlu0 %v1403, 126
        %v1428 = vpop.permute.xlu0 %1427
        %1429 = vrot.lane.b32.xlu0 %v1404, 126
        %v1430 = vpop.permute.xlu0 %1429
        %1431 = vrot.lane.b32.xlu0 %v1405, 126
        %v1432 = vpop.permute.xlu0 %1431
        %1433 = vrot.lane.b32.xlu0 %v1406, 126
        %v1434 = vpop.permute.xlu0 %1433
        %1435 = vrot.lane.b32.xlu0 %v1407, 126
        %v1436 = vpop.permute.xlu0 %1435
        %1437 = vrot.lane.b32.xlu0 %v1408, 126
        %v1438 = vpop.permute.xlu0 %1437
        %1439 = vrot.lane.b32.xlu0 %v1409, 126
        %v1440 = vpop.permute.xlu0 %1439
        %1441 = vrot.lane.b32.xlu0 %v1410, 126
        %v1442 = vpop.permute.xlu0 %1441
        %1443 = vrot.lane.b32.xlu0 %v1411, 126
        %v1444 = vpop.permute.xlu0 %1443
        %1445 = vrot.lane.b32.xlu0 %v1412, 126
        %v1446 = vpop.permute.xlu0 %1445
        %1447 = vrot.lane.b32.xlu0 %v1413, 126
        %v1448 = vpop.permute.xlu0 %1447
        %1449 = vrot.lane.b32.xlu0 %v1414, 126
        %v1450 = vpop.permute.xlu0 %1449
        %vm1451 = vcmask 1031168
        %v1452 = vsel %vm1451, %v1428, %v1430
        %v1453 = vsel %vm1451, %v1430, %v1432
        %v1454 = vsel %vm1451, %v1434, %v1436
        %v1455 = vsel %vm1451, %v1436, %v1438
        %v1456 = vsel %vm1451, %v1440, %v1442
        %v1457 = vsel %vm1451, %v1442, %v1444
        %v1458 = vsel %vm1451, %v1446, %v1448
        %v1459 = vsel %vm1451, %v1448, %v1450
        %v1468 = vsel %vm676, %v1452, 0.0
        %v1469 = vsel %vm677, %v1453, 0.0
        %v1470 = vsel %vm676, %v1454, 0.0
        %v1471 = vsel %vm677, %v1455, 0.0
        %v1472 = vsel %vm676, %v1456, 0.0
        %v1473 = vsel %vm677, %v1457, 0.0
        %v1474 = vsel %vm676, %v1458, 0.0
        %v1475 = vsel %vm677, %v1459, 0.0
        %1476 = vst [vmem:[#allocation3 + $0x380] sm:$0xff] %v1468
        %1477 = vst [vmem:[#allocation3 + $0x388] sm:$0xff] %v1469
        %1478 = vst [vmem:[#allocation3 + $0x390] sm:$0xff] %v1470
        %1479 = vst [vmem:[#allocation3 + $0x398] sm:$0xff] %v1471
        %1480 = vst [vmem:[#allocation3 + $0x3a0] sm:$0xff] %v1472
        %1481 = vst [vmem:[#allocation3 + $0x3a8] sm:$0xff] %v1473
        %1482 = vst [vmem:[#allocation3 + $0x3b0] sm:$0xff] %v1474
        %1483 = vst [vmem:[#allocation3 + $0x3b8] sm:$0xff] %v1475
        %v1484 = vld [vmem:[#allocation2 + $0x8] sm:$0xff]
        %v1485 = vld [vmem:[#allocation2 + $0x10] sm:$0xff]
        %v1486 = vld [vmem:[#allocation2 + $0x18] sm:$0xff]
        %v1487 = vld [vmem:[#allocation2 + $0x28] sm:$0xff]
        %v1488 = vld [vmem:[#allocation2 + $0x30] sm:$0xff]
        %v1489 = vld [vmem:[#allocation2 + $0x38] sm:$0xff]
        %v1490 = vld [vmem:[#allocation2 + $0x48] sm:$0xff]
        %v1491 = vld [vmem:[#allocation2 + $0x50] sm:$0xff]
        %v1492 = vld [vmem:[#allocation2 + $0x58] sm:$0xff]
        %v1493 = vld [vmem:[#allocation2 + $0x68] sm:$0xff]
        %v1494 = vld [vmem:[#allocation2 + $0x70] sm:$0xff]
        %v1495 = vld [vmem:[#allocation2 + $0x78] sm:$0xff]
        %1508 = vrot.lane.b32.xlu0 %v1484, 114
        %v1509 = vpop.permute.xlu0 %1508
        %1510 = vrot.lane.b32.xlu0 %v1485, 114
        %v1511 = vpop.permute.xlu0 %1510
        %1512 = vrot.lane.b32.xlu0 %v1486, 114
        %v1513 = vpop.permute.xlu0 %1512
        %1514 = vrot.lane.b32.xlu0 %v1487, 114
        %v1515 = vpop.permute.xlu0 %1514
        %1516 = vrot.lane.b32.xlu0 %v1488, 114
        %v1517 = vpop.permute.xlu0 %1516
        %1518 = vrot.lane.b32.xlu0 %v1489, 114
        %v1519 = vpop.permute.xlu0 %1518
        %1520 = vrot.lane.b32.xlu0 %v1490, 114
        %v1521 = vpop.permute.xlu0 %1520
        %1522 = vrot.lane.b32.xlu0 %v1491, 114
        %v1523 = vpop.permute.xlu0 %1522
        %1524 = vrot.lane.b32.xlu0 %v1492, 114
        %v1525 = vpop.permute.xlu0 %1524
        %1526 = vrot.lane.b32.xlu0 %v1493, 114
        %v1527 = vpop.permute.xlu0 %1526
        %1528 = vrot.lane.b32.xlu0 %v1494, 114
        %v1529 = vpop.permute.xlu0 %1528
        %1530 = vrot.lane.b32.xlu0 %v1495, 114
        %v1531 = vpop.permute.xlu0 %1530
        %vm1532 = vcmask 932864
        %v1533 = vsel %vm1532, %v1509, %v1511
        %v1534 = vsel %vm1532, %v1511, %v1513
        %v1535 = vsel %vm1532, %v1515, %v1517
        %v1536 = vsel %vm1532, %v1517, %v1519
        %v1537 = vsel %vm1532, %v1521, %v1523
        %v1538 = vsel %vm1532, %v1523, %v1525
        %v1539 = vsel %vm1532, %v1527, %v1529
        %v1540 = vsel %vm1532, %v1529, %v1531
        %v1549 = vsel %vm325, %v1533, 0.0
        %v1550 = vsel %vm326, %v1534, 0.0
        %v1551 = vsel %vm325, %v1535, 0.0
        %v1552 = vsel %vm326, %v1536, 0.0
        %v1553 = vsel %vm325, %v1537, 0.0
        %v1554 = vsel %vm326, %v1538, 0.0
        %v1555 = vsel %vm325, %v1539, 0.0
        %v1556 = vsel %vm326, %v1540, 0.0
        %1557 = vst [vmem:[#allocation3 + $0x3c0] sm:$0xff] %v1549
        %1558 = vst [vmem:[#allocation3 + $0x3c8] sm:$0xff] %v1550
        %1559 = vst [vmem:[#allocation3 + $0x3d0] sm:$0xff] %v1551
        %1560 = vst [vmem:[#allocation3 + $0x3d8] sm:$0xff] %v1552
        %1561 = vst [vmem:[#allocation3 + $0x3e0] sm:$0xff] %v1553
        %1562 = vst [vmem:[#allocation3 + $0x3e8] sm:$0xff] %v1554
        %1563 = vst [vmem:[#allocation3 + $0x3f0] sm:$0xff] %v1555
        %1564 = vst [vmem:[#allocation3 + $0x3f8] sm:$0xff] %v1556
        %v1565 = vld [vmem:[#allocation2 + $0x8] sm:$0xff]
        %v1566 = vld [vmem:[#allocation2 + $0x10] sm:$0xff]
        %v1567 = vld [vmem:[#allocation2 + $0x18] sm:$0xff]
        %v1568 = vld [vmem:[#allocation2 + $0x28] sm:$0xff]
        %v1569 = vld [vmem:[#allocation2 + $0x30] sm:$0xff]
        %v1570 = vld [vmem:[#allocation2 + $0x38] sm:$0xff]
        %v1571 = vld [vmem:[#allocation2 + $0x48] sm:$0xff]
        %v1572 = vld [vmem:[#allocation2 + $0x50] sm:$0xff]
        %v1573 = vld [vmem:[#allocation2 + $0x58] sm:$0xff]
        %v1574 = vld [vmem:[#allocation2 + $0x68] sm:$0xff]
        %v1575 = vld [vmem:[#allocation2 + $0x70] sm:$0xff]
        %v1576 = vld [vmem:[#allocation2 + $0x78] sm:$0xff]
        %1589 = vrot.lane.b32.xlu0 %v1565, 113
        %v1590 = vpop.permute.xlu0 %1589
        %1591 = vrot.lane.b32.xlu0 %v1566, 113
        %v1592 = vpop.permute.xlu0 %1591
        %1593 = vrot.lane.b32.xlu0 %v1567, 113
        %v1594 = vpop.permute.xlu0 %1593
        %1595 = vrot.lane.b32.xlu0 %v1568, 113
        %v1596 = vpop.permute.xlu0 %1595
        %1597 = vrot.lane.b32.xlu0 %v1569, 113
        %v1598 = vpop.permute.xlu0 %1597
        %1599 = vrot.lane.b32.xlu0 %v1570, 113
        %v1600 = vpop.permute.xlu0 %1599
        %1601 = vrot.lane.b32.xlu0 %v1571, 113
        %v1602 = vpop.permute.xlu0 %1601
        %1603 = vrot.lane.b32.xlu0 %v1572, 113
        %v1604 = vpop.permute.xlu0 %1603
        %1605 = vrot.lane.b32.xlu0 %v1573, 113
        %v1606 = vpop.permute.xlu0 %1605
        %1607 = vrot.lane.b32.xlu0 %v1574, 113
        %v1608 = vpop.permute.xlu0 %1607
        %1609 = vrot.lane.b32.xlu0 %v1575, 113
        %v1610 = vpop.permute.xlu0 %1609
        %1611 = vrot.lane.b32.xlu0 %v1576, 113
        %v1612 = vpop.permute.xlu0 %1611
        %vm1613 = vcmask 924672
        %v1614 = vsel %vm1613, %v1590, %v1592
        %v1615 = vsel %vm1613, %v1592, %v1594
        %v1616 = vsel %vm1613, %v1596, %v1598
        %v1617 = vsel %vm1613, %v1598, %v1600
        %v1618 = vsel %vm1613, %v1602, %v1604
        %v1619 = vsel %vm1613, %v1604, %v1606
        %v1620 = vsel %vm1613, %v1608, %v1610
        %v1621 = vsel %vm1613, %v1610, %v1612
        %v1630 = vsel %vm417, %v1614, 0.0
        %v1631 = vsel %vm418, %v1615, 0.0
        %v1632 = vsel %vm417, %v1616, 0.0
        %v1633 = vsel %vm418, %v1617, 0.0
        %v1634 = vsel %vm417, %v1618, 0.0
        %v1635 = vsel %vm418, %v1619, 0.0
        %v1636 = vsel %vm417, %v1620, 0.0
        %v1637 = vsel %vm418, %v1621, 0.0
        %1638 = vst [vmem:[#allocation3 + $0x400] sm:$0xff] %v1630
        %1639 = vst [vmem:[#allocation3 + $0x408] sm:$0xff] %v1631
        %1640 = vst [vmem:[#allocation3 + $0x410] sm:$0xff] %v1632
        %1641 = vst [vmem:[#allocation3 + $0x418] sm:$0xff] %v1633
        %1642 = vst [vmem:[#allocation3 + $0x420] sm:$0xff] %v1634
        %1643 = vst [vmem:[#allocation3 + $0x428] sm:$0xff] %v1635
        %1644 = vst [vmem:[#allocation3 + $0x430] sm:$0xff] %v1636
        %1645 = vst [vmem:[#allocation3 + $0x438] sm:$0xff] %v1637
        %v1646 = vld [vmem:[#allocation2 + $0x8] sm:$0xff]
        %v1647 = vld [vmem:[#allocation2 + $0x10] sm:$0xff]
        %v1648 = vld [vmem:[#allocation2 + $0x18] sm:$0xff]
        %v1649 = vld [vmem:[#allocation2 + $0x28] sm:$0xff]
        %v1650 = vld [vmem:[#allocation2 + $0x30] sm:$0xff]
        %v1651 = vld [vmem:[#allocation2 + $0x38] sm:$0xff]
        %v1652 = vld [vmem:[#allocation2 + $0x48] sm:$0xff]
        %v1653 = vld [vmem:[#allocation2 + $0x50] sm:$0xff]
        %v1654 = vld [vmem:[#allocation2 + $0x58] sm:$0xff]
        %v1655 = vld [vmem:[#allocation2 + $0x68] sm:$0xff]
        %v1656 = vld [vmem:[#allocation2 + $0x70] sm:$0xff]
        %v1657 = vld [vmem:[#allocation2 + $0x78] sm:$0xff]
        %1670 = vrot.lane.b32.xlu0 %v1646, 112
        %v1671 = vpop.permute.xlu0 %1670
        %1672 = vrot.lane.b32.xlu0 %v1647, 112
        %v1673 = vpop.permute.xlu0 %1672
        %1674 = vrot.lane.b32.xlu0 %v1648, 112
        %v1675 = vpop.permute.xlu0 %1674
        %1676 = vrot.lane.b32.xlu0 %v1649, 112
        %v1677 = vpop.permute.xlu0 %1676
        %1678 = vrot.lane.b32.xlu0 %v1650, 112
        %v1679 = vpop.permute.xlu0 %1678
        %1680 = vrot.lane.b32.xlu0 %v1651, 112
        %v1681 = vpop.permute.xlu0 %1680
        %1682 = vrot.lane.b32.xlu0 %v1652, 112
        %v1683 = vpop.permute.xlu0 %1682
        %1684 = vrot.lane.b32.xlu0 %v1653, 112
        %v1685 = vpop.permute.xlu0 %1684
        %1686 = vrot.lane.b32.xlu0 %v1654, 112
        %v1687 = vpop.permute.xlu0 %1686
        %1688 = vrot.lane.b32.xlu0 %v1655, 112
        %v1689 = vpop.permute.xlu0 %1688
        %1690 = vrot.lane.b32.xlu0 %v1656, 112
        %v1691 = vpop.permute.xlu0 %1690
        %1692 = vrot.lane.b32.xlu0 %v1657, 112
        %v1693 = vpop.permute.xlu0 %1692
        %vm1694 = vcmask 916480
        %v1695 = vsel %vm1694, %v1671, %v1673
        %v1696 = vsel %vm1694, %v1673, %v1675
        %v1697 = vsel %vm1694, %v1677, %v1679
        %v1698 = vsel %vm1694, %v1679, %v1681
        %v1699 = vsel %vm1694, %v1683, %v1685
        %v1700 = vsel %vm1694, %v1685, %v1687
        %v1701 = vsel %vm1694, %v1689, %v1691
        %v1702 = vsel %vm1694, %v1691, %v1693
        %1711 = vst [vmem:[#allocation3 + $0x440] sm:$0xff] %v1695
        %1712 = vst [vmem:[#allocation3 + $0x448] sm:$0xff] %v1696
        %1713 = vst [vmem:[#allocation3 + $0x450] sm:$0xff] %v1697
        %1714 = vst [vmem:[#allocation3 + $0x458] sm:$0xff] %v1698
        %1715 = vst [vmem:[#allocation3 + $0x460] sm:$0xff] %v1699
        %1716 = vst [vmem:[#allocation3 + $0x468] sm:$0xff] %v1700
        %1717 = vst [vmem:[#allocation3 + $0x470] sm:$0xff] %v1701
        %1718 = vst [vmem:[#allocation3 + $0x478] sm:$0xff] %v1702
        %v1719 = vld [vmem:[#allocation2 + $0x8] sm:$0xff]
        %v1720 = vld [vmem:[#allocation2 + $0x10] sm:$0xff]
        %v1721 = vld [vmem:[#allocation2 + $0x18] sm:$0xff]
        %v1722 = vld [vmem:[#allocation2 + $0x28] sm:$0xff]
        %v1723 = vld [vmem:[#allocation2 + $0x30] sm:$0xff]
        %v1724 = vld [vmem:[#allocation2 + $0x38] sm:$0xff]
        %v1725 = vld [vmem:[#allocation2 + $0x48] sm:$0xff]
        %v1726 = vld [vmem:[#allocation2 + $0x50] sm:$0xff]
        %v1727 = vld [vmem:[#allocation2 + $0x58] sm:$0xff]
        %v1728 = vld [vmem:[#allocation2 + $0x68] sm:$0xff]
        %v1729 = vld [vmem:[#allocation2 + $0x70] sm:$0xff]
        %v1730 = vld [vmem:[#allocation2 + $0x78] sm:$0xff]
        %1743 = vrot.lane.b32.xlu0 %v1719, 111
        %v1744 = vpop.permute.xlu0 %1743
        %1745 = vrot.lane.b32.xlu0 %v1720, 111
        %v1746 = vpop.permute.xlu0 %1745
        %1747 = vrot.lane.b32.xlu0 %v1721, 111
        %v1748 = vpop.permute.xlu0 %1747
        %1749 = vrot.lane.b32.xlu0 %v1722, 111
        %v1750 = vpop.permute.xlu0 %1749
        %1751 = vrot.lane.b32.xlu0 %v1723, 111
        %v1752 = vpop.permute.xlu0 %1751
        %1753 = vrot.lane.b32.xlu0 %v1724, 111
        %v1754 = vpop.permute.xlu0 %1753
        %1755 = vrot.lane.b32.xlu0 %v1725, 111
        %v1756 = vpop.permute.xlu0 %1755
        %1757 = vrot.lane.b32.xlu0 %v1726, 111
        %v1758 = vpop.permute.xlu0 %1757
        %1759 = vrot.lane.b32.xlu0 %v1727, 111
        %v1760 = vpop.permute.xlu0 %1759
        %1761 = vrot.lane.b32.xlu0 %v1728, 111
        %v1762 = vpop.permute.xlu0 %1761
        %1763 = vrot.lane.b32.xlu0 %v1729, 111
        %v1764 = vpop.permute.xlu0 %1763
        %1765 = vrot.lane.b32.xlu0 %v1730, 111
        %v1766 = vpop.permute.xlu0 %1765
        %vm1767 = vcmask 908288
        %v1768 = vsel %vm1767, %v1744, %v1746
        %v1769 = vsel %vm1767, %v1746, %v1748
        %v1770 = vsel %vm1767, %v1750, %v1752
        %v1771 = vsel %vm1767, %v1752, %v1754
        %v1772 = vsel %vm1767, %v1756, %v1758
        %v1773 = vsel %vm1767, %v1758, %v1760
        %v1774 = vsel %vm1767, %v1762, %v1764
        %v1775 = vsel %vm1767, %v1764, %v1766
        %v1784 = vsel %vm583, %v1768, 0.0
        %v1785 = vsel %vm584, %v1769, 0.0
        %v1786 = vsel %vm583, %v1770, 0.0
        %v1787 = vsel %vm584, %v1771, 0.0
        %v1788 = vsel %vm583, %v1772, 0.0
        %v1789 = vsel %vm584, %v1773, 0.0
        %v1790 = vsel %vm583, %v1774, 0.0
        %v1791 = vsel %vm584, %v1775, 0.0
        %1792 = vst [vmem:[#allocation3 + $0x480] sm:$0xff] %v1784
        %1793 = vst [vmem:[#allocation3 + $0x488] sm:$0xff] %v1785
        %1794 = vst [vmem:[#allocation3 + $0x490] sm:$0xff] %v1786
        %1795 = vst [vmem:[#allocation3 + $0x498] sm:$0xff] %v1787
        %1796 = vst [vmem:[#allocation3 + $0x4a0] sm:$0xff] %v1788
        %1797 = vst [vmem:[#allocation3 + $0x4a8] sm:$0xff] %v1789
        %1798 = vst [vmem:[#allocation3 + $0x4b0] sm:$0xff] %v1790
        %1799 = vst [vmem:[#allocation3 + $0x4b8] sm:$0xff] %v1791
        %v1800 = vld [vmem:[#allocation2 + $0x8] sm:$0xff]
        %v1801 = vld [vmem:[#allocation2 + $0x10] sm:$0xff]
        %v1802 = vld [vmem:[#allocation2 + $0x18] sm:$0xff]
        %v1803 = vld [vmem:[#allocation2 + $0x28] sm:$0xff]
        %v1804 = vld [vmem:[#allocation2 + $0x30] sm:$0xff]
        %v1805 = vld [vmem:[#allocation2 + $0x38] sm:$0xff]
        %v1806 = vld [vmem:[#allocation2 + $0x48] sm:$0xff]
        %v1807 = vld [vmem:[#allocation2 + $0x50] sm:$0xff]
        %v1808 = vld [vmem:[#allocation2 + $0x58] sm:$0xff]
        %v1809 = vld [vmem:[#allocation2 + $0x68] sm:$0xff]
        %v1810 = vld [vmem:[#allocation2 + $0x70] sm:$0xff]
        %v1811 = vld [vmem:[#allocation2 + $0x78] sm:$0xff]
        %1824 = vrot.lane.b32.xlu0 %v1800, 110
        %v1825 = vpop.permute.xlu0 %1824
        %1826 = vrot.lane.b32.xlu0 %v1801, 110
        %v1827 = vpop.permute.xlu0 %1826
        %1828 = vrot.lane.b32.xlu0 %v1802, 110
        %v1829 = vpop.permute.xlu0 %1828
        %1830 = vrot.lane.b32.xlu0 %v1803, 110
        %v1831 = vpop.permute.xlu0 %1830
        %1832 = vrot.lane.b32.xlu0 %v1804, 110
        %v1833 = vpop.permute.xlu0 %1832
        %1834 = vrot.lane.b32.xlu0 %v1805, 110
        %v1835 = vpop.permute.xlu0 %1834
        %1836 = vrot.lane.b32.xlu0 %v1806, 110
        %v1837 = vpop.permute.xlu0 %1836
        %1838 = vrot.lane.b32.xlu0 %v1807, 110
        %v1839 = vpop.permute.xlu0 %1838
        %1840 = vrot.lane.b32.xlu0 %v1808, 110
        %v1841 = vpop.permute.xlu0 %1840
        %1842 = vrot.lane.b32.xlu0 %v1809, 110
        %v1843 = vpop.permute.xlu0 %1842
        %1844 = vrot.lane.b32.xlu0 %v1810, 110
        %v1845 = vpop.permute.xlu0 %1844
        %1846 = vrot.lane.b32.xlu0 %v1811, 110
        %v1847 = vpop.permute.xlu0 %1846
        %vm1848 = vcmask 900096
        %v1849 = vsel %vm1848, %v1825, %v1827
        %v1850 = vsel %vm1848, %v1827, %v1829
        %v1851 = vsel %vm1848, %v1831, %v1833
        %v1852 = vsel %vm1848, %v1833, %v1835
        %v1853 = vsel %vm1848, %v1837, %v1839
        %v1854 = vsel %vm1848, %v1839, %v1841
        %v1855 = vsel %vm1848, %v1843, %v1845
        %v1856 = vsel %vm1848, %v1845, %v1847
        %v1865 = vsel %vm676, %v1849, 0.0
        %v1866 = vsel %vm677, %v1850, 0.0
        %v1867 = vsel %vm676, %v1851, 0.0
        %v1868 = vsel %vm677, %v1852, 0.0
        %v1869 = vsel %vm676, %v1853, 0.0
        %v1870 = vsel %vm677, %v1854, 0.0
        %v1871 = vsel %vm676, %v1855, 0.0
        %v1872 = vsel %vm677, %v1856, 0.0
        %1873 = vst [vmem:[#allocation3 + $0x4c0] sm:$0xff] %v1865
        %1874 = vst [vmem:[#allocation3 + $0x4c8] sm:$0xff] %v1866
        %1875 = vst [vmem:[#allocation3 + $0x4d0] sm:$0xff] %v1867
        %1876 = vst [vmem:[#allocation3 + $0x4d8] sm:$0xff] %v1868
        %1877 = vst [vmem:[#allocation3 + $0x4e0] sm:$0xff] %v1869
        %1878 = vst [vmem:[#allocation3 + $0x4e8] sm:$0xff] %v1870
        %1879 = vst [vmem:[#allocation3 + $0x4f0] sm:$0xff] %v1871
        %1880 = vst [vmem:[#allocation3 + $0x4f8] sm:$0xff] %v1872
        %v1881 = vld [vmem:[#allocation2 + $0x8] sm:$0xff]
        %v1882 = vld [vmem:[#allocation2 + $0x10] sm:$0xff]
        %v1883 = vld [vmem:[#allocation2 + $0x18] sm:$0xff]
        %v1884 = vld [vmem:[#allocation2 + $0x28] sm:$0xff]
        %v1885 = vld [vmem:[#allocation2 + $0x30] sm:$0xff]
        %v1886 = vld [vmem:[#allocation2 + $0x38] sm:$0xff]
        %v1887 = vld [vmem:[#allocation2 + $0x48] sm:$0xff]
        %v1888 = vld [vmem:[#allocation2 + $0x50] sm:$0xff]
        %v1889 = vld [vmem:[#allocation2 + $0x58] sm:$0xff]
        %v1890 = vld [vmem:[#allocation2 + $0x68] sm:$0xff]
        %v1891 = vld [vmem:[#allocation2 + $0x70] sm:$0xff]
        %v1892 = vld [vmem:[#allocation2 + $0x78] sm:$0xff]
        %1905 = vrot.lane.b32.xlu0 %v1881, 98
        %v1906 = vpop.permute.xlu0 %1905
        %1907 = vrot.lane.b32.xlu0 %v1882, 98
        %v1908 = vpop.permute.xlu0 %1907
        %1909 = vrot.lane.b32.xlu0 %v1883, 98
        %v1910 = vpop.permute.xlu0 %1909
        %1911 = vrot.lane.b32.xlu0 %v1884, 98
        %v1912 = vpop.permute.xlu0 %1911
        %1913 = vrot.lane.b32.xlu0 %v1885, 98
        %v1914 = vpop.permute.xlu0 %1913
        %1915 = vrot.lane.b32.xlu0 %v1886, 98
        %v1916 = vpop.permute.xlu0 %1915
        %1917 = vrot.lane.b32.xlu0 %v1887, 98
        %v1918 = vpop.permute.xlu0 %1917
        %1919 = vrot.lane.b32.xlu0 %v1888, 98
        %v1920 = vpop.permute.xlu0 %1919
        %1921 = vrot.lane.b32.xlu0 %v1889, 98
        %v1922 = vpop.permute.xlu0 %1921
        %1923 = vrot.lane.b32.xlu0 %v1890, 98
        %v1924 = vpop.permute.xlu0 %1923
        %1925 = vrot.lane.b32.xlu0 %v1891, 98
        %v1926 = vpop.permute.xlu0 %1925
        %1927 = vrot.lane.b32.xlu0 %v1892, 98
        %v1928 = vpop.permute.xlu0 %1927
        %vm1929 = vcmask 801792
        %v1930 = vsel %vm1929, %v1906, %v1908
        %v1931 = vsel %vm1929, %v1908, %v1910
        %v1932 = vsel %vm1929, %v1912, %v1914
        %v1933 = vsel %vm1929, %v1914, %v1916
        %v1934 = vsel %vm1929, %v1918, %v1920
        %v1935 = vsel %vm1929, %v1920, %v1922
        %v1936 = vsel %vm1929, %v1924, %v1926
        %v1937 = vsel %vm1929, %v1926, %v1928
        %v1946 = vsel %vm325, %v1930, 0.0
        %v1947 = vsel %vm326, %v1931, 0.0
        %v1948 = vsel %vm325, %v1932, 0.0
        %v1949 = vsel %vm326, %v1933, 0.0
        %v1950 = vsel %vm325, %v1934, 0.0
        %v1951 = vsel %vm326, %v1935, 0.0
        %v1952 = vsel %vm325, %v1936, 0.0
        %v1953 = vsel %vm326, %v1937, 0.0
        %1954 = vst [vmem:[#allocation3 + $0x500] sm:$0xff] %v1946
        %1955 = vst [vmem:[#allocation3 + $0x508] sm:$0xff] %v1947
        %1956 = vst [vmem:[#allocation3 + $0x510] sm:$0xff] %v1948
        %1957 = vst [vmem:[#allocation3 + $0x518] sm:$0xff] %v1949
        %1958 = vst [vmem:[#allocation3 + $0x520] sm:$0xff] %v1950
        %1959 = vst [vmem:[#allocation3 + $0x528] sm:$0xff] %v1951
        %1960 = vst [vmem:[#allocation3 + $0x530] sm:$0xff] %v1952
        %1961 = vst [vmem:[#allocation3 + $0x538] sm:$0xff] %v1953
        %v1962 = vld [vmem:[#allocation2 + $0x8] sm:$0xff]
        %v1963 = vld [vmem:[#allocation2 + $0x10] sm:$0xff]
        %v1964 = vld [vmem:[#allocation2 + $0x18] sm:$0xff]
        %v1965 = vld [vmem:[#allocation2 + $0x28] sm:$0xff]
        %v1966 = vld [vmem:[#allocation2 + $0x30] sm:$0xff]
        %v1967 = vld [vmem:[#allocation2 + $0x38] sm:$0xff]
        %v1968 = vld [vmem:[#allocation2 + $0x48] sm:$0xff]
        %v1969 = vld [vmem:[#allocation2 + $0x50] sm:$0xff]
        %v1970 = vld [vmem:[#allocation2 + $0x58] sm:$0xff]
        %v1971 = vld [vmem:[#allocation2 + $0x68] sm:$0xff]
        %v1972 = vld [vmem:[#allocation2 + $0x70] sm:$0xff]
        %v1973 = vld [vmem:[#allocation2 + $0x78] sm:$0xff]
        %1986 = vrot.lane.b32.xlu0 %v1962, 97
        %v1987 = vpop.permute.xlu0 %1986
        %1988 = vrot.lane.b32.xlu0 %v1963, 97
        %v1989 = vpop.permute.xlu0 %1988
        %1990 = vrot.lane.b32.xlu0 %v1964, 97
        %v1991 = vpop.permute.xlu0 %1990
        %1992 = vrot.lane.b32.xlu0 %v1965, 97
        %v1993 = vpop.permute.xlu0 %1992
        %1994 = vrot.lane.b32.xlu0 %v1966, 97
        %v1995 = vpop.permute.xlu0 %1994
        %1996 = vrot.lane.b32.xlu0 %v1967, 97
        %v1997 = vpop.permute.xlu0 %1996
        %1998 = vrot.lane.b32.xlu0 %v1968, 97
        %v1999 = vpop.permute.xlu0 %1998
        %2000 = vrot.lane.b32.xlu0 %v1969, 97
        %v2001 = vpop.permute.xlu0 %2000
        %2002 = vrot.lane.b32.xlu0 %v1970, 97
        %v2003 = vpop.permute.xlu0 %2002
        %2004 = vrot.lane.b32.xlu0 %v1971, 97
        %v2005 = vpop.permute.xlu0 %2004
        %2006 = vrot.lane.b32.xlu0 %v1972, 97
        %v2007 = vpop.permute.xlu0 %2006
        %2008 = vrot.lane.b32.xlu0 %v1973, 97
        %v2009 = vpop.permute.xlu0 %2008
        %vm2010 = vcmask 793600
        %v2011 = vsel %vm2010, %v1987, %v1989
        %v2012 = vsel %vm2010, %v1989, %v1991
        %v2013 = vsel %vm2010, %v1993, %v1995
        %v2014 = vsel %vm2010, %v1995, %v1997
        %v2015 = vsel %vm2010, %v1999, %v2001
        %v2016 = vsel %vm2010, %v2001, %v2003
        %v2017 = vsel %vm2010, %v2005, %v2007
        %v2018 = vsel %vm2010, %v2007, %v2009
        %v2027 = vsel %vm417, %v2011, 0.0
        %v2028 = vsel %vm418, %v2012, 0.0
        %v2029 = vsel %vm417, %v2013, 0.0
        %v2030 = vsel %vm418, %v2014, 0.0
        %v2031 = vsel %vm417, %v2015, 0.0
        %v2032 = vsel %vm418, %v2016, 0.0
        %v2033 = vsel %vm417, %v2017, 0.0
        %v2034 = vsel %vm418, %v2018, 0.0
        %2035 = vst [vmem:[#allocation3 + $0x540] sm:$0xff] %v2027
        %2036 = vst [vmem:[#allocation3 + $0x548] sm:$0xff] %v2028
        %2037 = vst [vmem:[#allocation3 + $0x550] sm:$0xff] %v2029
        %2038 = vst [vmem:[#allocation3 + $0x558] sm:$0xff] %v2030
        %2039 = vst [vmem:[#allocation3 + $0x560] sm:$0xff] %v2031
        %2040 = vst [vmem:[#allocation3 + $0x568] sm:$0xff] %v2032
        %2041 = vst [vmem:[#allocation3 + $0x570] sm:$0xff] %v2033
        %2042 = vst [vmem:[#allocation3 + $0x578] sm:$0xff] %v2034
        %v2043 = vld [vmem:[#allocation2 + $0x8] sm:$0xff]
        %v2044 = vld [vmem:[#allocation2 + $0x10] sm:$0xff]
        %v2045 = vld [vmem:[#allocation2 + $0x18] sm:$0xff]
        %v2046 = vld [vmem:[#allocation2 + $0x28] sm:$0xff]
        %v2047 = vld [vmem:[#allocation2 + $0x30] sm:$0xff]
        %v2048 = vld [vmem:[#allocation2 + $0x38] sm:$0xff]
        %v2049 = vld [vmem:[#allocation2 + $0x48] sm:$0xff]
        %v2050 = vld [vmem:[#allocation2 + $0x50] sm:$0xff]
        %v2051 = vld [vmem:[#allocation2 + $0x58] sm:$0xff]
        %v2052 = vld [vmem:[#allocation2 + $0x68] sm:$0xff]
        %v2053 = vld [vmem:[#allocation2 + $0x70] sm:$0xff]
        %v2054 = vld [vmem:[#allocation2 + $0x78] sm:$0xff]
        %2067 = vrot.lane.b32.xlu0 %v2043, 96
        %v2068 = vpop.permute.xlu0 %2067
        %2069 = vrot.lane.b32.xlu0 %v2044, 96
        %v2070 = vpop.permute.xlu0 %2069
        %2071 = vrot.lane.b32.xlu0 %v2045, 96
        %v2072 = vpop.permute.xlu0 %2071
        %2073 = vrot.lane.b32.xlu0 %v2046, 96
        %v2074 = vpop.permute.xlu0 %2073
        %2075 = vrot.lane.b32.xlu0 %v2047, 96
        %v2076 = vpop.permute.xlu0 %2075
        %2077 = vrot.lane.b32.xlu0 %v2048, 96
        %v2078 = vpop.permute.xlu0 %2077
        %2079 = vrot.lane.b32.xlu0 %v2049, 96
        %v2080 = vpop.permute.xlu0 %2079
        %2081 = vrot.lane.b32.xlu0 %v2050, 96
        %v2082 = vpop.permute.xlu0 %2081
        %2083 = vrot.lane.b32.xlu0 %v2051, 96
        %v2084 = vpop.permute.xlu0 %2083
        %2085 = vrot.lane.b32.xlu0 %v2052, 96
        %v2086 = vpop.permute.xlu0 %2085
        %2087 = vrot.lane.b32.xlu0 %v2053, 96
        %v2088 = vpop.permute.xlu0 %2087
        %2089 = vrot.lane.b32.xlu0 %v2054, 96
        %v2090 = vpop.permute.xlu0 %2089
        %vm2091 = vcmask 785408
        %v2092 = vsel %vm2091, %v2068, %v2070
        %v2093 = vsel %vm2091, %v2070, %v2072
        %v2094 = vsel %vm2091, %v2074, %v2076
        %v2095 = vsel %vm2091, %v2076, %v2078
        %v2096 = vsel %vm2091, %v2080, %v2082
        %v2097 = vsel %vm2091, %v2082, %v2084
        %v2098 = vsel %vm2091, %v2086, %v2088
        %v2099 = vsel %vm2091, %v2088, %v2090
        %2108 = vst [vmem:[#allocation3 + $0x580] sm:$0xff] %v2092
        %2109 = vst [vmem:[#allocation3 + $0x588] sm:$0xff] %v2093
        %2110 = vst [vmem:[#allocation3 + $0x590] sm:$0xff] %v2094
        %2111 = vst [vmem:[#allocation3 + $0x598] sm:$0xff] %v2095
        %2112 = vst [vmem:[#allocation3 + $0x5a0] sm:$0xff] %v2096
        %2113 = vst [vmem:[#allocation3 + $0x5a8] sm:$0xff] %v2097
        %2114 = vst [vmem:[#allocation3 + $0x5b0] sm:$0xff] %v2098
        %2115 = vst [vmem:[#allocation3 + $0x5b8] sm:$0xff] %v2099
        %v2116 = vld [vmem:[#allocation2 + $0x8] sm:$0xff]
        %v2117 = vld [vmem:[#allocation2 + $0x10] sm:$0xff]
        %v2118 = vld [vmem:[#allocation2 + $0x18] sm:$0xff]
        %v2119 = vld [vmem:[#allocation2 + $0x28] sm:$0xff]
        %v2120 = vld [vmem:[#allocation2 + $0x30] sm:$0xff]
        %v2121 = vld [vmem:[#allocation2 + $0x38] sm:$0xff]
        %v2122 = vld [vmem:[#allocation2 + $0x48] sm:$0xff]
        %v2123 = vld [vmem:[#allocation2 + $0x50] sm:$0xff]
        %v2124 = vld [vmem:[#allocation2 + $0x58] sm:$0xff]
        %v2125 = vld [vmem:[#allocation2 + $0x68] sm:$0xff]
        %v2126 = vld [vmem:[#allocation2 + $0x70] sm:$0xff]
        %v2127 = vld [vmem:[#allocation2 + $0x78] sm:$0xff]
        %2140 = vrot.lane.b32.xlu0 %v2116, 95
        %v2141 = vpop.permute.xlu0 %2140
        %2142 = vrot.lane.b32.xlu0 %v2117, 95
        %v2143 = vpop.permute.xlu0 %2142
        %2144 = vrot.lane.b32.xlu0 %v2118, 95
        %v2145 = vpop.permute.xlu0 %2144
        %2146 = vrot.lane.b32.xlu0 %v2119, 95
        %v2147 = vpop.permute.xlu0 %2146
        %2148 = vrot.lane.b32.xlu0 %v2120, 95
        %v2149 = vpop.permute.xlu0 %2148
        %2150 = vrot.lane.b32.xlu0 %v2121, 95
        %v2151 = vpop.permute.xlu0 %2150
        %2152 = vrot.lane.b32.xlu0 %v2122, 95
        %v2153 = vpop.permute.xlu0 %2152
        %2154 = vrot.lane.b32.xlu0 %v2123, 95
        %v2155 = vpop.permute.xlu0 %2154
        %2156 = vrot.lane.b32.xlu0 %v2124, 95
        %v2157 = vpop.permute.xlu0 %2156
        %2158 = vrot.lane.b32.xlu0 %v2125, 95
        %v2159 = vpop.permute.xlu0 %2158
        %2160 = vrot.lane.b32.xlu0 %v2126, 95
        %v2161 = vpop.permute.xlu0 %2160
        %2162 = vrot.lane.b32.xlu0 %v2127, 95
        %v2163 = vpop.permute.xlu0 %2162
        %vm2164 = vcmask 777216
        %v2165 = vsel %vm2164, %v2141, %v2143
        %v2166 = vsel %vm2164, %v2143, %v2145
        %v2167 = vsel %vm2164, %v2147, %v2149
        %v2168 = vsel %vm2164, %v2149, %v2151
        %v2169 = vsel %vm2164, %v2153, %v2155
        %v2170 = vsel %vm2164, %v2155, %v2157
        %v2171 = vsel %vm2164, %v2159, %v2161
        %v2172 = vsel %vm2164, %v2161, %v2163
        %v2181 = vsel %vm583, %v2165, 0.0
        %v2182 = vsel %vm584, %v2166, 0.0
        %v2183 = vsel %vm583, %v2167, 0.0
        %v2184 = vsel %vm584, %v2168, 0.0
        %v2185 = vsel %vm583, %v2169, 0.0
        %v2186 = vsel %vm584, %v2170, 0.0
        %v2187 = vsel %vm583, %v2171, 0.0
        %v2188 = vsel %vm584, %v2172, 0.0
        %2189 = vst [vmem:[#allocation3 + $0x5c0] sm:$0xff] %v2181
        %2190 = vst [vmem:[#allocation3 + $0x5c8] sm:$0xff] %v2182
        %2191 = vst [vmem:[#allocation3 + $0x5d0] sm:$0xff] %v2183
        %2192 = vst [vmem:[#allocation3 + $0x5d8] sm:$0xff] %v2184
        %2193 = vst [vmem:[#allocation3 + $0x5e0] sm:$0xff] %v2185
        %2194 = vst [vmem:[#allocation3 + $0x5e8] sm:$0xff] %v2186
        %2195 = vst [vmem:[#allocation3 + $0x5f0] sm:$0xff] %v2187
        %2196 = vst [vmem:[#allocation3 + $0x5f8] sm:$0xff] %v2188
        %v2197 = vld [vmem:[#allocation2 + $0x8] sm:$0xff]
        %v2198 = vld [vmem:[#allocation2 + $0x10] sm:$0xff]
        %v2199 = vld [vmem:[#allocation2 + $0x18] sm:$0xff]
        %v2200 = vld [vmem:[#allocation2 + $0x28] sm:$0xff]
        %v2201 = vld [vmem:[#allocation2 + $0x30] sm:$0xff]
        %v2202 = vld [vmem:[#allocation2 + $0x38] sm:$0xff]
        %v2203 = vld [vmem:[#allocation2 + $0x48] sm:$0xff]
        %v2204 = vld [vmem:[#allocation2 + $0x50] sm:$0xff]
        %v2205 = vld [vmem:[#allocation2 + $0x58] sm:$0xff]
        %v2206 = vld [vmem:[#allocation2 + $0x68] sm:$0xff]
        %v2207 = vld [vmem:[#allocation2 + $0x70] sm:$0xff]
        %v2208 = vld [vmem:[#allocation2 + $0x78] sm:$0xff]
        %2221 = vrot.lane.b32.xlu0 %v2197, 94
        %v2222 = vpop.permute.xlu0 %2221
        %2223 = vrot.lane.b32.xlu0 %v2198, 94
        %v2224 = vpop.permute.xlu0 %2223
        %2225 = vrot.lane.b32.xlu0 %v2199, 94
        %v2226 = vpop.permute.xlu0 %2225
        %2227 = vrot.lane.b32.xlu0 %v2200, 94
        %v2228 = vpop.permute.xlu0 %2227
        %2229 = vrot.lane.b32.xlu0 %v2201, 94
        %v2230 = vpop.permute.xlu0 %2229
        %2231 = vrot.lane.b32.xlu0 %v2202, 94
        %v2232 = vpop.permute.xlu0 %2231
        %2233 = vrot.lane.b32.xlu0 %v2203, 94
        %v2234 = vpop.permute.xlu0 %2233
        %2235 = vrot.lane.b32.xlu0 %v2204, 94
        %v2236 = vpop.permute.xlu0 %2235
        %2237 = vrot.lane.b32.xlu0 %v2205, 94
        %v2238 = vpop.permute.xlu0 %2237
        %2239 = vrot.lane.b32.xlu0 %v2206, 94
        %v2240 = vpop.permute.xlu0 %2239
        %2241 = vrot.lane.b32.xlu0 %v2207, 94
        %v2242 = vpop.permute.xlu0 %2241
        %2243 = vrot.lane.b32.xlu0 %v2208, 94
        %v2244 = vpop.permute.xlu0 %2243
        %vm2245 = vcmask 769024
        %v2246 = vsel %vm2245, %v2222, %v2224
        %v2247 = vsel %vm2245, %v2224, %v2226
        %v2248 = vsel %vm2245, %v2228, %v2230
        %v2249 = vsel %vm2245, %v2230, %v2232
        %v2250 = vsel %vm2245, %v2234, %v2236
        %v2251 = vsel %vm2245, %v2236, %v2238
        %v2252 = vsel %vm2245, %v2240, %v2242
        %v2253 = vsel %vm2245, %v2242, %v2244
        %v2262 = vsel %vm676, %v2246, 0.0
        %v2263 = vsel %vm677, %v2247, 0.0
        %v2264 = vsel %vm676, %v2248, 0.0
        %v2265 = vsel %vm677, %v2249, 0.0
        %v2266 = vsel %vm676, %v2250, 0.0
        %v2267 = vsel %vm677, %v2251, 0.0
        %v2268 = vsel %vm676, %v2252, 0.0
        %v2269 = vsel %vm677, %v2253, 0.0
        %2270 = vst [vmem:[#allocation3 + $0x600] sm:$0xff] %v2262
        %2271 = vst [vmem:[#allocation3 + $0x608] sm:$0xff] %v2263
        %2272 = vst [vmem:[#allocation3 + $0x610] sm:$0xff] %v2264
        %2273 = vst [vmem:[#allocation3 + $0x618] sm:$0xff] %v2265
        %2274 = vst [vmem:[#allocation3 + $0x620] sm:$0xff] %v2266
        %2275 = vst [vmem:[#allocation3 + $0x628] sm:$0xff] %v2267
        %2276 = vst [vmem:[#allocation3 + $0x630] sm:$0xff] %v2268
        %2277 = vst [vmem:[#allocation3 + $0x638] sm:$0xff] %v2269
        %v2278 = vld [vmem:[%s1] sm:$0x3f]
        %v2279 = vld [vmem:[%s1 + $0x8] sm:$0x3f]
        %v2280 = vld [vmem:[%s1 + $0x10] sm:$0x3f]
        %v2281 = vld [vmem:[%s1 + $0x18] sm:$0x3f]
        %v2282 = vld [vmem:[%s1 + $0x20] sm:$0x3f]
        %v2283 = vld [vmem:[%s1 + $0x28] sm:$0x3f]
        %v2284 = vld [vmem:[%s1 + $0x30] sm:$0x3f]
        %v2285 = vld [vmem:[#allocation3] sm:$0xff]
        %v2286 = vld [vmem:[#allocation3 + $0x8] sm:$0xff]
        %v2287 = vld [vmem:[#allocation3 + $0x10] sm:$0xff]
        %v2288 = vld [vmem:[#allocation3 + $0x18] sm:$0xff]
        %v2289 = vld [vmem:[#allocation3 + $0x20] sm:$0xff]
        %v2290 = vld [vmem:[#allocation3 + $0x28] sm:$0xff]
        %v2291 = vld [vmem:[#allocation3 + $0x30] sm:$0xff]
        %v2292 = vld [vmem:[#allocation3 + $0x38] sm:$0xff]
        %v2293 = vld [vmem:[#allocation3 + $0x40] sm:$0xff]
        %v2294 = vld [vmem:[#allocation3 + $0x48] sm:$0xff]
        %v2295 = vld [vmem:[#allocation3 + $0x50] sm:$0xff]
        %v2296 = vld [vmem:[#allocation3 + $0x58] sm:$0xff]
        %v2297 = vld [vmem:[#allocation3 + $0x60] sm:$0xff]
        %v2298 = vld [vmem:[#allocation3 + $0x68] sm:$0xff]
        %v2299 = vld [vmem:[#allocation3 + $0x70] sm:$0xff]
        %v2300 = vld [vmem:[#allocation3 + $0x78] sm:$0xff]
        %v2301 = vld [vmem:[#allocation3 + $0x80] sm:$0xff]
        %v2302 = vld [vmem:[#allocation3 + $0x88] sm:$0xff]
        %v2303 = vld [vmem:[#allocation3 + $0x90] sm:$0xff]
        %v2304 = vld [vmem:[#allocation3 + $0x98] sm:$0xff]
        %v2305 = vld [vmem:[#allocation3 + $0xa0] sm:$0xff]
        %v2306 = vld [vmem:[#allocation3 + $0xa8] sm:$0xff]
        %v2307 = vld [vmem:[#allocation3 + $0xb0] sm:$0xff]
        %v2308 = vld [vmem:[#allocation3 + $0xb8] sm:$0xff]
        %v2309 = vld [vmem:[#allocation3 + $0xc0] sm:$0xff]
        %v2310 = vld [vmem:[#allocation3 + $0xc8] sm:$0xff]
        %v2311 = vld [vmem:[#allocation3 + $0xd0] sm:$0xff]
        %v2312 = vld [vmem:[#allocation3 + $0xd8] sm:$0xff]
        %v2313 = vld [vmem:[#allocation3 + $0xe0] sm:$0xff]
        %v2314 = vld [vmem:[#allocation3 + $0xe8] sm:$0xff]
        %v2315 = vld [vmem:[#allocation3 + $0xf0] sm:$0xff]
        %v2316 = vld [vmem:[#allocation3 + $0xf8] sm:$0xff]
        %v2317 = vld [vmem:[#allocation3 + $0x100] sm:$0xff]
        %v2318 = vld [vmem:[#allocation3 + $0x108] sm:$0xff]
        %v2319 = vld [vmem:[#allocation3 + $0x110] sm:$0xff]
        %v2320 = vld [vmem:[#allocation3 + $0x118] sm:$0xff]
        %v2321 = vld [vmem:[#allocation3 + $0x120] sm:$0xff]
        %v2322 = vld [vmem:[#allocation3 + $0x128] sm:$0xff]
        %v2323 = vld [vmem:[#allocation3 + $0x130] sm:$0xff]
        %v2324 = vld [vmem:[#allocation3 + $0x138] sm:$0xff]
        %v2325 = vld [vmem:[#allocation3 + $0x140] sm:$0xff]
        %v2326 = vld [vmem:[#allocation3 + $0x148] sm:$0xff]
        %v2327 = vld [vmem:[#allocation3 + $0x150] sm:$0xff]
        %v2328 = vld [vmem:[#allocation3 + $0x158] sm:$0xff]
        %v2329 = vld [vmem:[#allocation3 + $0x160] sm:$0xff]
        %v2330 = vld [vmem:[#allocation3 + $0x168] sm:$0xff]
        %v2331 = vld [vmem:[#allocation3 + $0x170] sm:$0xff]
        %v2332 = vld [vmem:[#allocation3 + $0x178] sm:$0xff]
        %v2333 = vld [vmem:[#allocation3 + $0x180] sm:$0xff]
        %v2334 = vld [vmem:[#allocation3 + $0x188] sm:$0xff]
        %v2335 = vld [vmem:[#allocation3 + $0x190] sm:$0xff]
        %v2336 = vld [vmem:[#allocation3 + $0x198] sm:$0xff]
        %v2337 = vld [vmem:[#allocation3 + $0x1a0] sm:$0xff]
        %v2338 = vld [vmem:[#allocation3 + $0x1a8] sm:$0xff]
        %v2339 = vld [vmem:[#allocation3 + $0x1b0] sm:$0xff]
        %v2340 = vld [vmem:[#allocation3 + $0x1b8] sm:$0xff]
        %v2341 = vld [vmem:[#allocation3 + $0x1c0] sm:$0xff]
        %v2342 = vld [vmem:[#allocation3 + $0x1c8] sm:$0xff]
        %v2343 = vld [vmem:[#allocation3 + $0x1d0] sm:$0xff]
        %v2344 = vld [vmem:[#allocation3 + $0x1d8] sm:$0xff]
        %v2345 = vld [vmem:[#allocation3 + $0x1e0] sm:$0xff]
        %v2346 = vld [vmem:[#allocation3 + $0x1e8] sm:$0xff]
        %v2347 = vld [vmem:[#allocation3 + $0x1f0] sm:$0xff]
        %v2348 = vld [vmem:[#allocation3 + $0x1f8] sm:$0xff]
        %v2349 = vld [vmem:[#allocation3 + $0x200] sm:$0xff]
        %v2350 = vld [vmem:[#allocation3 + $0x208] sm:$0xff]
        %v2351 = vld [vmem:[#allocation3 + $0x210] sm:$0xff]
        %v2352 = vld [vmem:[#allocation3 + $0x218] sm:$0xff]
        %v2353 = vld [vmem:[#allocation3 + $0x220] sm:$0xff]
        %v2354 = vld [vmem:[#allocation3 + $0x228] sm:$0xff]
        %v2355 = vld [vmem:[#allocation3 + $0x230] sm:$0xff]
        %v2356 = vld [vmem:[#allocation3 + $0x238] sm:$0xff]
        %v2357 = vld [vmem:[#allocation3 + $0x240] sm:$0xff]
        %v2358 = vld [vmem:[#allocation3 + $0x248] sm:$0xff]
        %v2359 = vld [vmem:[#allocation3 + $0x250] sm:$0xff]
        %v2360 = vld [vmem:[#allocation3 + $0x258] sm:$0xff]
        %v2361 = vld [vmem:[#allocation3 + $0x260] sm:$0xff]
        %v2362 = vld [vmem:[#allocation3 + $0x268] sm:$0xff]
        %v2363 = vld [vmem:[#allocation3 + $0x270] sm:$0xff]
        %v2364 = vld [vmem:[#allocation3 + $0x278] sm:$0xff]
        %v2365 = vld [vmem:[#allocation3 + $0x280] sm:$0xff]
        %v2366 = vld [vmem:[#allocation3 + $0x288] sm:$0xff]
        %v2367 = vld [vmem:[#allocation3 + $0x290] sm:$0xff]
        %v2368 = vld [vmem:[#allocation3 + $0x298] sm:$0xff]
        %v2369 = vld [vmem:[#allocation3 + $0x2a0] sm:$0xff]
        %v2370 = vld [vmem:[#allocation3 + $0x2a8] sm:$0xff]
        %v2371 = vld [vmem:[#allocation3 + $0x2b0] sm:$0xff]
        %v2372 = vld [vmem:[#allocation3 + $0x2b8] sm:$0xff]
        %v2373 = vld [vmem:[#allocation3 + $0x2c0] sm:$0xff]
        %v2374 = vld [vmem:[#allocation3 + $0x2c8] sm:$0xff]
        %v2375 = vld [vmem:[#allocation3 + $0x2d0] sm:$0xff]
        %v2376 = vld [vmem:[#allocation3 + $0x2d8] sm:$0xff]
        %v2377 = vld [vmem:[#allocation3 + $0x2e0] sm:$0xff]
        %v2378 = vld [vmem:[#allocation3 + $0x2e8] sm:$0xff]
        %v2379 = vld [vmem:[#allocation3 + $0x2f0] sm:$0xff]
        %v2380 = vld [vmem:[#allocation3 + $0x2f8] sm:$0xff]
        %v2381 = vld [vmem:[#allocation3 + $0x300] sm:$0xff]
        %v2382 = vld [vmem:[#allocation3 + $0x308] sm:$0xff]
        %v2383 = vld [vmem:[#allocation3 + $0x310] sm:$0xff]
        %v2384 = vld [vmem:[#allocation3 + $0x318] sm:$0xff]
        %v2385 = vld [vmem:[#allocation3 + $0x320] sm:$0xff]
        %v2386 = vld [vmem:[#allocation3 + $0x328] sm:$0xff]
        %v2387 = vld [vmem:[#allocation3 + $0x330] sm:$0xff]
        %v2388 = vld [vmem:[#allocation3 + $0x338] sm:$0xff]
        %v2389 = vld [vmem:[#allocation3 + $0x340] sm:$0xff]
        %v2390 = vld [vmem:[#allocation3 + $0x348] sm:$0xff]
        %v2391 = vld [vmem:[#allocation3 + $0x350] sm:$0xff]
        %v2392 = vld [vmem:[#allocation3 + $0x358] sm:$0xff]
        %v2393 = vld [vmem:[#allocation3 + $0x360] sm:$0xff]
        %v2394 = vld [vmem:[#allocation3 + $0x368] sm:$0xff]
        %v2395 = vld [vmem:[#allocation3 + $0x370] sm:$0xff]
        %v2396 = vld [vmem:[#allocation3 + $0x378] sm:$0xff]
        %v2397 = vld [vmem:[#allocation3 + $0x380] sm:$0xff]
        %v2398 = vld [vmem:[#allocation3 + $0x388] sm:$0xff]
        %v2399 = vld [vmem:[#allocation3 + $0x390] sm:$0xff]
        %v2400 = vld [vmem:[#allocation3 + $0x398] sm:$0xff]
        %v2401 = vld [vmem:[#allocation3 + $0x3a0] sm:$0xff]
        %v2402 = vld [vmem:[#allocation3 + $0x3a8] sm:$0xff]
        %v2403 = vld [vmem:[#allocation3 + $0x3b0] sm:$0xff]
        %v2404 = vld [vmem:[#allocation3 + $0x3b8] sm:$0xff]
        %v2405 = vld [vmem:[#allocation3 + $0x3c0] sm:$0xff]
        %v2406 = vld [vmem:[#allocation3 + $0x3c8] sm:$0xff]
        %v2407 = vld [vmem:[#allocation3 + $0x3d0] sm:$0xff]
        %v2408 = vld [vmem:[#allocation3 + $0x3d8] sm:$0xff]
        %v2409 = vld [vmem:[#allocation3 + $0x3e0] sm:$0xff]
        %v2410 = vld [vmem:[#allocation3 + $0x3e8] sm:$0xff]
        %v2411 = vld [vmem:[#allocation3 + $0x3f0] sm:$0xff]
        %v2412 = vld [vmem:[#allocation3 + $0x3f8] sm:$0xff]
        %v2413 = vld [vmem:[#allocation3 + $0x400] sm:$0xff]
        %v2414 = vld [vmem:[#allocation3 + $0x408] sm:$0xff]
        %v2415 = vld [vmem:[#allocation3 + $0x410] sm:$0xff]
        %v2416 = vld [vmem:[#allocation3 + $0x418] sm:$0xff]
        %v2417 = vld [vmem:[#allocation3 + $0x420] sm:$0xff]
        %v2418 = vld [vmem:[#allocation3 + $0x428] sm:$0xff]
        %v2419 = vld [vmem:[#allocation3 + $0x430] sm:$0xff]
        %v2420 = vld [vmem:[#allocation3 + $0x438] sm:$0xff]
        %v2421 = vld [vmem:[#allocation3 + $0x440] sm:$0xff]
        %v2422 = vld [vmem:[#allocation3 + $0x448] sm:$0xff]
        %v2423 = vld [vmem:[#allocation3 + $0x450] sm:$0xff]
        %v2424 = vld [vmem:[#allocation3 + $0x458] sm:$0xff]
        %v2425 = vld [vmem:[#allocation3 + $0x460] sm:$0xff]
        %v2426 = vld [vmem:[#allocation3 + $0x468] sm:$0xff]
        %v2427 = vld [vmem:[#allocation3 + $0x470] sm:$0xff]
        %v2428 = vld [vmem:[#allocation3 + $0x478] sm:$0xff]
        %v2429 = vld [vmem:[#allocation3 + $0x480] sm:$0xff]
        %v2430 = vld [vmem:[#allocation3 + $0x488] sm:$0xff]
        %v2431 = vld [vmem:[#allocation3 + $0x490] sm:$0xff]
        %v2432 = vld [vmem:[#allocation3 + $0x498] sm:$0xff]
        %v2433 = vld [vmem:[#allocation3 + $0x4a0] sm:$0xff]
        %v2434 = vld [vmem:[#allocation3 + $0x4a8] sm:$0xff]
        %v2435 = vld [vmem:[#allocation3 + $0x4b0] sm:$0xff]
        %v2436 = vld [vmem:[#allocation3 + $0x4b8] sm:$0xff]
        %v2437 = vld [vmem:[#allocation3 + $0x4c0] sm:$0xff]
        %v2438 = vld [vmem:[#allocation3 + $0x4c8] sm:$0xff]
        %v2439 = vld [vmem:[#allocation3 + $0x4d0] sm:$0xff]
        %v2440 = vld [vmem:[#allocation3 + $0x4d8] sm:$0xff]
        %v2441 = vld [vmem:[#allocation3 + $0x4e0] sm:$0xff]
        %v2442 = vld [vmem:[#allocation3 + $0x4e8] sm:$0xff]
        %v2443 = vld [vmem:[#allocation3 + $0x4f0] sm:$0xff]
        %v2444 = vld [vmem:[#allocation3 + $0x4f8] sm:$0xff]
        %v2445 = vld [vmem:[#allocation3 + $0x500] sm:$0xff]
        %v2446 = vld [vmem:[#allocation3 + $0x508] sm:$0xff]
        %v2447 = vld [vmem:[#allocation3 + $0x510] sm:$0xff]
        %v2448 = vld [vmem:[#allocation3 + $0x518] sm:$0xff]
        %v2449 = vld [vmem:[#allocation3 + $0x520] sm:$0xff]
        %v2450 = vld [vmem:[#allocation3 + $0x528] sm:$0xff]
        %v2451 = vld [vmem:[#allocation3 + $0x530] sm:$0xff]
        %v2452 = vld [vmem:[#allocation3 + $0x538] sm:$0xff]
        %v2453 = vld [vmem:[#allocation3 + $0x540] sm:$0xff]
        %v2454 = vld [vmem:[#allocation3 + $0x548] sm:$0xff]
        %v2455 = vld [vmem:[#allocation3 + $0x550] sm:$0xff]
        %v2456 = vld [vmem:[#allocation3 + $0x558] sm:$0xff]
        %v2457 = vld [vmem:[#allocation3 + $0x560] sm:$0xff]
        %v2458 = vld [vmem:[#allocation3 + $0x568] sm:$0xff]
        %v2459 = vld [vmem:[#allocation3 + $0x570] sm:$0xff]
        %v2460 = vld [vmem:[#allocation3 + $0x578] sm:$0xff]
        %v2461 = vld [vmem:[#allocation3 + $0x580] sm:$0xff]
        %v2462 = vld [vmem:[#allocation3 + $0x588] sm:$0xff]
        %v2463 = vld [vmem:[#allocation3 + $0x590] sm:$0xff]
        %v2464 = vld [vmem:[#allocation3 + $0x598] sm:$0xff]
        %v2465 = vld [vmem:[#allocation3 + $0x5a0] sm:$0xff]
        %v2466 = vld [vmem:[#allocation3 + $0x5a8] sm:$0xff]
        %v2467 = vld [vmem:[#allocation3 + $0x5b0] sm:$0xff]
        %v2468 = vld [vmem:[#allocation3 + $0x5b8] sm:$0xff]
        %v2469 = vld [vmem:[#allocation3 + $0x5c0] sm:$0xff]
        %v2470 = vld [vmem:[#allocation3 + $0x5c8] sm:$0xff]
        %v2471 = vld [vmem:[#allocation3 + $0x5d0] sm:$0xff]
        %v2472 = vld [vmem:[#allocation3 + $0x5d8] sm:$0xff]
        %v2473 = vld [vmem:[#allocation3 + $0x5e0] sm:$0xff]
        %v2474 = vld [vmem:[#allocation3 + $0x5e8] sm:$0xff]
        %v2475 = vld [vmem:[#allocation3 + $0x5f0] sm:$0xff]
        %v2476 = vld [vmem:[#allocation3 + $0x5f8] sm:$0xff]
        %v2477 = vld [vmem:[#allocation3 + $0x600] sm:$0xff]
        %v2478 = vld [vmem:[#allocation3 + $0x608] sm:$0xff]
        %v2479 = vld [vmem:[#allocation3 + $0x610] sm:$0xff]
        %v2480 = vld [vmem:[#allocation3 + $0x618] sm:$0xff]
        %v2481 = vld [vmem:[#allocation3 + $0x620] sm:$0xff]
        %v2482 = vld [vmem:[#allocation3 + $0x628] sm:$0xff]
        %v2483 = vld [vmem:[#allocation3 + $0x630] sm:$0xff]
        %v2484 = vld [vmem:[#allocation3 + $0x638] sm:$0xff]
        %v2485 = vld [vmem:[%s2] sm:$0x3f]
        %2487 = vset.pattern.permute.xlu0 0
        %2488 = vperm.xlu0 %2487, %v2485
        %v2489 = vpop.permute.xlu0 %2488
        %v2492 = vsel %vm536, %v2284, 0
        %2494 = vmatprep.subr.mxu0 %v2286
        %2495 = vmatpush1.msra.mxu0 %v2285
        %2496 = vmatprep.subr.mxu0 %v2288
        %2497 = vmatpush1.msra.mxu0 %v2287
        %2498 = vmatprep.subr.mxu0 %v2290
        %2499 = vmatpush1.msra.mxu0 %v2289
        %2500 = vmatprep.subr.mxu0 %v2292
        %2501 = vmatpush1.msra.mxu0 %v2291
        %2502 = vmatprep.subr.mxu0 %v2294
        %2503 = vmatpush1.msra.mxu0 %v2293
        %2504 = vmatprep.subr.mxu0 %v2296
        %2505 = vmatpush1.msra.mxu0 %v2295
        %2506 = vmatprep.subr.mxu0 %v2298
        %2507 = vmatpush1.msra.mxu0 %v2297
        %2508 = vmatprep.subr.mxu0 %v2300
        %2509 = vmatpush1.msra.mxu0 %v2299
        %2510 = vmatprep.subr.mxu0 %v2302
        %2511 = vmatpush1.msra.mxu0 %v2301
        %2512 = vmatprep.subr.mxu0 %v2304
        %2513 = vmatpush1.msra.mxu0 %v2303
        %2514 = vmatprep.subr.mxu0 %v2306
        %2515 = vmatpush1.msra.mxu0 %v2305
        %2516 = vmatprep.subr.mxu0 %v2308
        %2517 = vmatpush1.msra.mxu0 %v2307
        %2518 = vmatprep.subr.mxu0 %v2310
        %2519 = vmatpush1.msra.mxu0 %v2309
        %2520 = vmatprep.subr.mxu0 %v2312
        %2521 = vmatpush1.msra.mxu0 %v2311
        %2522 = vmatprep.subr.mxu0 %v2314
        %2523 = vmatpush1.msra.mxu0 %v2313
        %2524 = vmatprep.subr.mxu0 %v2316
        %2525 = vmatpush1.msra.mxu0 %v2315
        %2526 = vmatprep.subr.mxu0 %v2318
        %2527 = vmatpush1.msra.mxu0 %v2317
        %2528 = vmatprep.subr.mxu0 %v2320
        %2529 = vmatpush1.msra.mxu0 %v2319
        %2530 = vmatprep.subr.mxu0 %v2322
        %2531 = vmatpush1.msra.mxu0 %v2321
        %2532 = vmatprep.subr.mxu0 %v2324
        %2533 = vmatpush1.msra.mxu0 %v2323
        %2534 = vmatprep.subr.mxu0 %v2326
        %2535 = vmatpush1.msra.mxu0 %v2325
        %2536 = vmatprep.subr.mxu0 %v2328
        %2537 = vmatpush1.msra.mxu0 %v2327
        %2538 = vmatprep.subr.mxu0 %v2330
        %2539 = vmatpush1.msra.mxu0 %v2329
        %2540 = vmatprep.subr.mxu0 %v2332
        %2541 = vmatpush1.msra.mxu0 %v2331
        %2542 = vmatprep.subr.mxu0 %v2334
        %2543 = vmatpush1.msra.mxu0 %v2333
        %2544 = vmatprep.subr.mxu0 %v2336
        %2545 = vmatpush1.msra.mxu0 %v2335
        %2546 = vmatprep.subr.mxu0 %v2338
        %2547 = vmatpush1.msra.mxu0 %v2337
        %2548 = vmatprep.subr.mxu0 %v2340
        %2549 = vmatpush1.msra.mxu0 %v2339
        %2550 = vmatprep.subr.mxu0 %v2342
        %2551 = vmatpush1.msra.mxu0 %v2341
        %2552 = vmatprep.subr.mxu0 %v2344
        %2553 = vmatpush1.msra.mxu0 %v2343
        %2554 = vmatprep.subr.mxu0 %v2346
        %2555 = vmatpush1.msra.mxu0 %v2345
        %2556 = vmatprep.subr.mxu0 %v2348
        %2557 = vmatpush1.msra.mxu0 %v2347
        %2558 = vmatprep.mubr.f32.mxu0 %v2279
        %2559 = vmatmul.mubr.f32.gmra.mrb[0].mxu0 %v2278
        %v2560 = vpop.f32.mrb[0].mxu0
        %v2561 = vadd.f32 %v2489, %v2560
        %v2562 = vpop.f32.mrb[0].mxu0
        %v2563 = vadd.f32 %v2489, %v2562
        %2564 = vdwg.mxu0
        %2565 = vmatprep.subr.mxu0 %v2350
        %2566 = vmatpush1.msra.mxu0 %v2349
        %2567 = vmatprep.subr.mxu0 %v2352
        %2568 = vmatpush1.msra.mxu0 %v2351
        %2569 = vmatprep.subr.mxu0 %v2354
        %2570 = vmatpush1.msra.mxu0 %v2353
        %2571 = vmatprep.subr.mxu0 %v2356
        %2572 = vmatpush1.msra.mxu0 %v2355
        %2573 = vmatprep.subr.mxu0 %v2358
        %2574 = vmatpush1.msra.mxu0 %v2357
        %2575 = vmatprep.subr.mxu0 %v2360
        %2576 = vmatpush1.msra.mxu0 %v2359
        %2577 = vmatprep.subr.mxu0 %v2362
        %2578 = vmatpush1.msra.mxu0 %v2361
        %2579 = vmatprep.subr.mxu0 %v2364
        %2580 = vmatpush1.msra.mxu0 %v2363
        %2581 = vmatprep.subr.mxu0 %v2366
        %2582 = vmatpush1.msra.mxu0 %v2365
        %2583 = vmatprep.subr.mxu0 %v2368
        %2584 = vmatpush1.msra.mxu0 %v2367
        %2585 = vmatprep.subr.mxu0 %v2370
        %2586 = vmatpush1.msra.mxu0 %v2369
        %2587 = vmatprep.subr.mxu0 %v2372
        %2588 = vmatpush1.msra.mxu0 %v2371
        %2589 = vmatprep.subr.mxu0 %v2374
        %2590 = vmatpush1.msra.mxu0 %v2373
        %2591 = vmatprep.subr.mxu0 %v2376
        %2592 = vmatpush1.msra.mxu0 %v2375
        %2593 = vmatprep.subr.mxu0 %v2378
        %2594 = vmatpush1.msra.mxu0 %v2377
        %2595 = vmatprep.subr.mxu0 %v2380
        %2596 = vmatpush1.msra.mxu0 %v2379
        %2597 = vmatprep.subr.mxu0 %v2382
        %2598 = vmatpush1.msra.mxu0 %v2381
        %2599 = vmatprep.subr.mxu0 %v2384
        %2600 = vmatpush1.msra.mxu0 %v2383
        %2601 = vmatprep.subr.mxu0 %v2386
        %2602 = vmatpush1.msra.mxu0 %v2385
        %2603 = vmatprep.subr.mxu0 %v2388
        %2604 = vmatpush1.msra.mxu0 %v2387
        %2605 = vmatprep.subr.mxu0 %v2390
        %2606 = vmatpush1.msra.mxu0 %v2389
        %2607 = vmatprep.subr.mxu0 %v2392
        %2608 = vmatpush1.msra.mxu0 %v2391
        %2609 = vmatprep.subr.mxu0 %v2394
        %2610 = vmatpush1.msra.mxu0 %v2393
        %2611 = vmatprep.subr.mxu0 %v2396
        %2612 = vmatpush1.msra.mxu0 %v2395
        %2613 = vmatprep.subr.mxu0 %v2398
        %2614 = vmatpush1.msra.mxu0 %v2397
        %2615 = vmatprep.subr.mxu0 %v2400
        %2616 = vmatpush1.msra.mxu0 %v2399
        %2617 = vmatprep.subr.mxu0 %v2402
        %2618 = vmatpush1.msra.mxu0 %v2401
        %2619 = vmatprep.subr.mxu0 %v2404
        %2620 = vmatpush1.msra.mxu0 %v2403
        %2621 = vmatprep.subr.mxu0 %v2406
        %2622 = vmatpush1.msra.mxu0 %v2405
        %2623 = vmatprep.subr.mxu0 %v2408
        %2624 = vmatpush1.msra.mxu0 %v2407
        %2625 = vmatprep.subr.mxu0 %v2410
        %2626 = vmatpush1.msra.mxu0 %v2409
        %2627 = vmatprep.subr.mxu0 %v2412
        %2628 = vmatpush1.msra.mxu0 %v2411
        %2629 = vmatprep.mubr.f32.mxu0 %v2281
        %2630 = vmatmul.mubr.f32.gmra.mrb[0].mxu0 %v2280
        %v2631 = vpop.f32.mrb[0].mxu0
        %v2632 = vadd.f32 %v2561, %v2631
        %v2633 = vpop.f32.mrb[0].mxu0
        %v2634 = vadd.f32 %v2563, %v2633
        %2635 = vdwg.mxu0
        %2636 = vmatprep.subr.mxu0 %v2414
        %2637 = vmatpush1.msra.mxu0 %v2413
        %2638 = vmatprep.subr.mxu0 %v2416
        %2639 = vmatpush1.msra.mxu0 %v2415
        %2640 = vmatprep.subr.mxu0 %v2418
        %2641 = vmatpush1.msra.mxu0 %v2417
        %2642 = vmatprep.subr.mxu0 %v2420
        %2643 = vmatpush1.msra.mxu0 %v2419
        %2644 = vmatprep.subr.mxu0 %v2422
        %2645 = vmatpush1.msra.mxu0 %v2421
        %2646 = vmatprep.subr.mxu0 %v2424
        %2647 = vmatpush1.msra.mxu0 %v2423
        %2648 = vmatprep.subr.mxu0 %v2426
        %2649 = vmatpush1.msra.mxu0 %v2425
        %2650 = vmatprep.subr.mxu0 %v2428
        %2651 = vmatpush1.msra.mxu0 %v2427
        %2652 = vmatprep.subr.mxu0 %v2430
        %2653 = vmatpush1.msra.mxu0 %v2429
        %2654 = vmatprep.subr.mxu0 %v2432
        %2655 = vmatpush1.msra.mxu0 %v2431
        %2656 = vmatprep.subr.mxu0 %v2434
        %2657 = vmatpush1.msra.mxu0 %v2433
        %2658 = vmatprep.subr.mxu0 %v2436
        %2659 = vmatpush1.msra.mxu0 %v2435
        %2660 = vmatprep.subr.mxu0 %v2438
        %2661 = vmatpush1.msra.mxu0 %v2437
        %2662 = vmatprep.subr.mxu0 %v2440
        %2663 = vmatpush1.msra.mxu0 %v2439
        %2664 = vmatprep.subr.mxu0 %v2442
        %2665 = vmatpush1.msra.mxu0 %v2441
        %2666 = vmatprep.subr.mxu0 %v2444
        %2667 = vmatpush1.msra.mxu0 %v2443
        %2668 = vmatprep.subr.mxu0 %v2446
        %2669 = vmatpush1.msra.mxu0 %v2445
        %2670 = vmatprep.subr.mxu0 %v2448
        %2671 = vmatpush1.msra.mxu0 %v2447
        %2672 = vmatprep.subr.mxu0 %v2450
        %2673 = vmatpush1.msra.mxu0 %v2449
        %2674 = vmatprep.subr.mxu0 %v2452
        %2675 = vmatpush1.msra.mxu0 %v2451
        %2676 = vmatprep.subr.mxu0 %v2454
        %2677 = vmatpush1.msra.mxu0 %v2453
        %2678 = vmatprep.subr.mxu0 %v2456
        %2679 = vmatpush1.msra.mxu0 %v2455
        %2680 = vmatprep.subr.mxu0 %v2458
        %2681 = vmatpush1.msra.mxu0 %v2457
        %2682 = vmatprep.subr.mxu0 %v2460
        %2683 = vmatpush1.msra.mxu0 %v2459
        %2684 = vmatprep.subr.mxu0 %v2462
        %2685 = vmatpush1.msra.mxu0 %v2461
        %2686 = vmatprep.subr.mxu0 %v2464
        %2687 = vmatpush1.msra.mxu0 %v2463
        %2688 = vmatprep.subr.mxu0 %v2466
        %2689 = vmatpush1.msra.mxu0 %v2465
        %2690 = vmatprep.subr.mxu0 %v2468
        %2691 = vmatpush1.msra.mxu0 %v2467
        %2692 = vmatprep.subr.mxu0 %v2470
        %2693 = vmatpush1.msra.mxu0 %v2469
        %2694 = vmatprep.subr.mxu0 %v2472
        %2695 = vmatpush1.msra.mxu0 %v2471
        %2696 = vmatprep.subr.mxu0 %v2474
        %2697 = vmatpush1.msra.mxu0 %v2473
        %2698 = vmatprep.subr.mxu0 %v2476
        %2699 = vmatpush1.msra.mxu0 %v2475
        %2700 = vmatprep.mubr.f32.mxu0 %v2283
        %2701 = vmatmul.mubr.f32.gmra.mrb[0].mxu0 %v2282
        %v2702 = vpop.f32.mrb[0].mxu0
        %v2703 = vadd.f32 %v2632, %v2702
        %v2704 = vpop.f32.mrb[0].mxu0
        %v2705 = vadd.f32 %v2634, %v2704
        %2706 = vdwg.mxu0
        %2707 = vmatprep.subr.mxu0 %v2478
        %2708 = vmatpush1.msra.mxu0 %v2477
        %2709 = vmatprep.subr.mxu0 %v2480
        %2710 = vmatpush1.msra.mxu0 %v2479
        %2711 = vmatprep.subr.mxu0 %v2482
        %2712 = vmatpush1.msra.mxu0 %v2481
        %2713 = vmatprep.subr.mxu0 %v2484
        %2714 = vmatpush1.msra.mxu0 %v2483
        %2715 = vmatprep.subr.mxu0 0.0
        %2716 = vmatpush1.msra.mxu0 0.0
        %2717 = vmatprep.subr.mxu0 0.0
        %2718 = vmatpush1.msra.mxu0 0.0
        %2719 = vmatprep.subr.mxu0 0.0
        %2720 = vmatpush1.msra.mxu0 0.0
        %2721 = vmatprep.subr.mxu0 0.0
        %2722 = vmatpush1.msra.mxu0 0.0
        %2723 = vmatprep.subr.mxu0 0.0
        %2724 = vmatpush1.msra.mxu0 0.0
        %2725 = vmatprep.subr.mxu0 0.0
        %2726 = vmatpush1.msra.mxu0 0.0
        %2727 = vmatprep.subr.mxu0 0.0
        %2728 = vmatpush1.msra.mxu0 0.0
        %2729 = vmatprep.subr.mxu0 0.0
        %2730 = vmatpush1.msra.mxu0 0.0
        %2731 = vmatprep.subr.mxu0 0.0
        %2732 = vmatpush1.msra.mxu0 0.0
        %2733 = vmatprep.subr.mxu0 0.0
        %2734 = vmatpush1.msra.mxu0 0.0
        %2735 = vmatprep.subr.mxu0 0.0
        %2736 = vmatpush1.msra.mxu0 0.0
        %2737 = vmatprep.subr.mxu0 0.0
        %2738 = vmatpush1.msra.mxu0 0.0
        %2739 = vmatprep.subr.mxu0 0.0
        %2740 = vmatpush1.msra.mxu0 0.0
        %2741 = vmatprep.subr.mxu0 0.0
        %2742 = vmatpush1.msra.mxu0 0.0
        %2743 = vmatprep.subr.mxu0 0.0
        %2744 = vmatpush1.msra.mxu0 0.0
        %2745 = vmatprep.subr.mxu0 0.0
        %2746 = vmatpush1.msra.mxu0 0.0
        %2747 = vmatprep.subr.mxu0 0.0
        %2748 = vmatpush1.msra.mxu0 0.0
        %2749 = vmatprep.subr.mxu0 0.0
        %2750 = vmatpush1.msra.mxu0 0.0
        %2751 = vmatprep.subr.mxu0 0.0
        %2752 = vmatpush1.msra.mxu0 0.0
        %2753 = vmatprep.subr.mxu0 0.0
        %2754 = vmatpush1.msra.mxu0 0.0
        %2755 = vmatprep.subr.mxu0 0.0
        %2756 = vmatpush1.msra.mxu0 0.0
        %2757 = vmatprep.subr.mxu0 0.0
        %2758 = vmatpush1.msra.mxu0 0.0
        %2759 = vmatprep.subr.mxu0 0.0
        %2760 = vmatpush1.msra.mxu0 0.0
        %2761 = vmatprep.subr.mxu0 0.0
        %2762 = vmatpush1.msra.mxu0 0.0
        %2763 = vmatprep.subr.mxu0 0.0
        %2764 = vmatpush1.msra.mxu0 0.0
        %2765 = vmatprep.subr.mxu0 0.0
        %2766 = vmatpush1.msra.mxu0 0.0
        %2767 = vmatprep.subr.mxu0 0.0
        %2768 = vmatpush1.msra.mxu0 0.0
        %2769 = vmatprep.subr.mxu0 0.0
        %2770 = vmatpush1.msra.mxu0 0.0
        %2771 = vmatprep.mubr.f32.mxu0 0.0
        %2772 = vmatmul.mubr.f32.gmra.mrb[0].mxu0 %v2492
        %v2773 = vpop.f32.mrb[0].mxu0
        %v2774 = vadd.f32 %v2703, %v2773
        %v2775 = vpop.f32.mrb[0].mxu0
        %v2776 = vadd.f32 %v2705, %v2775
        %2777 = vdwg.mxu0
        %v2778 = vxor.u32 %v2774, 2147483648
        %v2779 = vxor.u32 %v2776, 2147483648
        %v2780 = vmul.f32 %v2778, 1.442695
        %v2781 = vpow.pop %v2780
        %v2782 = vmul.f32 %v2779, 1.442695
        %v2783 = vpow.pop %v2782
        %v2784 = vadd.f32 %v2781, 1.0
        %v2785 = vadd.f32 %v2783, 1.0
        %v2786 = vrcp.pop %v2784
        %v2787 = vmul.f32 1.0, %v2786
        %v2788 = vrcp.pop %v2785
        %v2789 = vmul.f32 1.0, %v2788
        %v2790 = vmul.f32 %v2774, %v2787
        %v2791 = vmul.f32 %v2776, %v2789
        %2792 = vst [vmem:[#allocation4] sm:$0x3f] %v2790
        %2793 = vst [vmem:[#allocation4 + $0x8] sm:$0x3f] %v2791
        %v2794 = vld [vmem:[#allocation4] sm:$0x3]
        %v2795 = vld [vmem:[#allocation4 + $0x8] sm:$0x3]
        %vm2796 = vcmask 1041408
        %v2797 = vsel %vm2796, %v2794, -inf
        %v2798 = vsel %vm2796, %v2795, -inf
        %v2799 = vmax.f32 %v2797, %v2798
        %2800 = vmax.xlane.f32.xlu0 %v2799
        %v2801 = vpop.xlane.xlu0 %2800
        %v2802 = vsel %vm2796, %v2801, -inf
        %v2803 = vrot.slane %v2802, 4
        %v2804 = vmax.f32 %v2802, %v2803
        %v2805 = vrot.slane %v2804, 2
        %v2806 = vmax.f32 %v2804, %v2805
        %v2807 = vrot.slane %v2806, 1
        %v2808 = vmax.f32 %v2806, %v2807
        %v2809 = vsub.f32 %v2794, %v2808
        %v2810 = vsub.f32 %v2795, %v2808
        %v2811 = vmul.f32 %v2809, 1.442695
        %v2812 = vpow.pop %v2811
        %v2813 = vmul.f32 %v2810, 1.442695
        %v2814 = vpow.pop %v2813
        %v2815 = vsel %vm2796, %v2812, 0.0
        %v2816 = vsel %vm2796, %v2814, 0.0
        %v2817 = vadd.f32 %v2815, %v2816
        %2818 = vadd.xlane.f32.xlu0 %v2817
        %v2819 = vpop.xlane.xlu0 %2818
        %v2820 = vsel %vm2796, %v2819, 0.0
        %v2821 = vrot.slane %v2820, 4
        %v2822 = vadd.f32 %v2820, %v2821
        %v2823 = vrot.slane %v2822, 2
        %v2824 = vadd.f32 %v2822, %v2823
        %v2825 = vrot.slane %v2824, 1
        %v2826 = vadd.f32 %v2824, %v2825
        %v2827 = vrcp.pop %v2826
        %v2828 = vmul.f32 %v2826, %v2827
        %v2829 = vsub.f32 2.0, %v2828
        %v2830 = vmul.f32 %v2827, %v2829
        %v2831 = vmul.f32 %v2812, %v2830
        %v2832 = vmul.f32 %v2814, %v2830
        %2833 = vst [vmem:[#allocation4] sm:$0x3] %v2831
        %2834 = vst [vmem:[#allocation4 + $0x8] sm:$0x3] %v2832
        %v2835 = vld [vmem:[#allocation4] sm:$0xc]
        %v2836 = vld [vmem:[#allocation4 + $0x8] sm:$0xc]
        %vm2837 = vcmask 1043458
        %v2838 = vsel %vm2837, %v2835, -inf
        %v2839 = vsel %vm2837, %v2836, -inf
        %v2840 = vmax.f32 %v2838, %v2839
        %2841 = vmax.xlane.f32.xlu0 %v2840
        %v2842 = vpop.xlane.xlu0 %2841
        %v2843 = vsel %vm2837, %v2842, -inf
        %v2844 = vrot.slane %v2843, 4
        %v2845 = vmax.f32 %v2843, %v2844
        %v2846 = vrot.slane %v2845, 2
        %v2847 = vmax.f32 %v2845, %v2846
        %v2848 = vrot.slane %v2847, 1
        %v2849 = vmax.f32 %v2847, %v2848
        %v2850 = vsub.f32 %v2835, %v2849
        %v2851 = vsub.f32 %v2836, %v2849
        %v2852 = vmul.f32 %v2850, 1.442695
        %v2853 = vpow.pop %v2852
        %v2854 = vmul.f32 %v2851, 1.442695
        %v2855 = vpow.pop %v2854
        %v2856 = vsel %vm2837, %v2853, 0.0
        %v2857 = vsel %vm2837, %v2855, 0.0
        %v2858 = vadd.f32 %v2856, %v2857
        %2859 = vadd.xlane.f32.xlu0 %v2858
        %v2860 = vpop.xlane.xlu0 %2859
        %v2862 = vrot.slane %v2860, 2
        %v2864 = vsel %vm2796, %v2862, 0.0
        %v2865 = vrot.slane %v2864, 4
        %v2866 = vadd.f32 %v2864, %v2865
        %v2867 = vrot.slane %v2866, 2
        %v2868 = vadd.f32 %v2866, %v2867
        %v2869 = vrot.slane %v2868, 1
        %v2870 = vadd.f32 %v2868, %v2869
        %v2871 = vrcp.pop %v2870
        %v2872 = vmul.f32 %v2870, %v2871
        %v2873 = vsub.f32 2.0, %v2872
        %v2874 = vmul.f32 %v2871, %v2873
        %v2875 = vmul.f32 %v2853, %v2874
        %v2876 = vmul.f32 %v2855, %v2874
        %2877 = vst [vmem:[#allocation4] sm:$0xc] %v2875
        %2878 = vst [vmem:[#allocation4 + $0x8] sm:$0xc] %v2876
        %v2879 = vld [vmem:[#allocation4] sm:$0x30]
        %v2880 = vld [vmem:[#allocation4 + $0x8] sm:$0x30]
        %vm2881 = vcmask 1045508
        %v2882 = vsel %vm2881, %v2879, -inf
        %v2883 = vsel %vm2881, %v2880, -inf
        %v2884 = vmax.f32 %v2882, %v2883
        %2885 = vmax.xlane.f32.xlu0 %v2884
        %v2886 = vpop.xlane.xlu0 %2885
        %v2887 = vsel %vm2881, %v2886, -inf
        %v2888 = vrot.slane %v2887, 4
        %v2889 = vmax.f32 %v2887, %v2888
        %v2890 = vrot.slane %v2889, 2
        %v2891 = vmax.f32 %v2889, %v2890
        %v2892 = vrot.slane %v2891, 1
        %v2893 = vmax.f32 %v2891, %v2892
        %v2894 = vsub.f32 %v2879, %v2893
        %v2895 = vsub.f32 %v2880, %v2893
        %v2896 = vmul.f32 %v2894, 1.442695
        %v2897 = vpow.pop %v2896
        %v2898 = vmul.f32 %v2895, 1.442695
        %v2899 = vpow.pop %v2898
        %v2900 = vsel %vm2881, %v2897, 0.0
        %v2901 = vsel %vm2881, %v2899, 0.0
        %v2902 = vadd.f32 %v2900, %v2901
        %2903 = vadd.xlane.f32.xlu0 %v2902
        %v2904 = vpop.xlane.xlu0 %2903
        %v2906 = vrot.slane %v2904, 4
        %v2908 = vsel %vm2796, %v2906, 0.0
        %v2909 = vrot.slane %v2908, 4
        %v2910 = vadd.f32 %v2908, %v2909
        %v2911 = vrot.slane %v2910, 2
        %v2912 = vadd.f32 %v2910, %v2911
        %v2913 = vrot.slane %v2912, 1
        %v2914 = vadd.f32 %v2912, %v2913
        %v2915 = vrcp.pop %v2914
        %v2916 = vmul.f32 %v2914, %v2915
        %v2917 = vsub.f32 2.0, %v2916
        %v2918 = vmul.f32 %v2915, %v2917
        %v2919 = vmul.f32 %v2897, %v2918
        %v2920 = vmul.f32 %v2899, %v2918
        %2921 = vst [vmem:[#allocation4] sm:$0x30] %v2919
        %2922 = vst [vmem:[#allocation4 + $0x8] sm:$0x30] %v2920
        %v2923 = vld [vmem:[%s3] sm:$0xff]
        %v2924 = vld [vmem:[%s3 + $0x8] sm:$0xff]
        %v2925 = vld [vmem:[%s3 + $0x10] sm:$0xff]
        %v2926 = vld [vmem:[%s3 + $0x18] sm:$0xff]
        %v2927 = vld [vmem:[#allocation4] sm:$0x3f]
        %v2928 = vld [vmem:[#allocation4 + $0x8] sm:$0x3f]
        %v2929 = vld [vmem:[%s4] sm:$0xff]
        %v2930 = vld [vmem:[%s4 + $0x8] sm:$0xff]
        %v2931 = vld [vmem:[%s4 + $0x10] sm:$0xff]
        %v2932 = vld [vmem:[%s4 + $0x18] sm:$0xff]
        %2934 = vset.pattern.permute.xlu0 0
        %2935 = vperm.xlu0 %2934, %v2929
        %v2936 = vpop.permute.xlu0 %2935
        %2939 = vset.pattern.permute.xlu0 0
        %2940 = vperm.xlu0 %2939, %v2930
        %v2941 = vpop.permute.xlu0 %2940
        %2944 = vset.pattern.permute.xlu0 0
        %2945 = vperm.xlu0 %2944, %v2931
        %v2946 = vpop.permute.xlu0 %2945
        %2949 = vset.pattern.permute.xlu0 0
        %2950 = vperm.xlu0 %2949, %v2932
        %v2951 = vpop.permute.xlu0 %2950
        %vm2953 = vcmask 48128
        %v2955 = vsel %vm2953, %v2923, 0
        %v2958 = vsel %vm2953, %v2924, 0
        %v2961 = vsel %vm2953, %v2925, 0
        %v2964 = vsel %vm2953, %v2926, 0
        %vm2966 = vcmask 1045504
        %v2968 = vsel %vm2966, %v2927, 0
        %v2971 = vsel %vm2966, %v2928, 0
        %2973 = vmatprep.subr.mxu0 %v2971
        %2974 = vmatpush1.msra.mxu0 %v2968
        %2975 = vmatprep.subr.mxu0 0.0
        %2976 = vmatpush1.msra.mxu0 0.0
        %2977 = vmatprep.subr.mxu0 0.0
        %2978 = vmatpush1.msra.mxu0 0.0
        %2979 = vmatprep.subr.mxu0 0.0
        %2980 = vmatpush1.msra.mxu0 0.0
        %2981 = vmatprep.subr.mxu0 0.0
        %2982 = vmatpush1.msra.mxu0 0.0
        %2983 = vmatprep.subr.mxu0 0.0
        %2984 = vmatpush1.msra.mxu0 0.0
        %2985 = vmatprep.subr.mxu0 0.0
        %2986 = vmatpush1.msra.mxu0 0.0
        %2987 = vmatprep.subr.mxu0 0.0
        %2988 = vmatpush1.msra.mxu0 0.0
        %2989 = vmatprep.subr.mxu0 0.0
        %2990 = vmatpush1.msra.mxu0 0.0
        %2991 = vmatprep.subr.mxu0 0.0
        %2992 = vmatpush1.msra.mxu0 0.0
        %2993 = vmatprep.subr.mxu0 0.0
        %2994 = vmatpush1.msra.mxu0 0.0
        %2995 = vmatprep.subr.mxu0 0.0
        %2996 = vmatpush1.msra.mxu0 0.0
        %2997 = vmatprep.subr.mxu0 0.0
        %2998 = vmatpush1.msra.mxu0 0.0
        %2999 = vmatprep.subr.mxu0 0.0
        %3000 = vmatpush1.msra.mxu0 0.0
        %3001 = vmatprep.subr.mxu0 0.0
        %3002 = vmatpush1.msra.mxu0 0.0
        %3003 = vmatprep.subr.mxu0 0.0
        %3004 = vmatpush1.msra.mxu0 0.0
        %3005 = vmatprep.subr.mxu0 0.0
        %3006 = vmatpush1.msra.mxu0 0.0
        %3007 = vmatprep.subr.mxu0 0.0
        %3008 = vmatpush1.msra.mxu0 0.0
        %3009 = vmatprep.subr.mxu0 0.0
        %3010 = vmatpush1.msra.mxu0 0.0
        %3011 = vmatprep.subr.mxu0 0.0
        %3012 = vmatpush1.msra.mxu0 0.0
        %3013 = vmatprep.subr.mxu0 0.0
        %3014 = vmatpush1.msra.mxu0 0.0
        %3015 = vmatprep.subr.mxu0 0.0
        %3016 = vmatpush1.msra.mxu0 0.0
        %3017 = vmatprep.subr.mxu0 0.0
        %3018 = vmatpush1.msra.mxu0 0.0
        %3019 = vmatprep.subr.mxu0 0.0
        %3020 = vmatpush1.msra.mxu0 0.0
        %3021 = vmatprep.subr.mxu0 0.0
        %3022 = vmatpush1.msra.mxu0 0.0
        %3023 = vmatprep.subr.mxu0 0.0
        %3024 = vmatpush1.msra.mxu0 0.0
        %3025 = vmatprep.subr.mxu0 0.0
        %3026 = vmatpush1.msra.mxu0 0.0
        %3027 = vmatprep.subr.mxu0 0.0
        %3028 = vmatpush1.msra.mxu0 0.0
        %3029 = vmatprep.subr.mxu0 0.0
        %3030 = vmatpush1.msra.mxu0 0.0
        %3031 = vmatprep.subr.mxu0 0.0
        %3032 = vmatpush1.msra.mxu0 0.0
        %3033 = vmatprep.subr.mxu0 0.0
        %3034 = vmatpush1.msra.mxu0 0.0
        %3035 = vmatprep.subr.mxu0 0.0
        %3036 = vmatpush1.msra.mxu0 0.0
        %3037 = vmatprep.mubr.f32.mxu0 0.0
        %3038 = vmatmul.mubr.f32.gmra.mrb[0].mxu0 %v2955
        %v3039 = vpop.f32.mrb[0].mxu0
        %v3040 = vadd.f32 %v2936, %v3039
        %v3041 = vpop.f32.mrb[0].mxu0
        %v3042 = vadd.f32 %v2936, %v3041
        %3043 = vmatprep.mubr.f32.mxu0 0.0
        %3044 = vmatmul.mubr.f32.gmra.mrb[0].mxu0 %v2958
        %v3045 = vpop.f32.mrb[0].mxu0
        %v3046 = vadd.f32 %v2941, %v3045
        %v3047 = vpop.f32.mrb[0].mxu0
        %v3048 = vadd.f32 %v2941, %v3047
        %3049 = vmatprep.mubr.f32.mxu0 0.0
        %3050 = vmatmul.mubr.f32.gmra.mrb[0].mxu0 %v2961
        %v3051 = vpop.f32.mrb[0].mxu0
        %v3052 = vadd.f32 %v2946, %v3051
        %v3053 = vpop.f32.mrb[0].mxu0
        %v3054 = vadd.f32 %v2946, %v3053
        %3055 = vmatprep.mubr.f32.mxu0 0.0
        %3056 = vmatmul.mubr.f32.gmra.mrb[0].mxu0 %v2964
        %v3057 = vpop.f32.mrb[0].mxu0
        %v3058 = vadd.f32 %v2951, %v3057
        %v3059 = vpop.f32.mrb[0].mxu0
        %v3060 = vadd.f32 %v2951, %v3059
        %3061 = vdwg.mxu0
        %v3062 = vxor.u32 %v3040, 2147483648
        %v3063 = vxor.u32 %v3042, 2147483648
        %v3064 = vxor.u32 %v3046, 2147483648
        %v3065 = vxor.u32 %v3048, 2147483648
        %v3066 = vxor.u32 %v3052, 2147483648
        %v3067 = vxor.u32 %v3054, 2147483648
        %v3068 = vxor.u32 %v3058, 2147483648
        %v3069 = vxor.u32 %v3060, 2147483648
        %v3070 = vmul.f32 %v3062, 1.442695
        %v3071 = vpow.pop %v3070
        %v3072 = vmul.f32 %v3063, 1.442695
        %v3073 = vpow.pop %v3072
        %v3074 = vmul.f32 %v3064, 1.442695
        %v3075 = vpow.pop %v3074
        %v3076 = vmul.f32 %v3065, 1.442695
        %v3077 = vpow.pop %v3076
        %v3078 = vmul.f32 %v3066, 1.442695
        %v3079 = vpow.pop %v3078
        %v3080 = vmul.f32 %v3067, 1.442695
        %v3081 = vpow.pop %v3080
        %v3082 = vmul.f32 %v3068, 1.442695
        %v3083 = vpow.pop %v3082
        %v3084 = vmul.f32 %v3069, 1.442695
        %v3085 = vpow.pop %v3084
        %v3086 = vadd.f32 %v3071, 1.0
        %v3087 = vadd.f32 %v3073, 1.0
        %v3088 = vadd.f32 %v3075, 1.0
        %v3089 = vadd.f32 %v3077, 1.0
        %v3090 = vadd.f32 %v3079, 1.0
        %v3091 = vadd.f32 %v3081, 1.0
        %v3092 = vadd.f32 %v3083, 1.0
        %v3093 = vadd.f32 %v3085, 1.0
        %v3094 = vrcp.pop %v3086
        %v3095 = vmul.f32 1.0, %v3094
        %v3096 = vrcp.pop %v3087
        %v3097 = vmul.f32 1.0, %v3096
        %v3098 = vrcp.pop %v3088
        %v3099 = vmul.f32 1.0, %v3098
        %v3100 = vrcp.pop %v3089
        %v3101 = vmul.f32 1.0, %v3100
        %v3102 = vrcp.pop %v3090
        %v3103 = vmul.f32 1.0, %v3102
        %v3104 = vrcp.pop %v3091
        %v3105 = vmul.f32 1.0, %v3104
        %v3106 = vrcp.pop %v3092
        %v3107 = vmul.f32 1.0, %v3106
        %v3108 = vrcp.pop %v3093
        %v3109 = vmul.f32 1.0, %v3108
        %v3110 = vmul.f32 %v3040, %v3095
        %v3111 = vmul.f32 %v3042, %v3097
        %v3112 = vmul.f32 %v3046, %v3099
        %v3113 = vmul.f32 %v3048, %v3101
        %v3114 = vmul.f32 %v3052, %v3103
        %v3115 = vmul.f32 %v3054, %v3105
        %v3116 = vmul.f32 %v3058, %v3107
        %v3117 = vmul.f32 %v3060, %v3109
        %v3118 = vmul.f32 %v243, %v3110
        %v3119 = vmul.f32 %v244, %v3111
        %v3120 = vmul.f32 %v245, %v3112
        %v3121 = vmul.f32 %v246, %v3113
        %v3122 = vmul.f32 %v247, %v3114
        %v3123 = vmul.f32 %v248, %v3115
        %v3124 = vmul.f32 %v249, %v3116
        %v3125 = vmul.f32 %v250, %v3117
        %3126 = vst [vmem:[%s242] sm:$0xff] %v3118
        %3127 = vst [vmem:[%s242 + $0x8] sm:$0xff] %v3119
        %3128 = vst [vmem:[%s242 + $0x10] sm:$0xff] %v3120
        %3129 = vst [vmem:[%s242 + $0x18] sm:$0xff] %v3121
        %3130 = vst [vmem:[%s242 + $0x20] sm:$0xff] %v3122
        %3131 = vst [vmem:[%s242 + $0x28] sm:$0xff] %v3123
        %3132 = vst [vmem:[%s242 + $0x30] sm:$0xff] %v3124
        %3133 = vst [vmem:[%s242 + $0x38] sm:$0xff] %v3125
        %s3134 = sand.u32 %s140, 1
        %s3135 = scalar_lea.sflag [#allocation7], %s3134
        %s3136 = sand.u32 %s140, 1
        %s3137 = smul.addr %s3136, 64
        %s3138 = scalar_lea.vmem [#allocation8], %s3137
        // Predicated region
        $region45: #{tpu_custom_call.1} parent=39 // pred_check
          %p3139 = pneg %p150
        $region46: #{tpu_custom_call.1} parent=39 // pred_check_branch
          %3141 = sbr.rel (%p3139) target = $region48
        $region47: #{tpu_custom_call.1} parent=39 // pred_region
          %s3143 = ssub.s32 1024, 1024
          %3144 = vsyncadd %s3135, %s3143
          %s3145 = smul.addr %s22, 8
          %s3146 = smul.addr %s3145, 128
          %s3147 = scalar_lea.hbm %s5, %s3146
          %s3148 = sshll.u32 %s3138, 4
          %s3149 = int_to_ptr.vmem [resolvable:$true] %s3148
          %3154 = dma.vmem_to_hbm [thread:$0]  %s3149, 1024, %s3147, %s3135, 256, 256, 16
        $region48: #{tpu_custom_call.1} parent=39 // pred_fallthru
          _
      $region40: #{tpu_custom_call.1} parent=5 // pred_fallthru
        _
      %p3155 = scmp.le.s32.totalorder 2, %s17
      // Predicated region
      $region49: #{tpu_custom_call.1} parent=5 // pred_check
        %p3156 = pneg %p3155
      $region50: #{tpu_custom_call.1} parent=5 // pred_check_branch
        %3158 = sbr.rel (%p3156) target = $region52
      $region51: #{tpu_custom_call.1} parent=5 // pred_region
        %s3159 = ssub.s32 %s17, 2
        // Predicated region
        $region53: #{tpu_custom_call.1} parent=51 // pred_check
          %p3160 = pneg %p156
        $region54: #{tpu_custom_call.1} parent=51 // pred_check_branch
          %3162 = sbr.rel (%p3160) target = $region56
        $region55: #{tpu_custom_call.1} parent=51 // pred_region
          %s3163 = sand.u32 %s141, 1
          %s3164 = scalar_lea.sflag [#allocation7], %s3163
          %s3165 = sand.u32 %s141, 1
          %s3166 = smul.addr %s3165, 64
          %s3167 = scalar_lea.vmem [#allocation8], %s3166
          %3168 = dma.done %s3164, 1024
        $region56: #{tpu_custom_call.1} parent=51 // pred_fallthru
          _
      $region52: #{tpu_custom_call.1} parent=5 // pred_fallthru
        _
    $region6: #{tpu_custom_call.1} parent=1 // loop_footer
      %s21 = sadd.s32 1, %s17
    $region7: #{tpu_custom_call.1} parent=1 // loop_footer_branch
      %16 = sbr.rel target = $region3
    $region8: #{tpu_custom_call.1} parent=1 // loop_exit
      _
    %3169 = vsyncpa [#allocation6], 1
    %s3170 = scalar_lea.sflag [#allocation6], 1
    %3171 = vsyncpa %s3170, 1
    %3172 = vsyncpa [#allocation7], 1
    %s3173 = scalar_lea.sflag [#allocation7], 1
    %3174 = vsyncpa %s3173, 1

</llo_original>
